<compile_context>
chip_gen: v7x
topology: tpu7x:2x2x1
jax: 0.10.0
libtpu: 0.0.40
codegen_flags: <defaults>
</compile_context>

<pallas_src>
import jax
import jax.numpy as jnp
from jax.experimental import pallas as pl
from jax.experimental.pallas import tpu as pltpu

# ---------------- hyper-parameters (hp) ----------------
B = 2          # batch
T = 8          # encoder time steps
FEAT = 16      # lmfb_dim (input feature dim)
ENC_H = 32     # encoder LSTM hidden
U = 7          # target length
U1 = U + 1     # blank-prepended prediction length
EMB = 16       # target embedding dim
DEC_H = 32     # prediction-net LSTM hidden
JOINT = 32     # joint hidden dim
VOCAB = 16     # vocabulary size (index 0 = blank)
VPAD = 128     # vocab padded to a full 128-lane vreg for lane-dense stores
G_E = 4 * ENC_H   # 128 packed encoder gates
G_D = 4 * DEC_H   # 128 packed decoder gates

assert T == U1, "fused enc/dec recurrence assumes equal trip counts"

# ---- packed weight-slab row offsets (8-row aligned blocks, 128 lanes wide) ----
R_ENC_WIH = 0                      # (FEAT, 4*ENC_H)
R_ENC_B   = R_ENC_WIH + FEAT       # 16   (row 0 of an 8-row block)
R_DEC_TAB = R_ENC_B + 8            # 24   (VOCAB, 4*DEC_H) = embed@dec_w_ih + dec_b
R_WO      = R_DEC_TAB + VOCAB      # 40   (JOINT, VPAD)
R_BO      = R_WO + JOINT           # 72   (-1e30 on padded lanes)
R_WE      = R_BO + 8               # 80   (ENC_H, lanes 0:JOINT)
R_WP      = R_WE + ENC_H           # 112  (DEC_H, lanes 0:JOINT)
R_BJ      = R_WP + DEC_H           # 144  (lanes 0:JOINT)
SLAB_ROWS = R_BJ + 8               # 152


# ---------------- fused RNN-T forward kernel ----------------
def rnnt_fused_kernel(x_ref, tgt_ref, w_ref, wcat_ref, out_ref):
    f32, bf16 = jnp.float32, jnp.bfloat16
    H = ENC_H  # == DEC_H

    def sig(z):  # sigmoid via a single native tanh (one EUP op per gate)
        return 0.5 * (jnp.tanh(0.5 * z) + 1.0)

    # ---- weight slices: taken and cast ONCE, outside the serial recurrence ----
    enc_wih = w_ref[R_ENC_WIH:R_ENC_WIH + FEAT, :].astype(bf16)        # (16,128)
    enc_b   = w_ref[R_ENC_B:R_ENC_B + 1, :]                            # (1,128) f32
    dec_tab = w_ref[R_DEC_TAB:R_DEC_TAB + VOCAB, :].astype(bf16)       # (16,128)
    wo      = w_ref[R_WO:R_WO + JOINT, :].astype(bf16)                 # (32,128)
    bo      = w_ref[R_BO:R_BO + 1, :]                                  # (1,128) f32
    we      = w_ref[R_WE:R_WE + ENC_H, :][:, :JOINT].astype(bf16)      # (32,32)
    wp      = w_ref[R_WP:R_WP + DEC_H, :][:, :JOINT].astype(bf16)      # (32,32)
    bj      = w_ref[R_BJ:R_BJ + 1, :][:, :JOINT]                       # (1,32)  f32
    wcat    = wcat_ref[...].astype(bf16)                               # (64,256) blk-diag

    # ---- hoisted input projections (off the serial critical path) ----
    x_flat = x_ref[...].reshape(B * T, FEAT).astype(bf16)              # (16,16)
    gx_e = (jnp.dot(x_flat, enc_wih, preferred_element_type=f32)
            + enc_b).reshape(B, T, G_E)                                # (2,8,128)

    tgt = tgt_ref[...]                                                 # (B,U1) i32
    iota_v = jax.lax.broadcasted_iota(jnp.int32, (B, U1, VOCAB), 2)
    onehot = (tgt[:, :, None] == iota_v).astype(bf16)                  # (2,8,16)
    # dec_tab already carries dec_b (each one-hot row sums to exactly 1)
    gx_d = jnp.dot(onehot.reshape(B * U1, VOCAB), dec_tab,
                   preferred_element_type=f32).reshape(B, U1, G_D)     # (2,8,128)

    # ---- fused encoder + prediction recurrence (fully unrolled, 8 steps) ----
    # One block-diagonal (B,64)@(64,256) matmul per step produces both chains'
    # packed i|f|g|o gates; gate slices are static 32-lane slices of a value.
    hc  = jnp.zeros((B, ENC_H + DEC_H), f32)    # [h_enc | h_dec]
    c_e = jnp.zeros((B, ENC_H), f32)
    c_d = jnp.zeros((B, DEC_H), f32)
    enc_hs, dec_hs = [], []
    for t in range(T):
        z = jnp.dot(hc.astype(bf16), wcat, preferred_element_type=f32)  # (B,256)
        z_e = gx_e[:, t, :] + z[:, :G_E]
        z_d = gx_d[:, t, :] + z[:, G_E:]

        i_e = sig(z_e[:, 0:H]);        f_e = sig(z_e[:, H:2 * H])
        g_e = jnp.tanh(z_e[:, 2 * H:3 * H]); o_e = sig(z_e[:, 3 * H:4 * H])
        c_e = f_e * c_e + i_e * g_e
        h_e = o_e * jnp.tanh(c_e)

        i_d = sig(z_d[:, 0:H]);        f_d = sig(z_d[:, H:2 * H])
        g_d = jnp.tanh(z_d[:, 2 * H:3 * H]); o_d = sig(z_d[:, 3 * H:4 * H])
        c_d = f_d * c_d + i_d * g_d
        h_d = o_d * jnp.tanh(c_d)

        hc = jnp.concatenate([h_e, h_d], axis=-1)
        enc_hs.append(h_e)
        dec_hs.append(h_d)

    enc = jnp.stack(enc_hs, axis=1).reshape(B * T, ENC_H)    # rows ordered b*T+t
    dec = jnp.stack(dec_hs, axis=1).reshape(B * U1, DEC_H)   # rows ordered b*U1+u

    # ---- joint network ----
    e = jnp.dot(enc.astype(bf16), we, preferred_element_type=f32)      # (16,32)
    p = jnp.dot(dec.astype(bf16), wp, preferred_element_type=f32)      # (16,32)
    bj3 = bj.reshape(1, 1, JOINT)
    rows = []
    for b in range(B):  # per-batch broadcast keeps vreg pressure low
        e_b = e[b * T:(b + 1) * T, :]                                  # (T,J)
        p_b = p[b * U1:(b + 1) * U1, :]                                # (U1,J)
        f_b = jnp.tanh(e_b[:, None, :] + p_b[None, :, :] + bj3)        # (T,U1,J)
        rows.append(f_b.reshape(T * U1, JOINT))
    f_j = jnp.concatenate(rows, axis=0)                                # (128,32)

    # Single M=128 GEMM; V padded to 128 lanes (pad bias = -1e30 acts as mask).
    logits = (jnp.dot(f_j.astype(bf16), wo, preferred_element_type=f32)
              + bo)                                                    # (128,128)
    m = jnp.max(logits, axis=-1, keepdims=True)
    lse = jnp.log(jnp.sum(jnp.exp(logits - m), axis=-1, keepdims=True)) + m
    out_ref[...] = logits - lse                                        # unmasked vst


# ---------------- parameter init (deterministic) ----------------
def init_params(key):
    ks = jax.random.split(key, 12)
    s = 0.1
    return {
        # encoder LSTM (packed i|f|g|o layout, PyTorch-compatible)
        "enc_w_ih": s * jax.random.normal(ks[0], (FEAT, 4 * ENC_H), jnp.float32),
        "enc_w_hh": s * jax.random.normal(ks[1], (ENC_H, 4 * ENC_H), jnp.float32),
        "enc_b":    s * jax.random.normal(ks[2], (1, 4 * ENC_H), jnp.float32),
        # prediction-net embedding + LSTM
        "embed":    s * jax.random.normal(ks[3], (VOCAB, EMB), jnp.float32),
        "dec_w_ih": s * jax.random.normal(ks[4], (EMB, 4 * DEC_H), jnp.float32),
        "dec_w_hh": s * jax.random.normal(ks[5], (DEC_H, 4 * DEC_H), jnp.float32),
        "dec_b":    s * jax.random.normal(ks[6], (1, 4 * DEC_H), jnp.float32),
        # joint network
        "we": s * jax.random.normal(ks[7], (ENC_H, JOINT), jnp.float32),
        "wp": s * jax.random.normal(ks[8], (DEC_H, JOINT), jnp.float32),
        "bj": s * jax.random.normal(ks[9], (1, JOINT), jnp.float32),
        "wo": s * jax.random.normal(ks[10], (JOINT, VOCAB), jnp.float32),
        "bo": s * jax.random.normal(ks[11], (1, VOCAB), jnp.float32),
    }


# ---------------- forward (mirrors RNNTModel.forward) ----------------
@jax.jit
def rnnt_forward(params, x, lengths, targets):
    # `lengths` unused: toy inputs are full-length (see TODO at top of file).
    del lengths
    blanks = jnp.zeros((targets.shape[0], 1), dtype=targets.dtype)
    tgt_in = jnp.concatenate([blanks, targets], axis=1).astype(jnp.int32)  # (B,U1)

    # Parameter-only host precompute: fold embedding + dec bias into one table,
    # pad output projection to 128 lanes, pack everything into ONE weight slab
    # (4 input DMAs total instead of 14).
    dec_table_b = params["embed"] @ params["dec_w_ih"] + params["dec_b"]   # (V,128)

    slab = jnp.zeros((SLAB_ROWS, 128), jnp.float32)
    slab = slab.at[R_ENC_WIH:R_ENC_WIH + FEAT, :].set(params["enc_w_ih"])
    slab = slab.at[R_ENC_B, :].set(params["enc_b"][0])
    slab = slab.at[R_DEC_TAB:R_DEC_TAB + VOCAB, :].set(dec_table_b)
    slab = slab.at[R_WO:R_WO + JOINT, :VOCAB].set(params["wo"])
    bo_row = jnp.full((VPAD,), -1e30, jnp.float32).at[:VOCAB].set(params["bo"][0])
    slab = slab.at[R_BO, :].set(bo_row)
    slab = slab.at[R_WE:R_WE + ENC_H, :JOINT].set(params["we"])
    slab = slab.at[R_WP:R_WP + DEC_H, :JOINT].set(params["wp"])
    slab = slab.at[R_BJ, :JOINT].set(params["bj"][0])

    # Block-diagonal recurrent weights: [h_enc|h_dec] @ wcat -> both gate packs.
    wcat = jnp.zeros((ENC_H + DEC_H, G_E + G_D), jnp.float32)
    wcat = wcat.at[:ENC_H, :G_E].set(params["enc_w_hh"])
    wcat = wcat.at[ENC_H:, G_E:].set(params["dec_w_hh"])

    out = pl.pallas_call(
        rnnt_fused_kernel,
        out_shape=jax.ShapeDtypeStruct((B * T * U1, VPAD), jnp.float32),
        in_specs=[pl.BlockSpec(memory_space=pltpu.MemorySpace.VMEM)] * 4,
        out_specs=pl.BlockSpec(memory_space=pltpu.MemorySpace.VMEM),
    )(x, tgt_in, slab, wcat)

    return out[:, :VOCAB].reshape(B, T, U1, VOCAB)                     # (B,T,U1,V)


# ---------------- pure-JAX reference (for correctness check) ----------------
def rnnt_reference(params, x, targets):
    def lstm_ref(seq, wih, whh, b):
        Bn, L, _ = seq.shape
        H = whh.shape[0]
        h = jnp.zeros((Bn, H), jnp.float32)
        c = jnp.zeros((Bn, H), jnp.float32)
        hs = []
        for t in range(L):
            g = seq[:, t, :] @ wih + h @ whh + b
            i = jax.nn.sigmoid(g[:, 0 * H:1 * H])
            f = jax.nn.sigmoid(g[:, 1 * H:2 * H])
            gg = jnp.tanh(g[:, 2 * H:3 * H])
            o = jax.nn.sigmoid(g[:, 3 * H:4 * H])
            c = f * c + i * gg
            h = o * jnp.tanh(c)
            hs.append(h)
        return jnp.stack(hs, axis=1)

    enc = lstm_ref(x, params["enc_w_ih"], params["enc_w_hh"], params["enc_b"])
    blanks = jnp.zeros((targets.shape[0], 1), dtype=targets.dtype)
    tgt_in = jnp.concatenate([blanks, targets], axis=1)
    emb = jnp.take(params["embed"], tgt_in, axis=0)
    pred = lstm_ref(emb, params["dec_w_ih"], params["dec_w_hh"], params["dec_b"])
    e = enc @ params["we"]
    p = pred @ params["wp"]
    fj = jnp.tanh(e[:, :, None, :] + p[:, None, :, :]
                  + params["bj"].reshape(1, 1, 1, JOINT))
    logits = fj @ params["wo"] + params["bo"].reshape(1, 1, 1, VOCAB)
    return jax.nn.log_softmax(logits, axis=-1)


if __name__ == "__main__":
    key = jax.random.PRNGKey(0)
    k_par, k_x, k_t = jax.random.split(key, 3)

    params = init_params(k_par)
    x = jax.random.normal(k_x, (B, T, FEAT), jnp.float32)
    lengths = jnp.full((B,), T, dtype=jnp.int32)
    targets = jax.random.randint(k_t, (B, U), 1, VOCAB, dtype=jnp.int32)

    youtput = rnnt_forward(params, x, lengths, targets)
    jax.block_until_ready(youtput)

    assert youtput.shape == (B, T, U1, VOCAB)
    # log-softmax sanity: probabilities over the (unpadded) vocab sum to 1
    assert bool(jnp.allclose(jnp.sum(jnp.exp(youtput), axis=-1), 1.0, atol=1e-4))
    # compare against a pure-JAX f32 reference (loose tol: bf16 matmul operands)
    ref = rnnt_reference(params, x, targets)
    assert bool(jnp.allclose(youtput, ref, atol=5e-2))
    print("KERNEL_OK")
</pallas_src>

<mosaic_0001>
module attributes {stable_mosaic.version = 11 : i64} {
  func.func @rnnt_fused_kernel(%arg0: memref<2x8x16xf32, #tpu.memory_space<vmem>>, %arg1: memref<2x8xi32, #tpu.memory_space<vmem>>, %arg2: memref<152x128xf32, #tpu.memory_space<vmem>>, %arg3: memref<64x256xf32, #tpu.memory_space<vmem>>, %arg4: memref<128x128xf32, #tpu.memory_space<vmem>>) attributes {dimension_semantics = [], scalar_prefetch = 0 : i64, scratch_operands = 0 : i64, tpu.core_type = #tpu.core_type<tc>} {
    %c0 = arith.constant 0 : index
    %c0_0 = arith.constant 0 : index
    %0 = vector.load %arg2[%c0, %c0_0] : memref<152x128xf32, #tpu.memory_space<vmem>>, vector<16x128xf32>
    %1 = arith.truncf %0 : vector<16x128xf32> to vector<16x128xbf16>
    %c16 = arith.constant 16 : index
    %c0_1 = arith.constant 0 : index
    %2 = vector.load %arg2[%c16, %c0_1] : memref<152x128xf32, #tpu.memory_space<vmem>>, vector<1x128xf32>
    %c24 = arith.constant 24 : index
    %c0_2 = arith.constant 0 : index
    %3 = vector.load %arg2[%c24, %c0_2] : memref<152x128xf32, #tpu.memory_space<vmem>>, vector<16x128xf32>
    %4 = arith.truncf %3 : vector<16x128xf32> to vector<16x128xbf16>
    %c40 = arith.constant 40 : index
    %c0_3 = arith.constant 0 : index
    %5 = vector.load %arg2[%c40, %c0_3] : memref<152x128xf32, #tpu.memory_space<vmem>>, vector<32x128xf32>
    %6 = arith.truncf %5 : vector<32x128xf32> to vector<32x128xbf16>
    %c72 = arith.constant 72 : index
    %c0_4 = arith.constant 0 : index
    %7 = vector.load %arg2[%c72, %c0_4] : memref<152x128xf32, #tpu.memory_space<vmem>>, vector<1x128xf32>
    %c80 = arith.constant 80 : index
    %c0_5 = arith.constant 0 : index
    %8 = vector.load %arg2[%c80, %c0_5] : memref<152x128xf32, #tpu.memory_space<vmem>>, vector<32x128xf32>
    %9 = vector.extract_strided_slice %8 {offsets = [0, 0], sizes = [32, 32], strides = [1, 1]} : vector<32x128xf32> to vector<32x32xf32>
    %10 = arith.truncf %9 : vector<32x32xf32> to vector<32x32xbf16>
    %c112 = arith.constant 112 : index
    %c0_6 = arith.constant 0 : index
    %11 = vector.load %arg2[%c112, %c0_6] : memref<152x128xf32, #tpu.memory_space<vmem>>, vector<32x128xf32>
    %12 = vector.extract_strided_slice %11 {offsets = [0, 0], sizes = [32, 32], strides = [1, 1]} : vector<32x128xf32> to vector<32x32xf32>
    %13 = arith.truncf %12 : vector<32x32xf32> to vector<32x32xbf16>
    %c144 = arith.constant 144 : index
    %c0_7 = arith.constant 0 : index
    %14 = vector.load %arg2[%c144, %c0_7] : memref<152x128xf32, #tpu.memory_space<vmem>>, vector<1x128xf32>
    %15 = vector.extract_strided_slice %14 {offsets = [0, 0], sizes = [1, 32], strides = [1, 1]} : vector<1x128xf32> to vector<1x32xf32>
    %c0_8 = arith.constant 0 : index
    %c0_9 = arith.constant 0 : index
    %16 = vector.load %arg3[%c0_8, %c0_9] : memref<64x256xf32, #tpu.memory_space<vmem>>, vector<64x256xf32>
    %17 = arith.truncf %16 : vector<64x256xf32> to vector<64x256xbf16>
    %c0_10 = arith.constant 0 : index
    %c0_11 = arith.constant 0 : index
    %c0_12 = arith.constant 0 : index
    %18 = vector.load %arg0[%c0_10, %c0_11, %c0_12] : memref<2x8x16xf32, #tpu.memory_space<vmem>>, vector<2x8x16xf32>
    %19 = vector.shape_cast %18 : vector<2x8x16xf32> to vector<16x16xf32>
    %20 = arith.truncf %19 : vector<16x16xf32> to vector<16x16xbf16>
    %cst = arith.constant dense<0.000000e+00> : vector<16x128xf32>
    %21 = tpu.matmul %20, %1, %cst {dimension_numbers = #tpu.dot_dimension_numbers<[1], [0], [0], [1], [0, 0, 1, 1], [], []>} : vector<16x16xbf16>, vector<16x128xbf16>, vector<16x128xf32> -> vector<16x128xf32>
    %22 = vector.broadcast %2 : vector<1x128xf32> to vector<16x128xf32>
    %23 = arith.addf %21, %22 : vector<16x128xf32>
    %24 = vector.shape_cast %23 : vector<16x128xf32> to vector<2x8x128xf32>
    %c0_13 = arith.constant 0 : index
    %c0_14 = arith.constant 0 : index
    %25 = vector.load %arg1[%c0_13, %c0_14] : memref<2x8xi32, #tpu.memory_space<vmem>>, vector<2x8xi32>
    %26 = tpu.iota {dimensions = array<i32: 2>} : vector<2x8x16xi32>
    %27 = vector.shape_cast %25 : vector<2x8xi32> to vector<2x8x1xi32>
    %28 = vector.broadcast %27 : vector<2x8x1xi32> to vector<2x8x16xi32>
    %29 = arith.cmpi eq, %28, %26 : vector<2x8x16xi32>
    %30 = arith.extui %29 : vector<2x8x16xi1> to vector<2x8x16xi32>
    %31 = arith.sitofp %30 : vector<2x8x16xi32> to vector<2x8x16xf32>
    %32 = arith.truncf %31 : vector<2x8x16xf32> to vector<2x8x16xbf16>
    %33 = vector.shape_cast %32 : vector<2x8x16xbf16> to vector<16x16xbf16>
    %cst_15 = arith.constant dense<0.000000e+00> : vector<16x128xf32>
    %34 = tpu.matmul %33, %4, %cst_15 {dimension_numbers = #tpu.dot_dimension_numbers<[1], [0], [0], [1], [0, 0, 1, 1], [], []>} : vector<16x16xbf16>, vector<16x128xbf16>, vector<16x128xf32> -> vector<16x128xf32>
    %35 = vector.shape_cast %34 : vector<16x128xf32> to vector<2x8x128xf32>
    %cst_16 = arith.constant 0.000000e+00 : f32
    %36 = vector.broadcast %cst_16 : f32 to vector<2x64xf32>
    %cst_17 = arith.constant 0.000000e+00 : f32
    %37 = vector.broadcast %cst_17 : f32 to vector<2x32xf32>
    %cst_18 = arith.constant 0.000000e+00 : f32
    %38 = vector.broadcast %cst_18 : f32 to vector<2x32xf32>
    %39 = arith.truncf %36 : vector<2x64xf32> to vector<2x64xbf16>
    %cst_19 = arith.constant dense<0.000000e+00> : vector<2x256xf32>
    %40 = tpu.matmul %39, %17, %cst_19 {dimension_numbers = #tpu.dot_dimension_numbers<[1], [0], [0], [1], [0, 0, 1, 1], [], []>} : vector<2x64xbf16>, vector<64x256xbf16>, vector<2x256xf32> -> vector<2x256xf32>
    %41 = vector.extract_strided_slice %24 {offsets = [0, 0, 0], sizes = [2, 1, 128], strides = [1, 1, 1]} : vector<2x8x128xf32> to vector<2x1x128xf32>
    %42 = vector.shape_cast %41 : vector<2x1x128xf32> to vector<2x128xf32>
    %43 = vector.extract_strided_slice %40 {offsets = [0, 0], sizes = [2, 128], strides = [1, 1]} : vector<2x256xf32> to vector<2x128xf32>
    %44 = arith.addf %42, %43 : vector<2x128xf32>
    %45 = vector.extract_strided_slice %35 {offsets = [0, 0, 0], sizes = [2, 1, 128], strides = [1, 1, 1]} : vector<2x8x128xf32> to vector<2x1x128xf32>
    %46 = vector.shape_cast %45 : vector<2x1x128xf32> to vector<2x128xf32>
    %47 = vector.extract_strided_slice %40 {offsets = [0, 128], sizes = [2, 128], strides = [1, 1]} : vector<2x256xf32> to vector<2x128xf32>
    %48 = arith.addf %46, %47 : vector<2x128xf32>
    %49 = vector.extract_strided_slice %44 {offsets = [0, 0], sizes = [2, 32], strides = [1, 1]} : vector<2x128xf32> to vector<2x32xf32>
    %cst_20 = arith.constant 5.000000e-01 : f32
    %50 = vector.broadcast %cst_20 : f32 to vector<2x32xf32>
    %51 = arith.mulf %50, %49 : vector<2x32xf32>
    %52 = math.tanh %51 : vector<2x32xf32>
    %cst_21 = arith.constant 1.000000e+00 : f32
    %53 = vector.broadcast %cst_21 : f32 to vector<2x32xf32>
    %54 = arith.addf %52, %53 : vector<2x32xf32>
    %cst_22 = arith.constant 5.000000e-01 : f32
    %55 = vector.broadcast %cst_22 : f32 to vector<2x32xf32>
    %56 = arith.mulf %55, %54 : vector<2x32xf32>
    %57 = vector.extract_strided_slice %44 {offsets = [0, 32], sizes = [2, 32], strides = [1, 1]} : vector<2x128xf32> to vector<2x32xf32>
    %cst_23 = arith.constant 5.000000e-01 : f32
    %58 = vector.broadcast %cst_23 : f32 to vector<2x32xf32>
    %59 = arith.mulf %58, %57 : vector<2x32xf32>
    %60 = math.tanh %59 : vector<2x32xf32>
    %cst_24 = arith.constant 1.000000e+00 : f32
    %61 = vector.broadcast %cst_24 : f32 to vector<2x32xf32>
    %62 = arith.addf %60, %61 : vector<2x32xf32>
    %cst_25 = arith.constant 5.000000e-01 : f32
    %63 = vector.broadcast %cst_25 : f32 to vector<2x32xf32>
    %64 = arith.mulf %63, %62 : vector<2x32xf32>
    %65 = vector.extract_strided_slice %44 {offsets = [0, 64], sizes = [2, 32], strides = [1, 1]} : vector<2x128xf32> to vector<2x32xf32>
    %66 = math.tanh %65 : vector<2x32xf32>
    %67 = vector.extract_strided_slice %44 {offsets = [0, 96], sizes = [2, 32], strides = [1, 1]} : vector<2x128xf32> to vector<2x32xf32>
    %cst_26 = arith.constant 5.000000e-01 : f32
    %68 = vector.broadcast %cst_26 : f32 to vector<2x32xf32>
    %69 = arith.mulf %68, %67 : vector<2x32xf32>
    %70 = math.tanh %69 : vector<2x32xf32>
    %cst_27 = arith.constant 1.000000e+00 : f32
    %71 = vector.broadcast %cst_27 : f32 to vector<2x32xf32>
    %72 = arith.addf %70, %71 : vector<2x32xf32>
    %cst_28 = arith.constant 5.000000e-01 : f32
    %73 = vector.broadcast %cst_28 : f32 to vector<2x32xf32>
    %74 = arith.mulf %73, %72 : vector<2x32xf32>
    %75 = arith.mulf %64, %37 : vector<2x32xf32>
    %76 = arith.mulf %56, %66 : vector<2x32xf32>
    %77 = arith.addf %75, %76 : vector<2x32xf32>
    %78 = math.tanh %77 : vector<2x32xf32>
    %79 = arith.mulf %74, %78 : vector<2x32xf32>
    %80 = vector.extract_strided_slice %48 {offsets = [0, 0], sizes = [2, 32], strides = [1, 1]} : vector<2x128xf32> to vector<2x32xf32>
    %cst_29 = arith.constant 5.000000e-01 : f32
    %81 = vector.broadcast %cst_29 : f32 to vector<2x32xf32>
    %82 = arith.mulf %81, %80 : vector<2x32xf32>
    %83 = math.tanh %82 : vector<2x32xf32>
    %cst_30 = arith.constant 1.000000e+00 : f32
    %84 = vector.broadcast %cst_30 : f32 to vector<2x32xf32>
    %85 = arith.addf %83, %84 : vector<2x32xf32>
    %cst_31 = arith.constant 5.000000e-01 : f32
    %86 = vector.broadcast %cst_31 : f32 to vector<2x32xf32>
    %87 = arith.mulf %86, %85 : vector<2x32xf32>
    %88 = vector.extract_strided_slice %48 {offsets = [0, 32], sizes = [2, 32], strides = [1, 1]} : vector<2x128xf32> to vector<2x32xf32>
    %cst_32 = arith.constant 5.000000e-01 : f32
    %89 = vector.broadcast %cst_32 : f32 to vector<2x32xf32>
    %90 = arith.mulf %89, %88 : vector<2x32xf32>
    %91 = math.tanh %90 : vector<2x32xf32>
    %cst_33 = arith.constant 1.000000e+00 : f32
    %92 = vector.broadcast %cst_33 : f32 to vector<2x32xf32>
    %93 = arith.addf %91, %92 : vector<2x32xf32>
    %cst_34 = arith.constant 5.000000e-01 : f32
    %94 = vector.broadcast %cst_34 : f32 to vector<2x32xf32>
    %95 = arith.mulf %94, %93 : vector<2x32xf32>
    %96 = vector.extract_strided_slice %48 {offsets = [0, 64], sizes = [2, 32], strides = [1, 1]} : vector<2x128xf32> to vector<2x32xf32>
    %97 = math.tanh %96 : vector<2x32xf32>
    %98 = vector.extract_strided_slice %48 {offsets = [0, 96], sizes = [2, 32], strides = [1, 1]} : vector<2x128xf32> to vector<2x32xf32>
    %cst_35 = arith.constant 5.000000e-01 : f32
    %99 = vector.broadcast %cst_35 : f32 to vector<2x32xf32>
    %100 = arith.mulf %99, %98 : vector<2x32xf32>
    %101 = math.tanh %100 : vector<2x32xf32>
    %cst_36 = arith.constant 1.000000e+00 : f32
    %102 = vector.broadcast %cst_36 : f32 to vector<2x32xf32>
    %103 = arith.addf %101, %102 : vector<2x32xf32>
    %cst_37 = arith.constant 5.000000e-01 : f32
    %104 = vector.broadcast %cst_37 : f32 to vector<2x32xf32>
    %105 = arith.mulf %104, %103 : vector<2x32xf32>
    %106 = arith.mulf %95, %38 : vector<2x32xf32>
    %107 = arith.mulf %87, %97 : vector<2x32xf32>
    %108 = arith.addf %106, %107 : vector<2x32xf32>
    %109 = math.tanh %108 : vector<2x32xf32>
    %110 = arith.mulf %105, %109 : vector<2x32xf32>
    %111 = tpu.concatenate %79, %110 in 1 : vector<2x32xf32>, vector<2x32xf32> -> vector<2x64xf32>
    %112 = arith.truncf %111 : vector<2x64xf32> to vector<2x64xbf16>
    %cst_38 = arith.constant dense<0.000000e+00> : vector<2x256xf32>
    %113 = tpu.matmul %112, %17, %cst_38 {dimension_numbers = #tpu.dot_dimension_numbers<[1], [0], [0], [1], [0, 0, 1, 1], [], []>} : vector<2x64xbf16>, vector<64x256xbf16>, vector<2x256xf32> -> vector<2x256xf32>
    %114 = vector.extract_strided_slice %24 {offsets = [0, 1, 0], sizes = [2, 1, 128], strides = [1, 1, 1]} : vector<2x8x128xf32> to vector<2x1x128xf32>
    %115 = vector.shape_cast %114 : vector<2x1x128xf32> to vector<2x128xf32>
    %116 = vector.extract_strided_slice %113 {offsets = [0, 0], sizes = [2, 128], strides = [1, 1]} : vector<2x256xf32> to vector<2x128xf32>
    %117 = arith.addf %115, %116 : vector<2x128xf32>
    %118 = vector.extract_strided_slice %35 {offsets = [0, 1, 0], sizes = [2, 1, 128], strides = [1, 1, 1]} : vector<2x8x128xf32> to vector<2x1x128xf32>
    %119 = vector.shape_cast %118 : vector<2x1x128xf32> to vector<2x128xf32>
    %120 = vector.extract_strided_slice %113 {offsets = [0, 128], sizes = [2, 128], strides = [1, 1]} : vector<2x256xf32> to vector<2x128xf32>
    %121 = arith.addf %119, %120 : vector<2x128xf32>
    %122 = vector.extract_strided_slice %117 {offsets = [0, 0], sizes = [2, 32], strides = [1, 1]} : vector<2x128xf32> to vector<2x32xf32>
    %cst_39 = arith.constant 5.000000e-01 : f32
    %123 = vector.broadcast %cst_39 : f32 to vector<2x32xf32>
    %124 = arith.mulf %123, %122 : vector<2x32xf32>
    %125 = math.tanh %124 : vector<2x32xf32>
    %cst_40 = arith.constant 1.000000e+00 : f32
    %126 = vector.broadcast %cst_40 : f32 to vector<2x32xf32>
    %127 = arith.addf %125, %126 : vector<2x32xf32>
    %cst_41 = arith.constant 5.000000e-01 : f32
    %128 = vector.broadcast %cst_41 : f32 to vector<2x32xf32>
    %129 = arith.mulf %128, %127 : vector<2x32xf32>
    %130 = vector.extract_strided_slice %117 {offsets = [0, 32], sizes = [2, 32], strides = [1, 1]} : vector<2x128xf32> to vector<2x32xf32>
    %cst_42 = arith.constant 5.000000e-01 : f32
    %131 = vector.broadcast %cst_42 : f32 to vector<2x32xf32>
    %132 = arith.mulf %131, %130 : vector<2x32xf32>
    %133 = math.tanh %132 : vector<2x32xf32>
    %cst_43 = arith.constant 1.000000e+00 : f32
    %134 = vector.broadcast %cst_43 : f32 to vector<2x32xf32>
    %135 = arith.addf %133, %134 : vector<2x32xf32>
    %cst_44 = arith.constant 5.000000e-01 : f32
    %136 = vector.broadcast %cst_44 : f32 to vector<2x32xf32>
    %137 = arith.mulf %136, %135 : vector<2x32xf32>
    %138 = vector.extract_strided_slice %117 {offsets = [0, 64], sizes = [2, 32], strides = [1, 1]} : vector<2x128xf32> to vector<2x32xf32>
    %139 = math.tanh %138 : vector<2x32xf32>
    %140 = vector.extract_strided_slice %117 {offsets = [0, 96], sizes = [2, 32], strides = [1, 1]} : vector<2x128xf32> to vector<2x32xf32>
    %cst_45 = arith.constant 5.000000e-01 : f32
    %141 = vector.broadcast %cst_45 : f32 to vector<2x32xf32>
    %142 = arith.mulf %141, %140 : vector<2x32xf32>
    %143 = math.tanh %142 : vector<2x32xf32>
    %cst_46 = arith.constant 1.000000e+00 : f32
    %144 = vector.broadcast %cst_46 : f32 to vector<2x32xf32>
    %145 = arith.addf %143, %144 : vector<2x32xf32>
    %cst_47 = arith.constant 5.000000e-01 : f32
    %146 = vector.broadcast %cst_47 : f32 to vector<2x32xf32>
    %147 = arith.mulf %146, %145 : vector<2x32xf32>
    %148 = arith.mulf %137, %77 : vector<2x32xf32>
    %149 = arith.mulf %129, %139 : vector<2x32xf32>
    %150 = arith.addf %148, %149 : vector<2x32xf32>
    %151 = math.tanh %150 : vector<2x32xf32>
    %152 = arith.mulf %147, %151 : vector<2x32xf32>
    %153 = vector.extract_strided_slice %121 {offsets = [0, 0], sizes = [2, 32], strides = [1, 1]} : vector<2x128xf32> to vector<2x32xf32>
    %cst_48 = arith.constant 5.000000e-01 : f32
    %154 = vector.broadcast %cst_48 : f32 to vector<2x32xf32>
    %155 = arith.mulf %154, %153 : vector<2x32xf32>
    %156 = math.tanh %155 : vector<2x32xf32>
    %cst_49 = arith.constant 1.000000e+00 : f32
    %157 = vector.broadcast %cst_49 : f32 to vector<2x32xf32>
    %158 = arith.addf %156, %157 : vector<2x32xf32>
    %cst_50 = arith.constant 5.000000e-01 : f32
    %159 = vector.broadcast %cst_50 : f32 to vector<2x32xf32>
    %160 = arith.mulf %159, %158 : vector<2x32xf32>
    %161 = vector.extract_strided_slice %121 {offsets = [0, 32], sizes = [2, 32], strides = [1, 1]} : vector<2x128xf32> to vector<2x32xf32>
    %cst_51 = arith.constant 5.000000e-01 : f32
    %162 = vector.broadcast %cst_51 : f32 to vector<2x32xf32>
    %163 = arith.mulf %162, %161 : vector<2x32xf32>
    %164 = math.tanh %163 : vector<2x32xf32>
    %cst_52 = arith.constant 1.000000e+00 : f32
    %165 = vector.broadcast %cst_52 : f32 to vector<2x32xf32>
    %166 = arith.addf %164, %165 : vector<2x32xf32>
    %cst_53 = arith.constant 5.000000e-01 : f32
    %167 = vector.broadcast %cst_53 : f32 to vector<2x32xf32>
    %168 = arith.mulf %167, %166 : vector<2x32xf32>
    %169 = vector.extract_strided_slice %121 {offsets = [0, 64], sizes = [2, 32], strides = [1, 1]} : vector<2x128xf32> to vector<2x32xf32>
    %170 = math.tanh %169 : vector<2x32xf32>
    %171 = vector.extract_strided_slice %121 {offsets = [0, 96], sizes = [2, 32], strides = [1, 1]} : vector<2x128xf32> to vector<2x32xf32>
    %cst_54 = arith.constant 5.000000e-01 : f32
    %172 = vector.broadcast %cst_54 : f32 to vector<2x32xf32>
    %173 = arith.mulf %172, %171 : vector<2x32xf32>
    %174 = math.tanh %173 : vector<2x32xf32>
    %cst_55 = arith.constant 1.000000e+00 : f32
    %175 = vector.broadcast %cst_55 : f32 to vector<2x32xf32>
    %176 = arith.addf %174, %175 : vector<2x32xf32>
    %cst_56 = arith.constant 5.000000e-01 : f32
    %177 = vector.broadcast %cst_56 : f32 to vector<2x32xf32>
    %178 = arith.mulf %177, %176 : vector<2x32xf32>
    %179 = arith.mulf %168, %108 : vector<2x32xf32>
    %180 = arith.mulf %160, %170 : vector<2x32xf32>
    %181 = arith.addf %179, %180 : vector<2x32xf32>
    %182 = math.tanh %181 : vector<2x32xf32>
    %183 = arith.mulf %178, %182 : vector<2x32xf32>
    %184 = tpu.concatenate %152, %183 in 1 : vector<2x32xf32>, vector<2x32xf32> -> vector<2x64xf32>
    %185 = arith.truncf %184 : vector<2x64xf32> to vector<2x64xbf16>
    %cst_57 = arith.constant dense<0.000000e+00> : vector<2x256xf32>
    %186 = tpu.matmul %185, %17, %cst_57 {dimension_numbers = #tpu.dot_dimension_numbers<[1], [0], [0], [1], [0, 0, 1, 1], [], []>} : vector<2x64xbf16>, vector<64x256xbf16>, vector<2x256xf32> -> vector<2x256xf32>
    %187 = vector.extract_strided_slice %24 {offsets = [0, 2, 0], sizes = [2, 1, 128], strides = [1, 1, 1]} : vector<2x8x128xf32> to vector<2x1x128xf32>
    %188 = vector.shape_cast %187 : vector<2x1x128xf32> to vector<2x128xf32>
    %189 = vector.extract_strided_slice %186 {offsets = [0, 0], sizes = [2, 128], strides = [1, 1]} : vector<2x256xf32> to vector<2x128xf32>
    %190 = arith.addf %188, %189 : vector<2x128xf32>
    %191 = vector.extract_strided_slice %35 {offsets = [0, 2, 0], sizes = [2, 1, 128], strides = [1, 1, 1]} : vector<2x8x128xf32> to vector<2x1x128xf32>
    %192 = vector.shape_cast %191 : vector<2x1x128xf32> to vector<2x128xf32>
    %193 = vector.extract_strided_slice %186 {offsets = [0, 128], sizes = [2, 128], strides = [1, 1]} : vector<2x256xf32> to vector<2x128xf32>
    %194 = arith.addf %192, %193 : vector<2x128xf32>
    %195 = vector.extract_strided_slice %190 {offsets = [0, 0], sizes = [2, 32], strides = [1, 1]} : vector<2x128xf32> to vector<2x32xf32>
    %cst_58 = arith.constant 5.000000e-01 : f32
    %196 = vector.broadcast %cst_58 : f32 to vector<2x32xf32>
    %197 = arith.mulf %196, %195 : vector<2x32xf32>
    %198 = math.tanh %197 : vector<2x32xf32>
    %cst_59 = arith.constant 1.000000e+00 : f32
    %199 = vector.broadcast %cst_59 : f32 to vector<2x32xf32>
    %200 = arith.addf %198, %199 : vector<2x32xf32>
    %cst_60 = arith.constant 5.000000e-01 : f32
    %201 = vector.broadcast %cst_60 : f32 to vector<2x32xf32>
    %202 = arith.mulf %201, %200 : vector<2x32xf32>
    %203 = vector.extract_strided_slice %190 {offsets = [0, 32], sizes = [2, 32], strides = [1, 1]} : vector<2x128xf32> to vector<2x32xf32>
    %cst_61 = arith.constant 5.000000e-01 : f32
    %204 = vector.broadcast %cst_61 : f32 to vector<2x32xf32>
    %205 = arith.mulf %204, %203 : vector<2x32xf32>
    %206 = math.tanh %205 : vector<2x32xf32>
    %cst_62 = arith.constant 1.000000e+00 : f32
    %207 = vector.broadcast %cst_62 : f32 to vector<2x32xf32>
    %208 = arith.addf %206, %207 : vector<2x32xf32>
    %cst_63 = arith.constant 5.000000e-01 : f32
    %209 = vector.broadcast %cst_63 : f32 to vector<2x32xf32>
    %210 = arith.mulf %209, %208 : vector<2x32xf32>
    %211 = vector.extract_strided_slice %190 {offsets = [0, 64], sizes = [2, 32], strides = [1, 1]} : vector<2x128xf32> to vector<2x32xf32>
    %212 = math.tanh %211 : vector<2x32xf32>
    %213 = vector.extract_strided_slice %190 {offsets = [0, 96], sizes = [2, 32], strides = [1, 1]} : vector<2x128xf32> to vector<2x32xf32>
    %cst_64 = arith.constant 5.000000e-01 : f32
    %214 = vector.broadcast %cst_64 : f32 to vector<2x32xf32>
    %215 = arith.mulf %214, %213 : vector<2x32xf32>
    %216 = math.tanh %215 : vector<2x32xf32>
    %cst_65 = arith.constant 1.000000e+00 : f32
    %217 = vector.broadcast %cst_65 : f32 to vector<2x32xf32>
    %218 = arith.addf %216, %217 : vector<2x32xf32>
    %cst_66 = arith.constant 5.000000e-01 : f32
    %219 = vector.broadcast %cst_66 : f32 to vector<2x32xf32>
    %220 = arith.mulf %219, %218 : vector<2x32xf32>
    %221 = arith.mulf %210, %150 : vector<2x32xf32>
    %222 = arith.mulf %202, %212 : vector<2x32xf32>
    %223 = arith.addf %221, %222 : vector<2x32xf32>
    %224 = math.tanh %223 : vector<2x32xf32>
    %225 = arith.mulf %220, %224 : vector<2x32xf32>
    %226 = vector.extract_strided_slice %194 {offsets = [0, 0], sizes = [2, 32], strides = [1, 1]} : vector<2x128xf32> to vector<2x32xf32>
    %cst_67 = arith.constant 5.000000e-01 : f32
    %227 = vector.broadcast %cst_67 : f32 to vector<2x32xf32>
    %228 = arith.mulf %227, %226 : vector<2x32xf32>
    %229 = math.tanh %228 : vector<2x32xf32>
    %cst_68 = arith.constant 1.000000e+00 : f32
    %230 = vector.broadcast %cst_68 : f32 to vector<2x32xf32>
    %231 = arith.addf %229, %230 : vector<2x32xf32>
    %cst_69 = arith.constant 5.000000e-01 : f32
    %232 = vector.broadcast %cst_69 : f32 to vector<2x32xf32>
    %233 = arith.mulf %232, %231 : vector<2x32xf32>
    %234 = vector.extract_strided_slice %194 {offsets = [0, 32], sizes = [2, 32], strides = [1, 1]} : vector<2x128xf32> to vector<2x32xf32>
    %cst_70 = arith.constant 5.000000e-01 : f32
    %235 = vector.broadcast %cst_70 : f32 to vector<2x32xf32>
    %236 = arith.mulf %235, %234 : vector<2x32xf32>
    %237 = math.tanh %236 : vector<2x32xf32>
    %cst_71 = arith.constant 1.000000e+00 : f32
    %238 = vector.broadcast %cst_71 : f32 to vector<2x32xf32>
    %239 = arith.addf %237, %238 : vector<2x32xf32>
    %cst_72 = arith.constant 5.000000e-01 : f32
    %240 = vector.broadcast %cst_72 : f32 to vector<2x32xf32>
    %241 = arith.mulf %240, %239 : vector<2x32xf32>
    %242 = vector.extract_strided_slice %194 {offsets = [0, 64], sizes = [2, 32], strides = [1, 1]} : vector<2x128xf32> to vector<2x32xf32>
    %243 = math.tanh %242 : vector<2x32xf32>
    %244 = vector.extract_strided_slice %194 {offsets = [0, 96], sizes = [2, 32], strides = [1, 1]} : vector<2x128xf32> to vector<2x32xf32>
    %cst_73 = arith.constant 5.000000e-01 : f32
    %245 = vector.broadcast %cst_73 : f32 to vector<2x32xf32>
    %246 = arith.mulf %245, %244 : vector<2x32xf32>
    %247 = math.tanh %246 : vector<2x32xf32>
    %cst_74 = arith.constant 1.000000e+00 : f32
    %248 = vector.broadcast %cst_74 : f32 to vector<2x32xf32>
    %249 = arith.addf %247, %248 : vector<2x32xf32>
    %cst_75 = arith.constant 5.000000e-01 : f32
    %250 = vector.broadcast %cst_75 : f32 to vector<2x32xf32>
    %251 = arith.mulf %250, %249 : vector<2x32xf32>
    %252 = arith.mulf %241, %181 : vector<2x32xf32>
    %253 = arith.mulf %233, %243 : vector<2x32xf32>
    %254 = arith.addf %252, %253 : vector<2x32xf32>
    %255 = math.tanh %254 : vector<2x32xf32>
    %256 = arith.mulf %251, %255 : vector<2x32xf32>
    %257 = tpu.concatenate %225, %256 in 1 : vector<2x32xf32>, vector<2x32xf32> -> vector<2x64xf32>
    %258 = arith.truncf %257 : vector<2x64xf32> to vector<2x64xbf16>
    %cst_76 = arith.constant dense<0.000000e+00> : vector<2x256xf32>
    %259 = tpu.matmul %258, %17, %cst_76 {dimension_numbers = #tpu.dot_dimension_numbers<[1], [0], [0], [1], [0, 0, 1, 1], [], []>} : vector<2x64xbf16>, vector<64x256xbf16>, vector<2x256xf32> -> vector<2x256xf32>
    %260 = vector.extract_strided_slice %24 {offsets = [0, 3, 0], sizes = [2, 1, 128], strides = [1, 1, 1]} : vector<2x8x128xf32> to vector<2x1x128xf32>
    %261 = vector.shape_cast %260 : vector<2x1x128xf32> to vector<2x128xf32>
    %262 = vector.extract_strided_slice %259 {offsets = [0, 0], sizes = [2, 128], strides = [1, 1]} : vector<2x256xf32> to vector<2x128xf32>
    %263 = arith.addf %261, %262 : vector<2x128xf32>
    %264 = vector.extract_strided_slice %35 {offsets = [0, 3, 0], sizes = [2, 1, 128], strides = [1, 1, 1]} : vector<2x8x128xf32> to vector<2x1x128xf32>
    %265 = vector.shape_cast %264 : vector<2x1x128xf32> to vector<2x128xf32>
    %266 = vector.extract_strided_slice %259 {offsets = [0, 128], sizes = [2, 128], strides = [1, 1]} : vector<2x256xf32> to vector<2x128xf32>
    %267 = arith.addf %265, %266 : vector<2x128xf32>
    %268 = vector.extract_strided_slice %263 {offsets = [0, 0], sizes = [2, 32], strides = [1, 1]} : vector<2x128xf32> to vector<2x32xf32>
    %cst_77 = arith.constant 5.000000e-01 : f32
    %269 = vector.broadcast %cst_77 : f32 to vector<2x32xf32>
    %270 = arith.mulf %269, %268 : vector<2x32xf32>
    %271 = math.tanh %270 : vector<2x32xf32>
    %cst_78 = arith.constant 1.000000e+00 : f32
    %272 = vector.broadcast %cst_78 : f32 to vector<2x32xf32>
    %273 = arith.addf %271, %272 : vector<2x32xf32>
    %cst_79 = arith.constant 5.000000e-01 : f32
    %274 = vector.broadcast %cst_79 : f32 to vector<2x32xf32>
    %275 = arith.mulf %274, %273 : vector<2x32xf32>
    %276 = vector.extract_strided_slice %263 {offsets = [0, 32], sizes = [2, 32], strides = [1, 1]} : vector<2x128xf32> to vector<2x32xf32>
    %cst_80 = arith.constant 5.000000e-01 : f32
    %277 = vector.broadcast %cst_80 : f32 to vector<2x32xf32>
    %278 = arith.mulf %277, %276 : vector<2x32xf32>
    %279 = math.tanh %278 : vector<2x32xf32>
    %cst_81 = arith.constant 1.000000e+00 : f32
    %280 = vector.broadcast %cst_81 : f32 to vector<2x32xf32>
    %281 = arith.addf %279, %280 : vector<2x32xf32>
    %cst_82 = arith.constant 5.000000e-01 : f32
    %282 = vector.broadcast %cst_82 : f32 to vector<2x32xf32>
    %283 = arith.mulf %282, %281 : vector<2x32xf32>
    %284 = vector.extract_strided_slice %263 {offsets = [0, 64], sizes = [2, 32], strides = [1, 1]} : vector<2x128xf32> to vector<2x32xf32>
    %285 = math.tanh %284 : vector<2x32xf32>
    %286 = vector.extract_strided_slice %263 {offsets = [0, 96], sizes = [2, 32], strides = [1, 1]} : vector<2x128xf32> to vector<2x32xf32>
    %cst_83 = arith.constant 5.000000e-01 : f32
    %287 = vector.broadcast %cst_83 : f32 to vector<2x32xf32>
    %288 = arith.mulf %287, %286 : vector<2x32xf32>
    %289 = math.tanh %288 : vector<2x32xf32>
    %cst_84 = arith.constant 1.000000e+00 : f32
    %290 = vector.broadcast %cst_84 : f32 to vector<2x32xf32>
    %291 = arith.addf %289, %290 : vector<2x32xf32>
    %cst_85 = arith.constant 5.000000e-01 : f32
    %292 = vector.broadcast %cst_85 : f32 to vector<2x32xf32>
    %293 = arith.mulf %292, %291 : vector<2x32xf32>
    %294 = arith.mulf %283, %223 : vector<2x32xf32>
    %295 = arith.mulf %275, %285 : vector<2x32xf32>
    %296 = arith.addf %294, %295 : vector<2x32xf32>
    %297 = math.tanh %296 : vector<2x32xf32>
    %298 = arith.mulf %293, %297 : vector<2x32xf32>
    %299 = vector.extract_strided_slice %267 {offsets = [0, 0], sizes = [2, 32], strides = [1, 1]} : vector<2x128xf32> to vector<2x32xf32>
    %cst_86 = arith.constant 5.000000e-01 : f32
    %300 = vector.broadcast %cst_86 : f32 to vector<2x32xf32>
    %301 = arith.mulf %300, %299 : vector<2x32xf32>
    %302 = math.tanh %301 : vector<2x32xf32>
    %cst_87 = arith.constant 1.000000e+00 : f32
    %303 = vector.broadcast %cst_87 : f32 to vector<2x32xf32>
    %304 = arith.addf %302, %303 : vector<2x32xf32>
    %cst_88 = arith.constant 5.000000e-01 : f32
    %305 = vector.broadcast %cst_88 : f32 to vector<2x32xf32>
    %306 = arith.mulf %305, %304 : vector<2x32xf32>
    %307 = vector.extract_strided_slice %267 {offsets = [0, 32], sizes = [2, 32], strides = [1, 1]} : vector<2x128xf32> to vector<2x32xf32>
    %cst_89 = arith.constant 5.000000e-01 : f32
    %308 = vector.broadcast %cst_89 : f32 to vector<2x32xf32>
    %309 = arith.mulf %308, %307 : vector<2x32xf32>
    %310 = math.tanh %309 : vector<2x32xf32>
    %cst_90 = arith.constant 1.000000e+00 : f32
    %311 = vector.broadcast %cst_90 : f32 to vector<2x32xf32>
    %312 = arith.addf %310, %311 : vector<2x32xf32>
    %cst_91 = arith.constant 5.000000e-01 : f32
    %313 = vector.broadcast %cst_91 : f32 to vector<2x32xf32>
    %314 = arith.mulf %313, %312 : vector<2x32xf32>
    %315 = vector.extract_strided_slice %267 {offsets = [0, 64], sizes = [2, 32], strides = [1, 1]} : vector<2x128xf32> to vector<2x32xf32>
    %316 = math.tanh %315 : vector<2x32xf32>
    %317 = vector.extract_strided_slice %267 {offsets = [0, 96], sizes = [2, 32], strides = [1, 1]} : vector<2x128xf32> to vector<2x32xf32>
    %cst_92 = arith.constant 5.000000e-01 : f32
    %318 = vector.broadcast %cst_92 : f32 to vector<2x32xf32>
    %319 = arith.mulf %318, %317 : vector<2x32xf32>
    %320 = math.tanh %319 : vector<2x32xf32>
    %cst_93 = arith.constant 1.000000e+00 : f32
    %321 = vector.broadcast %cst_93 : f32 to vector<2x32xf32>
    %322 = arith.addf %320, %321 : vector<2x32xf32>
    %cst_94 = arith.constant 5.000000e-01 : f32
    %323 = vector.broadcast %cst_94 : f32 to vector<2x32xf32>
    %324 = arith.mulf %323, %322 : vector<2x32xf32>
    %325 = arith.mulf %314, %254 : vector<2x32xf32>
    %326 = arith.mulf %306, %316 : vector<2x32xf32>
    %327 = arith.addf %325, %326 : vector<2x32xf32>
    %328 = math.tanh %327 : vector<2x32xf32>
    %329 = arith.mulf %324, %328 : vector<2x32xf32>
    %330 = tpu.concatenate %298, %329 in 1 : vector<2x32xf32>, vector<2x32xf32> -> vector<2x64xf32>
    %331 = arith.truncf %330 : vector<2x64xf32> to vector<2x64xbf16>
    %cst_95 = arith.constant dense<0.000000e+00> : vector<2x256xf32>
    %332 = tpu.matmul %331, %17, %cst_95 {dimension_numbers = #tpu.dot_dimension_numbers<[1], [0], [0], [1], [0, 0, 1, 1], [], []>} : vector<2x64xbf16>, vector<64x256xbf16>, vector<2x256xf32> -> vector<2x256xf32>
    %333 = vector.extract_strided_slice %24 {offsets = [0, 4, 0], sizes = [2, 1, 128], strides = [1, 1, 1]} : vector<2x8x128xf32> to vector<2x1x128xf32>
    %334 = vector.shape_cast %333 : vector<2x1x128xf32> to vector<2x128xf32>
    %335 = vector.extract_strided_slice %332 {offsets = [0, 0], sizes = [2, 128], strides = [1, 1]} : vector<2x256xf32> to vector<2x128xf32>
    %336 = arith.addf %334, %335 : vector<2x128xf32>
    %337 = vector.extract_strided_slice %35 {offsets = [0, 4, 0], sizes = [2, 1, 128], strides = [1, 1, 1]} : vector<2x8x128xf32> to vector<2x1x128xf32>
    %338 = vector.shape_cast %337 : vector<2x1x128xf32> to vector<2x128xf32>
    %339 = vector.extract_strided_slice %332 {offsets = [0, 128], sizes = [2, 128], strides = [1, 1]} : vector<2x256xf32> to vector<2x128xf32>
    %340 = arith.addf %338, %339 : vector<2x128xf32>
    %341 = vector.extract_strided_slice %336 {offsets = [0, 0], sizes = [2, 32], strides = [1, 1]} : vector<2x128xf32> to vector<2x32xf32>
    %cst_96 = arith.constant 5.000000e-01 : f32
    %342 = vector.broadcast %cst_96 : f32 to vector<2x32xf32>
    %343 = arith.mulf %342, %341 : vector<2x32xf32>
    %344 = math.tanh %343 : vector<2x32xf32>
    %cst_97 = arith.constant 1.000000e+00 : f32
    %345 = vector.broadcast %cst_97 : f32 to vector<2x32xf32>
    %346 = arith.addf %344, %345 : vector<2x32xf32>
    %cst_98 = arith.constant 5.000000e-01 : f32
    %347 = vector.broadcast %cst_98 : f32 to vector<2x32xf32>
    %348 = arith.mulf %347, %346 : vector<2x32xf32>
    %349 = vector.extract_strided_slice %336 {offsets = [0, 32], sizes = [2, 32], strides = [1, 1]} : vector<2x128xf32> to vector<2x32xf32>
    %cst_99 = arith.constant 5.000000e-01 : f32
    %350 = vector.broadcast %cst_99 : f32 to vector<2x32xf32>
    %351 = arith.mulf %350, %349 : vector<2x32xf32>
    %352 = math.tanh %351 : vector<2x32xf32>
    %cst_100 = arith.constant 1.000000e+00 : f32
    %353 = vector.broadcast %cst_100 : f32 to vector<2x32xf32>
    %354 = arith.addf %352, %353 : vector<2x32xf32>
    %cst_101 = arith.constant 5.000000e-01 : f32
    %355 = vector.broadcast %cst_101 : f32 to vector<2x32xf32>
    %356 = arith.mulf %355, %354 : vector<2x32xf32>
    %357 = vector.extract_strided_slice %336 {offsets = [0, 64], sizes = [2, 32], strides = [1, 1]} : vector<2x128xf32> to vector<2x32xf32>
    %358 = math.tanh %357 : vector<2x32xf32>
    %359 = vector.extract_strided_slice %336 {offsets = [0, 96], sizes = [2, 32], strides = [1, 1]} : vector<2x128xf32> to vector<2x32xf32>
    %cst_102 = arith.constant 5.000000e-01 : f32
    %360 = vector.broadcast %cst_102 : f32 to vector<2x32xf32>
    %361 = arith.mulf %360, %359 : vector<2x32xf32>
    %362 = math.tanh %361 : vector<2x32xf32>
    %cst_103 = arith.constant 1.000000e+00 : f32
    %363 = vector.broadcast %cst_103 : f32 to vector<2x32xf32>
    %364 = arith.addf %362, %363 : vector<2x32xf32>
    %cst_104 = arith.constant 5.000000e-01 : f32
    %365 = vector.broadcast %cst_104 : f32 to vector<2x32xf32>
    %366 = arith.mulf %365, %364 : vector<2x32xf32>
    %367 = arith.mulf %356, %296 : vector<2x32xf32>
    %368 = arith.mulf %348, %358 : vector<2x32xf32>
    %369 = arith.addf %367, %368 : vector<2x32xf32>
    %370 = math.tanh %369 : vector<2x32xf32>
    %371 = arith.mulf %366, %370 : vector<2x32xf32>
    %372 = vector.extract_strided_slice %340 {offsets = [0, 0], sizes = [2, 32], strides = [1, 1]} : vector<2x128xf32> to vector<2x32xf32>
    %cst_105 = arith.constant 5.000000e-01 : f32
    %373 = vector.broadcast %cst_105 : f32 to vector<2x32xf32>
    %374 = arith.mulf %373, %372 : vector<2x32xf32>
    %375 = math.tanh %374 : vector<2x32xf32>
    %cst_106 = arith.constant 1.000000e+00 : f32
    %376 = vector.broadcast %cst_106 : f32 to vector<2x32xf32>
    %377 = arith.addf %375, %376 : vector<2x32xf32>
    %cst_107 = arith.constant 5.000000e-01 : f32
    %378 = vector.broadcast %cst_107 : f32 to vector<2x32xf32>
    %379 = arith.mulf %378, %377 : vector<2x32xf32>
    %380 = vector.extract_strided_slice %340 {offsets = [0, 32], sizes = [2, 32], strides = [1, 1]} : vector<2x128xf32> to vector<2x32xf32>
    %cst_108 = arith.constant 5.000000e-01 : f32
    %381 = vector.broadcast %cst_108 : f32 to vector<2x32xf32>
    %382 = arith.mulf %381, %380 : vector<2x32xf32>
    %383 = math.tanh %382 : vector<2x32xf32>
    %cst_109 = arith.constant 1.000000e+00 : f32
    %384 = vector.broadcast %cst_109 : f32 to vector<2x32xf32>
    %385 = arith.addf %383, %384 : vector<2x32xf32>
    %cst_110 = arith.constant 5.000000e-01 : f32
    %386 = vector.broadcast %cst_110 : f32 to vector<2x32xf32>
    %387 = arith.mulf %386, %385 : vector<2x32xf32>
    %388 = vector.extract_strided_slice %340 {offsets = [0, 64], sizes = [2, 32], strides = [1, 1]} : vector<2x128xf32> to vector<2x32xf32>
    %389 = math.tanh %388 : vector<2x32xf32>
    %390 = vector.extract_strided_slice %340 {offsets = [0, 96], sizes = [2, 32], strides = [1, 1]} : vector<2x128xf32> to vector<2x32xf32>
    %cst_111 = arith.constant 5.000000e-01 : f32
    %391 = vector.broadcast %cst_111 : f32 to vector<2x32xf32>
    %392 = arith.mulf %391, %390 : vector<2x32xf32>
    %393 = math.tanh %392 : vector<2x32xf32>
    %cst_112 = arith.constant 1.000000e+00 : f32
    %394 = vector.broadcast %cst_112 : f32 to vector<2x32xf32>
    %395 = arith.addf %393, %394 : vector<2x32xf32>
    %cst_113 = arith.constant 5.000000e-01 : f32
    %396 = vector.broadcast %cst_113 : f32 to vector<2x32xf32>
    %397 = arith.mulf %396, %395 : vector<2x32xf32>
    %398 = arith.mulf %387, %327 : vector<2x32xf32>
    %399 = arith.mulf %379, %389 : vector<2x32xf32>
    %400 = arith.addf %398, %399 : vector<2x32xf32>
    %401 = math.tanh %400 : vector<2x32xf32>
    %402 = arith.mulf %397, %401 : vector<2x32xf32>
    %403 = tpu.concatenate %371, %402 in 1 : vector<2x32xf32>, vector<2x32xf32> -> vector<2x64xf32>
    %404 = arith.truncf %403 : vector<2x64xf32> to vector<2x64xbf16>
    %cst_114 = arith.constant dense<0.000000e+00> : vector<2x256xf32>
    %405 = tpu.matmul %404, %17, %cst_114 {dimension_numbers = #tpu.dot_dimension_numbers<[1], [0], [0], [1], [0, 0, 1, 1], [], []>} : vector<2x64xbf16>, vector<64x256xbf16>, vector<2x256xf32> -> vector<2x256xf32>
    %406 = vector.extract_strided_slice %24 {offsets = [0, 5, 0], sizes = [2, 1, 128], strides = [1, 1, 1]} : vector<2x8x128xf32> to vector<2x1x128xf32>
    %407 = vector.shape_cast %406 : vector<2x1x128xf32> to vector<2x128xf32>
    %408 = vector.extract_strided_slice %405 {offsets = [0, 0], sizes = [2, 128], strides = [1, 1]} : vector<2x256xf32> to vector<2x128xf32>
    %409 = arith.addf %407, %408 : vector<2x128xf32>
    %410 = vector.extract_strided_slice %35 {offsets = [0, 5, 0], sizes = [2, 1, 128], strides = [1, 1, 1]} : vector<2x8x128xf32> to vector<2x1x128xf32>
    %411 = vector.shape_cast %410 : vector<2x1x128xf32> to vector<2x128xf32>
    %412 = vector.extract_strided_slice %405 {offsets = [0, 128], sizes = [2, 128], strides = [1, 1]} : vector<2x256xf32> to vector<2x128xf32>
    %413 = arith.addf %411, %412 : vector<2x128xf32>
    %414 = vector.extract_strided_slice %409 {offsets = [0, 0], sizes = [2, 32], strides = [1, 1]} : vector<2x128xf32> to vector<2x32xf32>
    %cst_115 = arith.constant 5.000000e-01 : f32
    %415 = vector.broadcast %cst_115 : f32 to vector<2x32xf32>
    %416 = arith.mulf %415, %414 : vector<2x32xf32>
    %417 = math.tanh %416 : vector<2x32xf32>
    %cst_116 = arith.constant 1.000000e+00 : f32
    %418 = vector.broadcast %cst_116 : f32 to vector<2x32xf32>
    %419 = arith.addf %417, %418 : vector<2x32xf32>
    %cst_117 = arith.constant 5.000000e-01 : f32
    %420 = vector.broadcast %cst_117 : f32 to vector<2x32xf32>
    %421 = arith.mulf %420, %419 : vector<2x32xf32>
    %422 = vector.extract_strided_slice %409 {offsets = [0, 32], sizes = [2, 32], strides = [1, 1]} : vector<2x128xf32> to vector<2x32xf32>
    %cst_118 = arith.constant 5.000000e-01 : f32
    %423 = vector.broadcast %cst_118 : f32 to vector<2x32xf32>
    %424 = arith.mulf %423, %422 : vector<2x32xf32>
    %425 = math.tanh %424 : vector<2x32xf32>
    %cst_119 = arith.constant 1.000000e+00 : f32
    %426 = vector.broadcast %cst_119 : f32 to vector<2x32xf32>
    %427 = arith.addf %425, %426 : vector<2x32xf32>
    %cst_120 = arith.constant 5.000000e-01 : f32
    %428 = vector.broadcast %cst_120 : f32 to vector<2x32xf32>
    %429 = arith.mulf %428, %427 : vector<2x32xf32>
    %430 = vector.extract_strided_slice %409 {offsets = [0, 64], sizes = [2, 32], strides = [1, 1]} : vector<2x128xf32> to vector<2x32xf32>
    %431 = math.tanh %430 : vector<2x32xf32>
    %432 = vector.extract_strided_slice %409 {offsets = [0, 96], sizes = [2, 32], strides = [1, 1]} : vector<2x128xf32> to vector<2x32xf32>
    %cst_121 = arith.constant 5.000000e-01 : f32
    %433 = vector.broadcast %cst_121 : f32 to vector<2x32xf32>
    %434 = arith.mulf %433, %432 : vector<2x32xf32>
    %435 = math.tanh %434 : vector<2x32xf32>
    %cst_122 = arith.constant 1.000000e+00 : f32
    %436 = vector.broadcast %cst_122 : f32 to vector<2x32xf32>
    %437 = arith.addf %435, %436 : vector<2x32xf32>
    %cst_123 = arith.constant 5.000000e-01 : f32
    %438 = vector.broadcast %cst_123 : f32 to vector<2x32xf32>
    %439 = arith.mulf %438, %437 : vector<2x32xf32>
    %440 = arith.mulf %429, %369 : vector<2x32xf32>
    %441 = arith.mulf %421, %431 : vector<2x32xf32>
    %442 = arith.addf %440, %441 : vector<2x32xf32>
    %443 = math.tanh %442 : vector<2x32xf32>
    %444 = arith.mulf %439, %443 : vector<2x32xf32>
    %445 = vector.extract_strided_slice %413 {offsets = [0, 0], sizes = [2, 32], strides = [1, 1]} : vector<2x128xf32> to vector<2x32xf32>
    %cst_124 = arith.constant 5.000000e-01 : f32
    %446 = vector.broadcast %cst_124 : f32 to vector<2x32xf32>
    %447 = arith.mulf %446, %445 : vector<2x32xf32>
    %448 = math.tanh %447 : vector<2x32xf32>
    %cst_125 = arith.constant 1.000000e+00 : f32
    %449 = vector.broadcast %cst_125 : f32 to vector<2x32xf32>
    %450 = arith.addf %448, %449 : vector<2x32xf32>
    %cst_126 = arith.constant 5.000000e-01 : f32
    %451 = vector.broadcast %cst_126 : f32 to vector<2x32xf32>
    %452 = arith.mulf %451, %450 : vector<2x32xf32>
    %453 = vector.extract_strided_slice %413 {offsets = [0, 32], sizes = [2, 32], strides = [1, 1]} : vector<2x128xf32> to vector<2x32xf32>
    %cst_127 = arith.constant 5.000000e-01 : f32
    %454 = vector.broadcast %cst_127 : f32 to vector<2x32xf32>
    %455 = arith.mulf %454, %453 : vector<2x32xf32>
    %456 = math.tanh %455 : vector<2x32xf32>
    %cst_128 = arith.constant 1.000000e+00 : f32
    %457 = vector.broadcast %cst_128 : f32 to vector<2x32xf32>
    %458 = arith.addf %456, %457 : vector<2x32xf32>
    %cst_129 = arith.constant 5.000000e-01 : f32
    %459 = vector.broadcast %cst_129 : f32 to vector<2x32xf32>
    %460 = arith.mulf %459, %458 : vector<2x32xf32>
    %461 = vector.extract_strided_slice %413 {offsets = [0, 64], sizes = [2, 32], strides = [1, 1]} : vector<2x128xf32> to vector<2x32xf32>
    %462 = math.tanh %461 : vector<2x32xf32>
    %463 = vector.extract_strided_slice %413 {offsets = [0, 96], sizes = [2, 32], strides = [1, 1]} : vector<2x128xf32> to vector<2x32xf32>
    %cst_130 = arith.constant 5.000000e-01 : f32
    %464 = vector.broadcast %cst_130 : f32 to vector<2x32xf32>
    %465 = arith.mulf %464, %463 : vector<2x32xf32>
    %466 = math.tanh %465 : vector<2x32xf32>
    %cst_131 = arith.constant 1.000000e+00 : f32
    %467 = vector.broadcast %cst_131 : f32 to vector<2x32xf32>
    %468 = arith.addf %466, %467 : vector<2x32xf32>
    %cst_132 = arith.constant 5.000000e-01 : f32
    %469 = vector.broadcast %cst_132 : f32 to vector<2x32xf32>
    %470 = arith.mulf %469, %468 : vector<2x32xf32>
    %471 = arith.mulf %460, %400 : vector<2x32xf32>
    %472 = arith.mulf %452, %462 : vector<2x32xf32>
    %473 = arith.addf %471, %472 : vector<2x32xf32>
    %474 = math.tanh %473 : vector<2x32xf32>
    %475 = arith.mulf %470, %474 : vector<2x32xf32>
    %476 = tpu.concatenate %444, %475 in 1 : vector<2x32xf32>, vector<2x32xf32> -> vector<2x64xf32>
    %477 = arith.truncf %476 : vector<2x64xf32> to vector<2x64xbf16>
    %cst_133 = arith.constant dense<0.000000e+00> : vector<2x256xf32>
    %478 = tpu.matmul %477, %17, %cst_133 {dimension_numbers = #tpu.dot_dimension_numbers<[1], [0], [0], [1], [0, 0, 1, 1], [], []>} : vector<2x64xbf16>, vector<64x256xbf16>, vector<2x256xf32> -> vector<2x256xf32>
    %479 = vector.extract_strided_slice %24 {offsets = [0, 6, 0], sizes = [2, 1, 128], strides = [1, 1, 1]} : vector<2x8x128xf32> to vector<2x1x128xf32>
    %480 = vector.shape_cast %479 : vector<2x1x128xf32> to vector<2x128xf32>
    %481 = vector.extract_strided_slice %478 {offsets = [0, 0], sizes = [2, 128], strides = [1, 1]} : vector<2x256xf32> to vector<2x128xf32>
    %482 = arith.addf %480, %481 : vector<2x128xf32>
    %483 = vector.extract_strided_slice %35 {offsets = [0, 6, 0], sizes = [2, 1, 128], strides = [1, 1, 1]} : vector<2x8x128xf32> to vector<2x1x128xf32>
    %484 = vector.shape_cast %483 : vector<2x1x128xf32> to vector<2x128xf32>
    %485 = vector.extract_strided_slice %478 {offsets = [0, 128], sizes = [2, 128], strides = [1, 1]} : vector<2x256xf32> to vector<2x128xf32>
    %486 = arith.addf %484, %485 : vector<2x128xf32>
    %487 = vector.extract_strided_slice %482 {offsets = [0, 0], sizes = [2, 32], strides = [1, 1]} : vector<2x128xf32> to vector<2x32xf32>
    %cst_134 = arith.constant 5.000000e-01 : f32
    %488 = vector.broadcast %cst_134 : f32 to vector<2x32xf32>
    %489 = arith.mulf %488, %487 : vector<2x32xf32>
    %490 = math.tanh %489 : vector<2x32xf32>
    %cst_135 = arith.constant 1.000000e+00 : f32
    %491 = vector.broadcast %cst_135 : f32 to vector<2x32xf32>
    %492 = arith.addf %490, %491 : vector<2x32xf32>
    %cst_136 = arith.constant 5.000000e-01 : f32
    %493 = vector.broadcast %cst_136 : f32 to vector<2x32xf32>
    %494 = arith.mulf %493, %492 : vector<2x32xf32>
    %495 = vector.extract_strided_slice %482 {offsets = [0, 32], sizes = [2, 32], strides = [1, 1]} : vector<2x128xf32> to vector<2x32xf32>
    %cst_137 = arith.constant 5.000000e-01 : f32
    %496 = vector.broadcast %cst_137 : f32 to vector<2x32xf32>
    %497 = arith.mulf %496, %495 : vector<2x32xf32>
    %498 = math.tanh %497 : vector<2x32xf32>
    %cst_138 = arith.constant 1.000000e+00 : f32
    %499 = vector.broadcast %cst_138 : f32 to vector<2x32xf32>
    %500 = arith.addf %498, %499 : vector<2x32xf32>
    %cst_139 = arith.constant 5.000000e-01 : f32
    %501 = vector.broadcast %cst_139 : f32 to vector<2x32xf32>
    %502 = arith.mulf %501, %500 : vector<2x32xf32>
    %503 = vector.extract_strided_slice %482 {offsets = [0, 64], sizes = [2, 32], strides = [1, 1]} : vector<2x128xf32> to vector<2x32xf32>
    %504 = math.tanh %503 : vector<2x32xf32>
    %505 = vector.extract_strided_slice %482 {offsets = [0, 96], sizes = [2, 32], strides = [1, 1]} : vector<2x128xf32> to vector<2x32xf32>
    %cst_140 = arith.constant 5.000000e-01 : f32
    %506 = vector.broadcast %cst_140 : f32 to vector<2x32xf32>
    %507 = arith.mulf %506, %505 : vector<2x32xf32>
    %508 = math.tanh %507 : vector<2x32xf32>
    %cst_141 = arith.constant 1.000000e+00 : f32
    %509 = vector.broadcast %cst_141 : f32 to vector<2x32xf32>
    %510 = arith.addf %508, %509 : vector<2x32xf32>
    %cst_142 = arith.constant 5.000000e-01 : f32
    %511 = vector.broadcast %cst_142 : f32 to vector<2x32xf32>
    %512 = arith.mulf %511, %510 : vector<2x32xf32>
    %513 = arith.mulf %502, %442 : vector<2x32xf32>
    %514 = arith.mulf %494, %504 : vector<2x32xf32>
    %515 = arith.addf %513, %514 : vector<2x32xf32>
    %516 = math.tanh %515 : vector<2x32xf32>
    %517 = arith.mulf %512, %516 : vector<2x32xf32>
    %518 = vector.extract_strided_slice %486 {offsets = [0, 0], sizes = [2, 32], strides = [1, 1]} : vector<2x128xf32> to vector<2x32xf32>
    %cst_143 = arith.constant 5.000000e-01 : f32
    %519 = vector.broadcast %cst_143 : f32 to vector<2x32xf32>
    %520 = arith.mulf %519, %518 : vector<2x32xf32>
    %521 = math.tanh %520 : vector<2x32xf32>
    %cst_144 = arith.constant 1.000000e+00 : f32
    %522 = vector.broadcast %cst_144 : f32 to vector<2x32xf32>
    %523 = arith.addf %521, %522 : vector<2x32xf32>
    %cst_145 = arith.constant 5.000000e-01 : f32
    %524 = vector.broadcast %cst_145 : f32 to vector<2x32xf32>
    %525 = arith.mulf %524, %523 : vector<2x32xf32>
    %526 = vector.extract_strided_slice %486 {offsets = [0, 32], sizes = [2, 32], strides = [1, 1]} : vector<2x128xf32> to vector<2x32xf32>
    %cst_146 = arith.constant 5.000000e-01 : f32
    %527 = vector.broadcast %cst_146 : f32 to vector<2x32xf32>
    %528 = arith.mulf %527, %526 : vector<2x32xf32>
    %529 = math.tanh %528 : vector<2x32xf32>
    %cst_147 = arith.constant 1.000000e+00 : f32
    %530 = vector.broadcast %cst_147 : f32 to vector<2x32xf32>
    %531 = arith.addf %529, %530 : vector<2x32xf32>
    %cst_148 = arith.constant 5.000000e-01 : f32
    %532 = vector.broadcast %cst_148 : f32 to vector<2x32xf32>
    %533 = arith.mulf %532, %531 : vector<2x32xf32>
    %534 = vector.extract_strided_slice %486 {offsets = [0, 64], sizes = [2, 32], strides = [1, 1]} : vector<2x128xf32> to vector<2x32xf32>
    %535 = math.tanh %534 : vector<2x32xf32>
    %536 = vector.extract_strided_slice %486 {offsets = [0, 96], sizes = [2, 32], strides = [1, 1]} : vector<2x128xf32> to vector<2x32xf32>
    %cst_149 = arith.constant 5.000000e-01 : f32
    %537 = vector.broadcast %cst_149 : f32 to vector<2x32xf32>
    %538 = arith.mulf %537, %536 : vector<2x32xf32>
    %539 = math.tanh %538 : vector<2x32xf32>
    %cst_150 = arith.constant 1.000000e+00 : f32
    %540 = vector.broadcast %cst_150 : f32 to vector<2x32xf32>
    %541 = arith.addf %539, %540 : vector<2x32xf32>
    %cst_151 = arith.constant 5.000000e-01 : f32
    %542 = vector.broadcast %cst_151 : f32 to vector<2x32xf32>
    %543 = arith.mulf %542, %541 : vector<2x32xf32>
    %544 = arith.mulf %533, %473 : vector<2x32xf32>
    %545 = arith.mulf %525, %535 : vector<2x32xf32>
    %546 = arith.addf %544, %545 : vector<2x32xf32>
    %547 = math.tanh %546 : vector<2x32xf32>
    %548 = arith.mulf %543, %547 : vector<2x32xf32>
    %549 = tpu.concatenate %517, %548 in 1 : vector<2x32xf32>, vector<2x32xf32> -> vector<2x64xf32>
    %550 = arith.truncf %549 : vector<2x64xf32> to vector<2x64xbf16>
    %cst_152 = arith.constant dense<0.000000e+00> : vector<2x256xf32>
    %551 = tpu.matmul %550, %17, %cst_152 {dimension_numbers = #tpu.dot_dimension_numbers<[1], [0], [0], [1], [0, 0, 1, 1], [], []>} : vector<2x64xbf16>, vector<64x256xbf16>, vector<2x256xf32> -> vector<2x256xf32>
    %552 = vector.extract_strided_slice %24 {offsets = [0, 7, 0], sizes = [2, 1, 128], strides = [1, 1, 1]} : vector<2x8x128xf32> to vector<2x1x128xf32>
    %553 = vector.shape_cast %552 : vector<2x1x128xf32> to vector<2x128xf32>
    %554 = vector.extract_strided_slice %551 {offsets = [0, 0], sizes = [2, 128], strides = [1, 1]} : vector<2x256xf32> to vector<2x128xf32>
    %555 = arith.addf %553, %554 : vector<2x128xf32>
    %556 = vector.extract_strided_slice %35 {offsets = [0, 7, 0], sizes = [2, 1, 128], strides = [1, 1, 1]} : vector<2x8x128xf32> to vector<2x1x128xf32>
    %557 = vector.shape_cast %556 : vector<2x1x128xf32> to vector<2x128xf32>
    %558 = vector.extract_strided_slice %551 {offsets = [0, 128], sizes = [2, 128], strides = [1, 1]} : vector<2x256xf32> to vector<2x128xf32>
    %559 = arith.addf %557, %558 : vector<2x128xf32>
    %560 = vector.extract_strided_slice %555 {offsets = [0, 0], sizes = [2, 32], strides = [1, 1]} : vector<2x128xf32> to vector<2x32xf32>
    %cst_153 = arith.constant 5.000000e-01 : f32
    %561 = vector.broadcast %cst_153 : f32 to vector<2x32xf32>
    %562 = arith.mulf %561, %560 : vector<2x32xf32>
    %563 = math.tanh %562 : vector<2x32xf32>
    %cst_154 = arith.constant 1.000000e+00 : f32
    %564 = vector.broadcast %cst_154 : f32 to vector<2x32xf32>
    %565 = arith.addf %563, %564 : vector<2x32xf32>
    %cst_155 = arith.constant 5.000000e-01 : f32
    %566 = vector.broadcast %cst_155 : f32 to vector<2x32xf32>
    %567 = arith.mulf %566, %565 : vector<2x32xf32>
    %568 = vector.extract_strided_slice %555 {offsets = [0, 32], sizes = [2, 32], strides = [1, 1]} : vector<2x128xf32> to vector<2x32xf32>
    %cst_156 = arith.constant 5.000000e-01 : f32
    %569 = vector.broadcast %cst_156 : f32 to vector<2x32xf32>
    %570 = arith.mulf %569, %568 : vector<2x32xf32>
    %571 = math.tanh %570 : vector<2x32xf32>
    %cst_157 = arith.constant 1.000000e+00 : f32
    %572 = vector.broadcast %cst_157 : f32 to vector<2x32xf32>
    %573 = arith.addf %571, %572 : vector<2x32xf32>
    %cst_158 = arith.constant 5.000000e-01 : f32
    %574 = vector.broadcast %cst_158 : f32 to vector<2x32xf32>
    %575 = arith.mulf %574, %573 : vector<2x32xf32>
    %576 = vector.extract_strided_slice %555 {offsets = [0, 64], sizes = [2, 32], strides = [1, 1]} : vector<2x128xf32> to vector<2x32xf32>
    %577 = math.tanh %576 : vector<2x32xf32>
    %578 = vector.extract_strided_slice %555 {offsets = [0, 96], sizes = [2, 32], strides = [1, 1]} : vector<2x128xf32> to vector<2x32xf32>
    %cst_159 = arith.constant 5.000000e-01 : f32
    %579 = vector.broadcast %cst_159 : f32 to vector<2x32xf32>
    %580 = arith.mulf %579, %578 : vector<2x32xf32>
    %581 = math.tanh %580 : vector<2x32xf32>
    %cst_160 = arith.constant 1.000000e+00 : f32
    %582 = vector.broadcast %cst_160 : f32 to vector<2x32xf32>
    %583 = arith.addf %581, %582 : vector<2x32xf32>
    %cst_161 = arith.constant 5.000000e-01 : f32
    %584 = vector.broadcast %cst_161 : f32 to vector<2x32xf32>
    %585 = arith.mulf %584, %583 : vector<2x32xf32>
    %586 = arith.mulf %575, %515 : vector<2x32xf32>
    %587 = arith.mulf %567, %577 : vector<2x32xf32>
    %588 = arith.addf %586, %587 : vector<2x32xf32>
    %589 = math.tanh %588 : vector<2x32xf32>
    %590 = arith.mulf %585, %589 : vector<2x32xf32>
    %591 = vector.extract_strided_slice %559 {offsets = [0, 0], sizes = [2, 32], strides = [1, 1]} : vector<2x128xf32> to vector<2x32xf32>
    %cst_162 = arith.constant 5.000000e-01 : f32
    %592 = vector.broadcast %cst_162 : f32 to vector<2x32xf32>
    %593 = arith.mulf %592, %591 : vector<2x32xf32>
    %594 = math.tanh %593 : vector<2x32xf32>
    %cst_163 = arith.constant 1.000000e+00 : f32
    %595 = vector.broadcast %cst_163 : f32 to vector<2x32xf32>
    %596 = arith.addf %594, %595 : vector<2x32xf32>
    %cst_164 = arith.constant 5.000000e-01 : f32
    %597 = vector.broadcast %cst_164 : f32 to vector<2x32xf32>
    %598 = arith.mulf %597, %596 : vector<2x32xf32>
    %599 = vector.extract_strided_slice %559 {offsets = [0, 32], sizes = [2, 32], strides = [1, 1]} : vector<2x128xf32> to vector<2x32xf32>
    %cst_165 = arith.constant 5.000000e-01 : f32
    %600 = vector.broadcast %cst_165 : f32 to vector<2x32xf32>
    %601 = arith.mulf %600, %599 : vector<2x32xf32>
    %602 = math.tanh %601 : vector<2x32xf32>
    %cst_166 = arith.constant 1.000000e+00 : f32
    %603 = vector.broadcast %cst_166 : f32 to vector<2x32xf32>
    %604 = arith.addf %602, %603 : vector<2x32xf32>
    %cst_167 = arith.constant 5.000000e-01 : f32
    %605 = vector.broadcast %cst_167 : f32 to vector<2x32xf32>
    %606 = arith.mulf %605, %604 : vector<2x32xf32>
    %607 = vector.extract_strided_slice %559 {offsets = [0, 64], sizes = [2, 32], strides = [1, 1]} : vector<2x128xf32> to vector<2x32xf32>
    %608 = math.tanh %607 : vector<2x32xf32>
    %609 = vector.extract_strided_slice %559 {offsets = [0, 96], sizes = [2, 32], strides = [1, 1]} : vector<2x128xf32> to vector<2x32xf32>
    %cst_168 = arith.constant 5.000000e-01 : f32
    %610 = vector.broadcast %cst_168 : f32 to vector<2x32xf32>
    %611 = arith.mulf %610, %609 : vector<2x32xf32>
    %612 = math.tanh %611 : vector<2x32xf32>
    %cst_169 = arith.constant 1.000000e+00 : f32
    %613 = vector.broadcast %cst_169 : f32 to vector<2x32xf32>
    %614 = arith.addf %612, %613 : vector<2x32xf32>
    %cst_170 = arith.constant 5.000000e-01 : f32
    %615 = vector.broadcast %cst_170 : f32 to vector<2x32xf32>
    %616 = arith.mulf %615, %614 : vector<2x32xf32>
    %617 = arith.mulf %606, %546 : vector<2x32xf32>
    %618 = arith.mulf %598, %608 : vector<2x32xf32>
    %619 = arith.addf %617, %618 : vector<2x32xf32>
    %620 = math.tanh %619 : vector<2x32xf32>
    %621 = arith.mulf %616, %620 : vector<2x32xf32>
    %622 = vector.shape_cast %79 : vector<2x32xf32> to vector<2x1x32xf32>
    %623 = vector.shape_cast %152 : vector<2x32xf32> to vector<2x1x32xf32>
    %624 = vector.shape_cast %225 : vector<2x32xf32> to vector<2x1x32xf32>
    %625 = vector.shape_cast %298 : vector<2x32xf32> to vector<2x1x32xf32>
    %626 = vector.shape_cast %371 : vector<2x32xf32> to vector<2x1x32xf32>
    %627 = vector.shape_cast %444 : vector<2x32xf32> to vector<2x1x32xf32>
    %628 = vector.shape_cast %517 : vector<2x32xf32> to vector<2x1x32xf32>
    %629 = vector.shape_cast %590 : vector<2x32xf32> to vector<2x1x32xf32>
    %630 = tpu.concatenate %622, %623, %624, %625, %626, %627, %628, %629 in 1 : vector<2x1x32xf32>, vector<2x1x32xf32>, vector<2x1x32xf32>, vector<2x1x32xf32>, vector<2x1x32xf32>, vector<2x1x32xf32>, vector<2x1x32xf32>, vector<2x1x32xf32> -> vector<2x8x32xf32>
    %631 = vector.shape_cast %630 : vector<2x8x32xf32> to vector<16x32xf32>
    %632 = vector.shape_cast %110 : vector<2x32xf32> to vector<2x1x32xf32>
    %633 = vector.shape_cast %183 : vector<2x32xf32> to vector<2x1x32xf32>
    %634 = vector.shape_cast %256 : vector<2x32xf32> to vector<2x1x32xf32>
    %635 = vector.shape_cast %329 : vector<2x32xf32> to vector<2x1x32xf32>
    %636 = vector.shape_cast %402 : vector<2x32xf32> to vector<2x1x32xf32>
    %637 = vector.shape_cast %475 : vector<2x32xf32> to vector<2x1x32xf32>
    %638 = vector.shape_cast %548 : vector<2x32xf32> to vector<2x1x32xf32>
    %639 = vector.shape_cast %621 : vector<2x32xf32> to vector<2x1x32xf32>
    %640 = tpu.concatenate %632, %633, %634, %635, %636, %637, %638, %639 in 1 : vector<2x1x32xf32>, vector<2x1x32xf32>, vector<2x1x32xf32>, vector<2x1x32xf32>, vector<2x1x32xf32>, vector<2x1x32xf32>, vector<2x1x32xf32>, vector<2x1x32xf32> -> vector<2x8x32xf32>
    %641 = vector.shape_cast %640 : vector<2x8x32xf32> to vector<16x32xf32>
    %642 = arith.truncf %631 : vector<16x32xf32> to vector<16x32xbf16>
    %cst_171 = arith.constant dense<0.000000e+00> : vector<16x32xf32>
    %643 = tpu.matmul %642, %10, %cst_171 {dimension_numbers = #tpu.dot_dimension_numbers<[1], [0], [0], [1], [0, 0, 1, 1], [], []>} : vector<16x32xbf16>, vector<32x32xbf16>, vector<16x32xf32> -> vector<16x32xf32>
    %644 = arith.truncf %641 : vector<16x32xf32> to vector<16x32xbf16>
    %cst_172 = arith.constant dense<0.000000e+00> : vector<16x32xf32>
    %645 = tpu.matmul %644, %13, %cst_172 {dimension_numbers = #tpu.dot_dimension_numbers<[1], [0], [0], [1], [0, 0, 1, 1], [], []>} : vector<16x32xbf16>, vector<32x32xbf16>, vector<16x32xf32> -> vector<16x32xf32>
    %646 = vector.shape_cast %15 : vector<1x32xf32> to vector<1x1x32xf32>
    %647 = vector.extract_strided_slice %643 {offsets = [0, 0], sizes = [8, 32], strides = [1, 1]} : vector<16x32xf32> to vector<8x32xf32>
    %648 = vector.extract_strided_slice %645 {offsets = [0, 0], sizes = [8, 32], strides = [1, 1]} : vector<16x32xf32> to vector<8x32xf32>
    %649 = vector.shape_cast %647 : vector<8x32xf32> to vector<8x1x32xf32>
    %650 = vector.shape_cast %648 : vector<8x32xf32> to vector<1x8x32xf32>
    %651 = vector.broadcast %649 : vector<8x1x32xf32> to vector<8x8x32xf32>
    %652 = vector.broadcast %650 : vector<1x8x32xf32> to vector<8x8x32xf32>
    %653 = arith.addf %651, %652 : vector<8x8x32xf32>
    %654 = vector.broadcast %646 : vector<1x1x32xf32> to vector<8x8x32xf32>
    %655 = arith.addf %653, %654 : vector<8x8x32xf32>
    %656 = math.tanh %655 : vector<8x8x32xf32>
    %657 = vector.shape_cast %656 : vector<8x8x32xf32> to vector<64x32xf32>
    %658 = vector.extract_strided_slice %643 {offsets = [8, 0], sizes = [8, 32], strides = [1, 1]} : vector<16x32xf32> to vector<8x32xf32>
    %659 = vector.extract_strided_slice %645 {offsets = [8, 0], sizes = [8, 32], strides = [1, 1]} : vector<16x32xf32> to vector<8x32xf32>
    %660 = vector.shape_cast %658 : vector<8x32xf32> to vector<8x1x32xf32>
    %661 = vector.shape_cast %659 : vector<8x32xf32> to vector<1x8x32xf32>
    %662 = vector.broadcast %660 : vector<8x1x32xf32> to vector<8x8x32xf32>
    %663 = vector.broadcast %661 : vector<1x8x32xf32> to vector<8x8x32xf32>
    %664 = arith.addf %662, %663 : vector<8x8x32xf32>
    %665 = vector.broadcast %646 : vector<1x1x32xf32> to vector<8x8x32xf32>
    %666 = arith.addf %664, %665 : vector<8x8x32xf32>
    %667 = math.tanh %666 : vector<8x8x32xf32>
    %668 = vector.shape_cast %667 : vector<8x8x32xf32> to vector<64x32xf32>
    %669 = tpu.concatenate %657, %668 in 0 : vector<64x32xf32>, vector<64x32xf32> -> vector<128x32xf32>
    %670 = arith.truncf %669 : vector<128x32xf32> to vector<128x32xbf16>
    %cst_173 = arith.constant dense<0.000000e+00> : vector<128x128xf32>
    %671 = tpu.matmul %670, %6, %cst_173 {dimension_numbers = #tpu.dot_dimension_numbers<[1], [0], [0], [1], [0, 0, 1, 1], [], []>} : vector<128x32xbf16>, vector<32x128xbf16>, vector<128x128xf32> -> vector<128x128xf32>
    %672 = vector.broadcast %7 : vector<1x128xf32> to vector<128x128xf32>
    %673 = arith.addf %671, %672 : vector<128x128xf32>
    %cst_174 = arith.constant dense<0xFF800000> : vector<128xf32>
    %674 = vector.multi_reduction <maximumf>, %673, %cst_174 [1] : vector<128x128xf32> to vector<128xf32>
    %675 = vector.shape_cast %674 : vector<128xf32> to vector<128x1xf32>
    %676 = vector.broadcast %675 : vector<128x1xf32> to vector<128x128xf32>
    %677 = arith.subf %673, %676 : vector<128x128xf32>
    %678 = math.exp %677 : vector<128x128xf32>
    %cst_175 = arith.constant dense<0.000000e+00> : vector<128xf32>
    %679 = vector.multi_reduction <add>, %678, %cst_175 [1] : vector<128x128xf32> to vector<128xf32>
    %680 = vector.shape_cast %679 : vector<128xf32> to vector<128x1xf32>
    %681 = math.log %680 : vector<128x1xf32>
    %682 = arith.addf %681, %675 : vector<128x1xf32>
    %683 = vector.broadcast %682 : vector<128x1xf32> to vector<128x128xf32>
    %684 = arith.subf %673, %683 : vector<128x128xf32>
    %c0_176 = arith.constant 0 : index
    %c0_177 = arith.constant 0 : index
    %685 = vector.load %arg4[%c0_176, %c0_177] : memref<128x128xf32, #tpu.memory_space<vmem>>, vector<128x128xf32>
    tpu.vector_store %arg4[%c0_176, %c0_177], %684 {strides = array<i32>} : memref<128x128xf32, #tpu.memory_space<vmem>>, vector<128x128xf32>,
    return
  }
}

</mosaic_0001>

<llo_original>
// kernel: rnnt_forward.1
$region0: #{rnnt_forward.1}
  #allocation0 [shape = 'u32[]', space=smem, size = 0x4, offset = 0x4, fixed_abs, tag = 'smem constant byte address 0x4 - core index']
  #allocation1 [shape = 'u32[144,128]{1,0:T(1,128)}', space=vmem, size = 0x12000, scoped, tag = 'internal scratch']
  %s0 = inlined_call_operand.vmem [shape: f32[2,8,16], index: 0, kind: input, shape index: {}]
  %s1 = inlined_call_operand.vmem [shape: s32[2,8], index: 1, kind: input, shape index: {}]
  %s2 = inlined_call_operand.vmem [shape: f32[152,128], index: 2, kind: input, shape index: {}]
  %s3 = inlined_call_operand.vmem [shape: f32[64,256], index: 3, kind: input, shape index: {}]
  %s4 = inlined_call_operand.hbm [shape: f32[128,128], index: 4, kind: output, shape index: {}]
  %s5 = sld [smem:[#allocation0]]
  $region26: #{rnnt_forward.1} parent=0
    _
  %s7 = ssub.s32 1, %s5
  %s8 = scalar_select 0, %s7, %s5
  $region1: #{rnnt_forward.1} parent=0
    #allocation2 [shape = 'u8[65536]{0}', space=vmem, size = 0x10000, scoped, tag = 'output window, operand 0, single buffered']
    #allocation3 [shape = 's32[1]{0}', space=sflag, size = 0x4, scoped, tag = 'scoped memory for rnnt_forward.1']
    %9 = vsyncpa [#allocation3], 0
    // Predicated region
    $region2: #{rnnt_forward.1} parent=1 // pred_check
      _
    $region3: #{rnnt_forward.1} parent=1 // pred_check_branch
      %11 = sbr.rel (0) target = $region5
    $region4: #{rnnt_forward.1} parent=1 // pred_region
      _
    $region5: #{rnnt_forward.1} parent=1 // pred_fallthru
      _
    // Predicated region
    $region6: #{rnnt_forward.1} parent=1 // pred_check
      _
    $region7: #{rnnt_forward.1} parent=1 // pred_check_branch
      %13 = sbr.rel (0) target = $region9
    $region8: #{rnnt_forward.1} parent=1 // pred_region
      _
    $region9: #{rnnt_forward.1} parent=1 // pred_fallthru
      _
    // Predicated region
    $region10: #{rnnt_forward.1} parent=1 // pred_check
      _
    $region11: #{rnnt_forward.1} parent=1 // pred_check_branch
      %15 = sbr.rel (0) target = $region13
    $region12: #{rnnt_forward.1} parent=1 // pred_region
      _
    $region13: #{rnnt_forward.1} parent=1 // pred_fallthru
      _
    // Predicated region
    $region14: #{rnnt_forward.1} parent=1 // pred_check
      _
    $region15: #{rnnt_forward.1} parent=1 // pred_check_branch
      %17 = sbr.rel (0) target = $region17
    $region16: #{rnnt_forward.1} parent=1 // pred_region
      _
    $region17: #{rnnt_forward.1} parent=1 // pred_fallthru
      _
    %v19 = vld [vmem:[%s2] sm:$0xff]
    %v20 = vld [vmem:[%s2 + $0x8] sm:$0xff]
    %v21 = vpack.c.bf16 %v20, %v19
    %v22 = vld [vmem:[%s2 + $0x10] sm:$0x1]
    %v23 = vld [vmem:[%s2 + $0x18] sm:$0xff]
    %v24 = vld [vmem:[%s2 + $0x20] sm:$0xff]
    %v25 = vpack.c.bf16 %v24, %v23
    %v26 = vld [vmem:[%s2 + $0x28] sm:$0xff]
    %v27 = vld [vmem:[%s2 + $0x30] sm:$0xff]
    %v28 = vld [vmem:[%s2 + $0x38] sm:$0xff]
    %v29 = vld [vmem:[%s2 + $0x40] sm:$0xff]
    %v30 = vpack.c.bf16 %v27, %v26
    %v31 = vpack.c.bf16 %v29, %v28
    %v32 = vld [vmem:[%s2 + $0x48] sm:$0x1]
    %v33 = vld [vmem:[%s2 + $0x50] sm:$0xff]
    %v34 = vld [vmem:[%s2 + $0x58] sm:$0xff]
    %v35 = vld [vmem:[%s2 + $0x60] sm:$0xff]
    %v36 = vld [vmem:[%s2 + $0x68] sm:$0xff]
    %v37 = vpack.c.bf16 %v34, %v33
    %v38 = vpack.c.bf16 %v36, %v35
    %v39 = vld [vmem:[%s2 + $0x70] sm:$0xff]
    %v40 = vld [vmem:[%s2 + $0x78] sm:$0xff]
    %v41 = vld [vmem:[%s2 + $0x80] sm:$0xff]
    %v42 = vld [vmem:[%s2 + $0x88] sm:$0xff]
    %v43 = vpack.c.bf16 %v40, %v39
    %v44 = vpack.c.bf16 %v42, %v41
    %v45 = vld [vmem:[%s2 + $0x90] sm:$0x1]
    %v46 = vld [vmem:[%s3] sm:$0xff]
    %v47 = vld [vmem:[%s3 + $0x8] sm:$0xff]
    %v48 = vld [vmem:[%s3 + $0x10] sm:$0xff]
    %v49 = vld [vmem:[%s3 + $0x18] sm:$0xff]
    %v50 = vld [vmem:[%s3 + $0x20] sm:$0xff]
    %v51 = vld [vmem:[%s3 + $0x28] sm:$0xff]
    %v52 = vld [vmem:[%s3 + $0x30] sm:$0xff]
    %v53 = vld [vmem:[%s3 + $0x38] sm:$0xff]
    %v54 = vld [vmem:[%s3 + $0x40] sm:$0xff]
    %v55 = vld [vmem:[%s3 + $0x48] sm:$0xff]
    %v56 = vld [vmem:[%s3 + $0x50] sm:$0xff]
    %v57 = vld [vmem:[%s3 + $0x58] sm:$0xff]
    %v58 = vld [vmem:[%s3 + $0x60] sm:$0xff]
    %v59 = vld [vmem:[%s3 + $0x68] sm:$0xff]
    %v60 = vld [vmem:[%s3 + $0x70] sm:$0xff]
    %v61 = vld [vmem:[%s3 + $0x78] sm:$0xff]
    %v62 = vpack.c.bf16 %v48, %v46
    %v63 = vpack.c.bf16 %v49, %v47
    %v64 = vpack.c.bf16 %v52, %v50
    %v65 = vpack.c.bf16 %v53, %v51
    %v66 = vpack.c.bf16 %v56, %v54
    %v67 = vpack.c.bf16 %v57, %v55
    %v68 = vpack.c.bf16 %v60, %v58
    %v69 = vpack.c.bf16 %v61, %v59
    %v70 = vld [vmem:[%s0] sm:$0xff]
    %v71 = vld [vmem:[%s0 + $0x8] sm:$0xff]
    %v72 = vpack.c.bf16 %v71, %v70
    %v73 = vlaneseq
    %v74 = vshrl.u32 %v73, 7
    %v75 = vsub.s32 0, %v74
    %v76 = vrot.slane %v22, %v75
    %vm77 = vcmask 130048
    %v79 = vsel %vm77, %v72, 0
    %81 = vmatprep.subr.bf16.mxu0 0
    %82 = vmatpush1.bf16.msra.mxu0 %v21
    %83 = vmatprep.subr.bf16.mxu0 0
    %84 = vmatpush1.bf16.msra.mxu0 0
    %85 = vmatprep.subr.bf16.mxu0 0
    %86 = vmatpush1.bf16.msra.mxu0 0
    %87 = vmatprep.subr.bf16.mxu0 0
    %88 = vmatpush1.bf16.msra.mxu0 0
    %89 = vmatprep.subr.bf16.mxu0 0
    %90 = vmatpush1.bf16.msra.mxu0 0
    %91 = vmatprep.subr.bf16.mxu0 0
    %92 = vmatpush1.bf16.msra.mxu0 0
    %93 = vmatprep.subr.bf16.mxu0 0
    %94 = vmatpush1.bf16.msra.mxu0 0
    %95 = vmatprep.subr.bf16.mxu0 0
    %96 = vmatpush1.bf16.msra.mxu0 0
    %97 = vmatprep.subr.bf16.mxu0 0
    %98 = vmatpush1.bf16.msra.mxu0 0
    %99 = vmatprep.subr.bf16.mxu0 0
    %100 = vmatpush1.bf16.msra.mxu0 0
    %101 = vmatprep.subr.bf16.mxu0 0
    %102 = vmatpush1.bf16.msra.mxu0 0
    %103 = vmatprep.subr.bf16.mxu0 0
    %104 = vmatpush1.bf16.msra.mxu0 0
    %105 = vmatprep.subr.bf16.mxu0 0
    %106 = vmatpush1.bf16.msra.mxu0 0
    %107 = vmatprep.subr.bf16.mxu0 0
    %108 = vmatpush1.bf16.msra.mxu0 0
    %109 = vmatprep.subr.bf16.mxu0 0
    %110 = vmatpush1.bf16.msra.mxu0 0
    %111 = vmatprep.subr.bf16.mxu0 0
    %112 = vmatpush1.bf16.msra.mxu0 0
    %113 = vmatprep.mubr.bf16.mxu0 0
    %114 = vmatmul.mubr.bf16.gmra.mrb[0].mxu0 %v79
    %v115 = vpop.f32.mrb[0].mxu0
    %v116 = vadd.f32 %v76, %v115
    %v117 = vpop.f32.mrb[0].mxu0
    %v118 = vpop.f32.mrb[0].mxu0
    %v119 = vadd.f32 %v76, %v118
    %v120 = vpop.f32.mrb[0].mxu0
    %121 = vdwg.mxu0
    %v122 = vld [vmem:[%s1] sm:$0x3]
    %v123 = vlaneseq
    %v124 = vand.u32 %v123, 127
    %v125 = vlaneseq
    %v126 = vshrl.u32 %v125, 7
    %v127 = vsub.s32 0, %v126
    %v128 = vrot.slane %v122, %v127
    %130 = vbcast.lane.b32.xlu0 %v128, 256
    %v131 = vpop.permute.xlu0 %130
    %v132 = vlaneseq
    %v133 = vshrl.u32 %v132, 7
    %v134 = vsub.s32 1, %v133
    %v135 = vrot.slane %v122, %v134
    %137 = vbcast.lane.b32.xlu0 %v135, 256
    %v138 = vpop.permute.xlu0 %137
    %vm139 = vcmp.eq.s32.totalorder %v131, %v124
    %vm140 = vcmp.eq.s32.totalorder %v138, %v124
    %v141 = vsel %vm139, 1, 0
    %v142 = vsel %vm140, 1, 0
    %v143 = vcvt.s32.f32 %v141
    %v144 = vcvt.s32.f32 %v142
    %v145 = vpack.c.bf16 %v143, %v143
    %v146 = vpack.c.bf16 %v144, %v144
    %v149 = vunpack.c.l.b16 %v145
    %v150 = vunpack.c.l.b16 %v146
    %v151 = vpack.c.b16 %v150, %v149
    %v153 = vsel %vm77, %v151, 0
    %155 = vmatprep.subr.bf16.mxu0 0
    %156 = vmatpush1.bf16.msra.mxu0 %v25
    %157 = vmatprep.subr.bf16.mxu0 0
    %158 = vmatpush1.bf16.msra.mxu0 0
    %159 = vmatprep.subr.bf16.mxu0 0
    %160 = vmatpush1.bf16.msra.mxu0 0
    %161 = vmatprep.subr.bf16.mxu0 0
    %162 = vmatpush1.bf16.msra.mxu0 0
    %163 = vmatprep.subr.bf16.mxu0 0
    %164 = vmatpush1.bf16.msra.mxu0 0
    %165 = vmatprep.subr.bf16.mxu0 0
    %166 = vmatpush1.bf16.msra.mxu0 0
    %167 = vmatprep.subr.bf16.mxu0 0
    %168 = vmatpush1.bf16.msra.mxu0 0
    %169 = vmatprep.subr.bf16.mxu0 0
    %170 = vmatpush1.bf16.msra.mxu0 0
    %171 = vmatprep.subr.bf16.mxu0 0
    %172 = vmatpush1.bf16.msra.mxu0 0
    %173 = vmatprep.subr.bf16.mxu0 0
    %174 = vmatpush1.bf16.msra.mxu0 0
    %175 = vmatprep.subr.bf16.mxu0 0
    %176 = vmatpush1.bf16.msra.mxu0 0
    %177 = vmatprep.subr.bf16.mxu0 0
    %178 = vmatpush1.bf16.msra.mxu0 0
    %179 = vmatprep.subr.bf16.mxu0 0
    %180 = vmatpush1.bf16.msra.mxu0 0
    %181 = vmatprep.subr.bf16.mxu0 0
    %182 = vmatpush1.bf16.msra.mxu0 0
    %183 = vmatprep.subr.bf16.mxu0 0
    %184 = vmatpush1.bf16.msra.mxu0 0
    %185 = vmatprep.subr.bf16.mxu0 0
    %186 = vmatpush1.bf16.msra.mxu0 0
    %187 = vmatprep.mubr.bf16.mxu0 0
    %188 = vmatmul.mubr.bf16.gmra.mrb[0].mxu0 %v153
    %v189 = vpop.f32.mrb[0].mxu0
    %v190 = vadd.f32 0.0, %v189
    %v191 = vpop.f32.mrb[0].mxu0
    %v192 = vpop.f32.mrb[0].mxu0
    %v193 = vadd.f32 0.0, %v192
    %v194 = vpop.f32.mrb[0].mxu0
    %195 = vdwg.mxu0
    %vm196 = vcmask 523264
    %v198 = vsel %vm196, 0, 0
    %200 = vmatprep.subr.bf16.mxu0 %v63
    %201 = vmatpush1.bf16.msra.mxu0 %v62
    %202 = vmatprep.subr.bf16.mxu0 %v65
    %203 = vmatpush1.bf16.msra.mxu0 %v64
    %204 = vmatprep.subr.bf16.mxu0 %v67
    %205 = vmatpush1.bf16.msra.mxu0 %v66
    %206 = vmatprep.subr.bf16.mxu0 %v69
    %207 = vmatpush1.bf16.msra.mxu0 %v68
    %208 = vmatprep.subr.bf16.mxu0 0
    %209 = vmatpush1.bf16.msra.mxu0 0
    %210 = vmatprep.subr.bf16.mxu0 0
    %211 = vmatpush1.bf16.msra.mxu0 0
    %212 = vmatprep.subr.bf16.mxu0 0
    %213 = vmatpush1.bf16.msra.mxu0 0
    %214 = vmatprep.subr.bf16.mxu0 0
    %215 = vmatpush1.bf16.msra.mxu0 0
    %216 = vmatprep.subr.bf16.mxu0 0
    %217 = vmatpush1.bf16.msra.mxu0 0
    %218 = vmatprep.subr.bf16.mxu0 0
    %219 = vmatpush1.bf16.msra.mxu0 0
    %220 = vmatprep.subr.bf16.mxu0 0
    %221 = vmatpush1.bf16.msra.mxu0 0
    %222 = vmatprep.subr.bf16.mxu0 0
    %223 = vmatpush1.bf16.msra.mxu0 0
    %224 = vmatprep.subr.bf16.mxu0 0
    %225 = vmatpush1.bf16.msra.mxu0 0
    %226 = vmatprep.subr.bf16.mxu0 0
    %227 = vmatpush1.bf16.msra.mxu0 0
    %228 = vmatprep.subr.bf16.mxu0 0
    %229 = vmatpush1.bf16.msra.mxu0 0
    %230 = vmatprep.subr.bf16.mxu0 0
    %231 = vmatpush1.bf16.msra.mxu0 0
    %232 = vmatprep.mubr.bf16.mxu0 0
    %233 = vmatmul.mubr.bf16.gmra.mrb[0].mxu0 %v198
    %v234 = vpop.f32.mrb[0].mxu0
    %v235 = vadd.f32 0.0, %v234
    %v236 = vpop.f32.mrb[0].mxu0
    %v237 = vadd.f32 0.0, %v236
    %v238 = vpop.f32.mrb[0].mxu0
    %v239 = vpop.f32.mrb[0].mxu0
    %240 = vdwg.mxu0
    %v242 = vrot.slane %v235, 1
    %v245 = vadd.f32 %v116, %v235
    %v246 = vadd.f32 %v119, %v242
    %v248 = vrot.slane %v237, 1
    %v251 = vadd.f32 %v190, %v237
    %v252 = vadd.f32 %v193, %v248
    %v253 = vmul.f32 %v245, 0.5
    %v254 = vmul.f32 %v246, 0.5
    %v255 = vtanh.pop %v253
    %v256 = vtanh.pop %v254
    %v257 = vadd.f32 %v255, 1.0
    %v258 = vadd.f32 %v256, 1.0
    %v259 = vmul.f32 %v257, 0.5
    %v260 = vmul.f32 %v258, 0.5
    %v261 = vtanh.pop %v245
    %v262 = vtanh.pop %v246
    %v263 = vmul.f32 %v259, 0.0
    %v264 = vmul.f32 %v260, 0.0
    %267 = vrot.lane.b32.xlu0 %v261, 64
    %v268 = vpop.permute.xlu0 %267
    %269 = vrot.lane.b32.xlu0 %v262, 64
    %v270 = vpop.permute.xlu0 %269
    %v273 = vmul.f32 %v259, %v268
    %v274 = vmul.f32 %v260, %v270
    %277 = vrot.lane.b32.xlu0 %v273, 32
    %v278 = vpop.permute.xlu0 %277
    %279 = vrot.lane.b32.xlu0 %v274, 32
    %v280 = vpop.permute.xlu0 %279
    %v283 = vadd.f32 %v263, %v278
    %v284 = vadd.f32 %v264, %v280
    %v285 = vtanh.pop %v283
    %v286 = vtanh.pop %v284
    %289 = vrot.lane.b32.xlu0 %v285, 64
    %v290 = vpop.permute.xlu0 %289
    %291 = vrot.lane.b32.xlu0 %v286, 64
    %v292 = vpop.permute.xlu0 %291
    %v295 = vmul.f32 %v259, %v290
    %v296 = vmul.f32 %v260, %v292
    %v297 = vmul.f32 %v251, 0.5
    %v298 = vmul.f32 %v252, 0.5
    %v299 = vtanh.pop %v297
    %v300 = vtanh.pop %v298
    %v301 = vadd.f32 %v299, 1.0
    %v302 = vadd.f32 %v300, 1.0
    %v303 = vmul.f32 %v301, 0.5
    %v304 = vmul.f32 %v302, 0.5
    %v305 = vtanh.pop %v251
    %v306 = vtanh.pop %v252
    %v307 = vmul.f32 %v303, 0.0
    %v308 = vmul.f32 %v304, 0.0
    %311 = vrot.lane.b32.xlu0 %v305, 64
    %v312 = vpop.permute.xlu0 %311
    %313 = vrot.lane.b32.xlu0 %v306, 64
    %v314 = vpop.permute.xlu0 %313
    %v317 = vmul.f32 %v303, %v312
    %v318 = vmul.f32 %v304, %v314
    %321 = vrot.lane.b32.xlu0 %v317, 32
    %v322 = vpop.permute.xlu0 %321
    %323 = vrot.lane.b32.xlu0 %v318, 32
    %v324 = vpop.permute.xlu0 %323
    %v327 = vadd.f32 %v307, %v322
    %v328 = vadd.f32 %v308, %v324
    %v329 = vtanh.pop %v327
    %v330 = vtanh.pop %v328
    %333 = vrot.lane.b32.xlu0 %v329, 64
    %v334 = vpop.permute.xlu0 %333
    %335 = vrot.lane.b32.xlu0 %v330, 64
    %v336 = vpop.permute.xlu0 %335
    %v339 = vmul.f32 %v303, %v334
    %v340 = vmul.f32 %v304, %v336
    %v343 = vrot.slane %v296, 7
    %vm344 = vcmask 1041409
    %v345 = vsel %vm344, %v343, %v295
    %346 = vrot.lane.b32.xlu0 %v345, 32
    %v347 = vpop.permute.xlu0 %346
    %v351 = vrot.slane %v340, 7
    %v352 = vsel %vm344, %v351, %v339
    %353 = vrot.lane.b32.xlu0 %v352, 64
    %v354 = vpop.permute.xlu0 %353
    %vm356 = vcmask 261120
    %v357 = vsel %vm356, %v347, %v354
    %v358 = vpack.c.bf16 %v357, %v357
    %v360 = vsel %vm196, %v358, 0
    %362 = vmatprep.subr.bf16.mxu0 %v63
    %363 = vmatpush1.bf16.msra.mxu0 %v62
    %364 = vmatprep.subr.bf16.mxu0 %v65
    %365 = vmatpush1.bf16.msra.mxu0 %v64
    %366 = vmatprep.subr.bf16.mxu0 %v67
    %367 = vmatpush1.bf16.msra.mxu0 %v66
    %368 = vmatprep.subr.bf16.mxu0 %v69
    %369 = vmatpush1.bf16.msra.mxu0 %v68
    %370 = vmatprep.subr.bf16.mxu0 0
    %371 = vmatpush1.bf16.msra.mxu0 0
    %372 = vmatprep.subr.bf16.mxu0 0
    %373 = vmatpush1.bf16.msra.mxu0 0
    %374 = vmatprep.subr.bf16.mxu0 0
    %375 = vmatpush1.bf16.msra.mxu0 0
    %376 = vmatprep.subr.bf16.mxu0 0
    %377 = vmatpush1.bf16.msra.mxu0 0
    %378 = vmatprep.subr.bf16.mxu0 0
    %379 = vmatpush1.bf16.msra.mxu0 0
    %380 = vmatprep.subr.bf16.mxu0 0
    %381 = vmatpush1.bf16.msra.mxu0 0
    %382 = vmatprep.subr.bf16.mxu0 0
    %383 = vmatpush1.bf16.msra.mxu0 0
    %384 = vmatprep.subr.bf16.mxu0 0
    %385 = vmatpush1.bf16.msra.mxu0 0
    %386 = vmatprep.subr.bf16.mxu0 0
    %387 = vmatpush1.bf16.msra.mxu0 0
    %388 = vmatprep.subr.bf16.mxu0 0
    %389 = vmatpush1.bf16.msra.mxu0 0
    %390 = vmatprep.subr.bf16.mxu0 0
    %391 = vmatpush1.bf16.msra.mxu0 0
    %392 = vmatprep.subr.bf16.mxu0 0
    %393 = vmatpush1.bf16.msra.mxu0 0
    %394 = vmatprep.mubr.bf16.mxu0 0
    %395 = vmatmul.mubr.bf16.gmra.mrb[0].mxu0 %v360
    %v396 = vpop.f32.mrb[0].mxu0
    %v397 = vadd.f32 0.0, %v396
    %v398 = vpop.f32.mrb[0].mxu0
    %v399 = vadd.f32 0.0, %v398
    %v400 = vpop.f32.mrb[0].mxu0
    %v401 = vpop.f32.mrb[0].mxu0
    %402 = vdwg.mxu0
    %v404 = vrot.slane %v397, 7
    %v407 = vadd.f32 %v116, %v404
    %v408 = vadd.f32 %v119, %v397
    %v410 = vrot.slane %v399, 7
    %v413 = vadd.f32 %v190, %v410
    %v414 = vadd.f32 %v193, %v399
    %v415 = vmul.f32 %v407, 0.5
    %v416 = vmul.f32 %v408, 0.5
    %v417 = vtanh.pop %v415
    %v418 = vtanh.pop %v416
    %v419 = vadd.f32 %v417, 1.0
    %v420 = vadd.f32 %v418, 1.0
    %v421 = vmul.f32 %v419, 0.5
    %v422 = vmul.f32 %v420, 0.5
    %v423 = vtanh.pop %v407
    %v424 = vtanh.pop %v408
    %v427 = vrot.slane %v283, 7
    %v428 = vrot.slane %v284, 7
    %v431 = vmul.f32 %v421, %v427
    %v432 = vmul.f32 %v422, %v428
    %435 = vrot.lane.b32.xlu0 %v423, 64
    %v436 = vpop.permute.xlu0 %435
    %437 = vrot.lane.b32.xlu0 %v424, 64
    %v438 = vpop.permute.xlu0 %437
    %v441 = vmul.f32 %v421, %v436
    %v442 = vmul.f32 %v422, %v438
    %445 = vrot.lane.b32.xlu0 %v441, 32
    %v446 = vpop.permute.xlu0 %445
    %447 = vrot.lane.b32.xlu0 %v442, 32
    %v448 = vpop.permute.xlu0 %447
    %v451 = vadd.f32 %v431, %v446
    %v452 = vadd.f32 %v432, %v448
    %v453 = vtanh.pop %v451
    %v454 = vtanh.pop %v452
    %457 = vrot.lane.b32.xlu0 %v453, 64
    %v458 = vpop.permute.xlu0 %457
    %459 = vrot.lane.b32.xlu0 %v454, 64
    %v460 = vpop.permute.xlu0 %459
    %v463 = vmul.f32 %v421, %v458
    %v464 = vmul.f32 %v422, %v460
    %v465 = vmul.f32 %v413, 0.5
    %v466 = vmul.f32 %v414, 0.5
    %v467 = vtanh.pop %v465
    %v468 = vtanh.pop %v466
    %v469 = vadd.f32 %v467, 1.0
    %v470 = vadd.f32 %v468, 1.0
    %v471 = vmul.f32 %v469, 0.5
    %v472 = vmul.f32 %v470, 0.5
    %v473 = vtanh.pop %v413
    %v474 = vtanh.pop %v414
    %v477 = vrot.slane %v327, 7
    %v478 = vrot.slane %v328, 7
    %v481 = vmul.f32 %v471, %v477
    %v482 = vmul.f32 %v472, %v478
    %485 = vrot.lane.b32.xlu0 %v473, 64
    %v486 = vpop.permute.xlu0 %485
    %487 = vrot.lane.b32.xlu0 %v474, 64
    %v488 = vpop.permute.xlu0 %487
    %v491 = vmul.f32 %v471, %v486
    %v492 = vmul.f32 %v472, %v488
    %495 = vrot.lane.b32.xlu0 %v491, 32
    %v496 = vpop.permute.xlu0 %495
    %497 = vrot.lane.b32.xlu0 %v492, 32
    %v498 = vpop.permute.xlu0 %497
    %v501 = vadd.f32 %v481, %v496
    %v502 = vadd.f32 %v482, %v498
    %v503 = vtanh.pop %v501
    %v504 = vtanh.pop %v502
    %507 = vrot.lane.b32.xlu0 %v503, 64
    %v508 = vpop.permute.xlu0 %507
    %509 = vrot.lane.b32.xlu0 %v504, 64
    %v510 = vpop.permute.xlu0 %509
    %v513 = vmul.f32 %v471, %v508
    %v514 = vmul.f32 %v472, %v510
    %v517 = vrot.slane %v464, 7
    %vm518 = vcmask 1042434
    %v519 = vsel %vm518, %v517, %v463
    %520 = vrot.lane.b32.xlu0 %v519, 32
    %v521 = vpop.permute.xlu0 %520
    %v525 = vrot.slane %v514, 7
    %v526 = vsel %vm518, %v525, %v513
    %527 = vrot.lane.b32.xlu0 %v526, 64
    %v528 = vpop.permute.xlu0 %527
    %v530 = vsel %vm356, %v521, %v528
    %v531 = vpack.c.bf16 %v530, %v530
    %v533 = vshrl.u32 %v531, 16
    %v535 = vshll.u32 %v531, 16
    %v537 = vrot.slane %v535, 1
    %v538 = vor.u32 %v533, %v537
    %v540 = vsel %vm196, %v538, 0
    %542 = vmatprep.subr.bf16.mxu0 %v63
    %543 = vmatpush1.bf16.msra.mxu0 %v62
    %544 = vmatprep.subr.bf16.mxu0 %v65
    %545 = vmatpush1.bf16.msra.mxu0 %v64
    %546 = vmatprep.subr.bf16.mxu0 %v67
    %547 = vmatpush1.bf16.msra.mxu0 %v66
    %548 = vmatprep.subr.bf16.mxu0 %v69
    %549 = vmatpush1.bf16.msra.mxu0 %v68
    %550 = vmatprep.subr.bf16.mxu0 0
    %551 = vmatpush1.bf16.msra.mxu0 0
    %552 = vmatprep.subr.bf16.mxu0 0
    %553 = vmatpush1.bf16.msra.mxu0 0
    %554 = vmatprep.subr.bf16.mxu0 0
    %555 = vmatpush1.bf16.msra.mxu0 0
    %556 = vmatprep.subr.bf16.mxu0 0
    %557 = vmatpush1.bf16.msra.mxu0 0
    %558 = vmatprep.subr.bf16.mxu0 0
    %559 = vmatpush1.bf16.msra.mxu0 0
    %560 = vmatprep.subr.bf16.mxu0 0
    %561 = vmatpush1.bf16.msra.mxu0 0
    %562 = vmatprep.subr.bf16.mxu0 0
    %563 = vmatpush1.bf16.msra.mxu0 0
    %564 = vmatprep.subr.bf16.mxu0 0
    %565 = vmatpush1.bf16.msra.mxu0 0
    %566 = vmatprep.subr.bf16.mxu0 0
    %567 = vmatpush1.bf16.msra.mxu0 0
    %568 = vmatprep.subr.bf16.mxu0 0
    %569 = vmatpush1.bf16.msra.mxu0 0
    %570 = vmatprep.subr.bf16.mxu0 0
    %571 = vmatpush1.bf16.msra.mxu0 0
    %572 = vmatprep.subr.bf16.mxu0 0
    %573 = vmatpush1.bf16.msra.mxu0 0
    %574 = vmatprep.mubr.bf16.mxu0 0
    %575 = vmatmul.mubr.bf16.gmra.mrb[0].mxu0 %v540
    %v576 = vpop.f32.mrb[0].mxu0
    %v577 = vadd.f32 0.0, %v576
    %v578 = vpop.f32.mrb[0].mxu0
    %v579 = vadd.f32 0.0, %v578
    %v580 = vpop.f32.mrb[0].mxu0
    %v581 = vpop.f32.mrb[0].mxu0
    %582 = vdwg.mxu0
    %v584 = vrot.slane %v577, 6
    %v585 = vrot.slane %v577, 7
    %v588 = vadd.f32 %v116, %v584
    %v589 = vadd.f32 %v119, %v585
    %v591 = vrot.slane %v579, 6
    %v592 = vrot.slane %v579, 7
    %v595 = vadd.f32 %v190, %v591
    %v596 = vadd.f32 %v193, %v592
    %v597 = vmul.f32 %v588, 0.5
    %v598 = vmul.f32 %v589, 0.5
    %v599 = vtanh.pop %v597
    %v600 = vtanh.pop %v598
    %v601 = vadd.f32 %v599, 1.0
    %v602 = vadd.f32 %v600, 1.0
    %v603 = vmul.f32 %v601, 0.5
    %v604 = vmul.f32 %v602, 0.5
    %v605 = vtanh.pop %v588
    %v606 = vtanh.pop %v589
    %v609 = vrot.slane %v451, 7
    %v610 = vrot.slane %v452, 7
    %v613 = vmul.f32 %v603, %v609
    %v614 = vmul.f32 %v604, %v610
    %617 = vrot.lane.b32.xlu0 %v605, 64
    %v618 = vpop.permute.xlu0 %617
    %619 = vrot.lane.b32.xlu0 %v606, 64
    %v620 = vpop.permute.xlu0 %619
    %v623 = vmul.f32 %v603, %v618
    %v624 = vmul.f32 %v604, %v620
    %627 = vrot.lane.b32.xlu0 %v623, 32
    %v628 = vpop.permute.xlu0 %627
    %629 = vrot.lane.b32.xlu0 %v624, 32
    %v630 = vpop.permute.xlu0 %629
    %v633 = vadd.f32 %v613, %v628
    %v634 = vadd.f32 %v614, %v630
    %v635 = vtanh.pop %v633
    %v636 = vtanh.pop %v634
    %639 = vrot.lane.b32.xlu0 %v635, 64
    %v640 = vpop.permute.xlu0 %639
    %641 = vrot.lane.b32.xlu0 %v636, 64
    %v642 = vpop.permute.xlu0 %641
    %v645 = vmul.f32 %v603, %v640
    %v646 = vmul.f32 %v604, %v642
    %v647 = vmul.f32 %v595, 0.5
    %v648 = vmul.f32 %v596, 0.5
    %v649 = vtanh.pop %v647
    %v650 = vtanh.pop %v648
    %v651 = vadd.f32 %v649, 1.0
    %v652 = vadd.f32 %v650, 1.0
    %v653 = vmul.f32 %v651, 0.5
    %v654 = vmul.f32 %v652, 0.5
    %v655 = vtanh.pop %v595
    %v656 = vtanh.pop %v596
    %v659 = vrot.slane %v501, 7
    %v660 = vrot.slane %v502, 7
    %v663 = vmul.f32 %v653, %v659
    %v664 = vmul.f32 %v654, %v660
    %667 = vrot.lane.b32.xlu0 %v655, 64
    %v668 = vpop.permute.xlu0 %667
    %669 = vrot.lane.b32.xlu0 %v656, 64
    %v670 = vpop.permute.xlu0 %669
    %v673 = vmul.f32 %v653, %v668
    %v674 = vmul.f32 %v654, %v670
    %677 = vrot.lane.b32.xlu0 %v673, 32
    %v678 = vpop.permute.xlu0 %677
    %679 = vrot.lane.b32.xlu0 %v674, 32
    %v680 = vpop.permute.xlu0 %679
    %v683 = vadd.f32 %v663, %v678
    %v684 = vadd.f32 %v664, %v680
    %v685 = vtanh.pop %v683
    %v686 = vtanh.pop %v684
    %689 = vrot.lane.b32.xlu0 %v685, 64
    %v690 = vpop.permute.xlu0 %689
    %691 = vrot.lane.b32.xlu0 %v686, 64
    %v692 = vpop.permute.xlu0 %691
    %v695 = vmul.f32 %v653, %v690
    %v696 = vmul.f32 %v654, %v692
    %v699 = vrot.slane %v646, 7
    %vm700 = vcmask 1043459
    %v701 = vsel %vm700, %v699, %v645
    %702 = vrot.lane.b32.xlu0 %v701, 32
    %v703 = vpop.permute.xlu0 %702
    %v707 = vrot.slane %v696, 7
    %v708 = vsel %vm700, %v707, %v695
    %709 = vrot.lane.b32.xlu0 %v708, 64
    %v710 = vpop.permute.xlu0 %709
    %v712 = vsel %vm356, %v703, %v710
    %v713 = vpack.c.bf16 %v712, %v712
    %v715 = vrot.slane %v713, 1
    %v717 = vsel %vm196, %v715, 0
    %719 = vmatprep.subr.bf16.mxu0 %v63
    %720 = vmatpush1.bf16.msra.mxu0 %v62
    %721 = vmatprep.subr.bf16.mxu0 %v65
    %722 = vmatpush1.bf16.msra.mxu0 %v64
    %723 = vmatprep.subr.bf16.mxu0 %v67
    %724 = vmatpush1.bf16.msra.mxu0 %v66
    %725 = vmatprep.subr.bf16.mxu0 %v69
    %726 = vmatpush1.bf16.msra.mxu0 %v68
    %727 = vmatprep.subr.bf16.mxu0 0
    %728 = vmatpush1.bf16.msra.mxu0 0
    %729 = vmatprep.subr.bf16.mxu0 0
    %730 = vmatpush1.bf16.msra.mxu0 0
    %731 = vmatprep.subr.bf16.mxu0 0
    %732 = vmatpush1.bf16.msra.mxu0 0
    %733 = vmatprep.subr.bf16.mxu0 0
    %734 = vmatpush1.bf16.msra.mxu0 0
    %735 = vmatprep.subr.bf16.mxu0 0
    %736 = vmatpush1.bf16.msra.mxu0 0
    %737 = vmatprep.subr.bf16.mxu0 0
    %738 = vmatpush1.bf16.msra.mxu0 0
    %739 = vmatprep.subr.bf16.mxu0 0
    %740 = vmatpush1.bf16.msra.mxu0 0
    %741 = vmatprep.subr.bf16.mxu0 0
    %742 = vmatpush1.bf16.msra.mxu0 0
    %743 = vmatprep.subr.bf16.mxu0 0
    %744 = vmatpush1.bf16.msra.mxu0 0
    %745 = vmatprep.subr.bf16.mxu0 0
    %746 = vmatpush1.bf16.msra.mxu0 0
    %747 = vmatprep.subr.bf16.mxu0 0
    %748 = vmatpush1.bf16.msra.mxu0 0
    %749 = vmatprep.subr.bf16.mxu0 0
    %750 = vmatpush1.bf16.msra.mxu0 0
    %751 = vmatprep.mubr.bf16.mxu0 0
    %752 = vmatmul.mubr.bf16.gmra.mrb[0].mxu0 %v717
    %v753 = vpop.f32.mrb[0].mxu0
    %v754 = vadd.f32 0.0, %v753
    %v755 = vpop.f32.mrb[0].mxu0
    %v756 = vadd.f32 0.0, %v755
    %v757 = vpop.f32.mrb[0].mxu0
    %v758 = vpop.f32.mrb[0].mxu0
    %759 = vdwg.mxu0
    %v761 = vrot.slane %v754, 5
    %v762 = vrot.slane %v754, 6
    %v765 = vadd.f32 %v116, %v761
    %v766 = vadd.f32 %v119, %v762
    %v768 = vrot.slane %v756, 5
    %v769 = vrot.slane %v756, 6
    %v772 = vadd.f32 %v190, %v768
    %v773 = vadd.f32 %v193, %v769
    %v774 = vmul.f32 %v765, 0.5
    %v775 = vmul.f32 %v766, 0.5
    %v776 = vtanh.pop %v774
    %v777 = vtanh.pop %v775
    %v778 = vadd.f32 %v776, 1.0
    %v779 = vadd.f32 %v777, 1.0
    %v780 = vmul.f32 %v778, 0.5
    %v781 = vmul.f32 %v779, 0.5
    %v782 = vtanh.pop %v765
    %v783 = vtanh.pop %v766
    %v786 = vrot.slane %v633, 7
    %v787 = vrot.slane %v634, 7
    %v790 = vmul.f32 %v780, %v786
    %v791 = vmul.f32 %v781, %v787
    %794 = vrot.lane.b32.xlu0 %v782, 64
    %v795 = vpop.permute.xlu0 %794
    %796 = vrot.lane.b32.xlu0 %v783, 64
    %v797 = vpop.permute.xlu0 %796
    %v800 = vmul.f32 %v780, %v795
    %v801 = vmul.f32 %v781, %v797
    %804 = vrot.lane.b32.xlu0 %v800, 32
    %v805 = vpop.permute.xlu0 %804
    %806 = vrot.lane.b32.xlu0 %v801, 32
    %v807 = vpop.permute.xlu0 %806
    %v810 = vadd.f32 %v790, %v805
    %v811 = vadd.f32 %v791, %v807
    %v812 = vtanh.pop %v810
    %v813 = vtanh.pop %v811
    %816 = vrot.lane.b32.xlu0 %v812, 64
    %v817 = vpop.permute.xlu0 %816
    %818 = vrot.lane.b32.xlu0 %v813, 64
    %v819 = vpop.permute.xlu0 %818
    %v822 = vmul.f32 %v780, %v817
    %v823 = vmul.f32 %v781, %v819
    %v824 = vmul.f32 %v772, 0.5
    %v825 = vmul.f32 %v773, 0.5
    %v826 = vtanh.pop %v824
    %v827 = vtanh.pop %v825
    %v828 = vadd.f32 %v826, 1.0
    %v829 = vadd.f32 %v827, 1.0
    %v830 = vmul.f32 %v828, 0.5
    %v831 = vmul.f32 %v829, 0.5
    %v832 = vtanh.pop %v772
    %v833 = vtanh.pop %v773
    %v836 = vrot.slane %v683, 7
    %v837 = vrot.slane %v684, 7
    %v840 = vmul.f32 %v830, %v836
    %v841 = vmul.f32 %v831, %v837
    %844 = vrot.lane.b32.xlu0 %v832, 64
    %v845 = vpop.permute.xlu0 %844
    %846 = vrot.lane.b32.xlu0 %v833, 64
    %v847 = vpop.permute.xlu0 %846
    %v850 = vmul.f32 %v830, %v845
    %v851 = vmul.f32 %v831, %v847
    %854 = vrot.lane.b32.xlu0 %v850, 32
    %v855 = vpop.permute.xlu0 %854
    %856 = vrot.lane.b32.xlu0 %v851, 32
    %v857 = vpop.permute.xlu0 %856
    %v860 = vadd.f32 %v840, %v855
    %v861 = vadd.f32 %v841, %v857
    %v862 = vtanh.pop %v860
    %v863 = vtanh.pop %v861
    %866 = vrot.lane.b32.xlu0 %v862, 64
    %v867 = vpop.permute.xlu0 %866
    %868 = vrot.lane.b32.xlu0 %v863, 64
    %v869 = vpop.permute.xlu0 %868
    %v872 = vmul.f32 %v830, %v867
    %v873 = vmul.f32 %v831, %v869
    %v876 = vrot.slane %v823, 7
    %vm877 = vcmask 1044484
    %v878 = vsel %vm877, %v876, %v822
    %879 = vrot.lane.b32.xlu0 %v878, 32
    %v880 = vpop.permute.xlu0 %879
    %v884 = vrot.slane %v873, 7
    %v885 = vsel %vm877, %v884, %v872
    %886 = vrot.lane.b32.xlu0 %v885, 64
    %v887 = vpop.permute.xlu0 %886
    %v889 = vsel %vm356, %v880, %v887
    %v890 = vpack.c.bf16 %v889, %v889
    %v892 = vshrl.u32 %v890, 16
    %v894 = vrot.slane %v892, 1
    %v895 = vshll.u32 %v890, 16
    %v897 = vrot.slane %v895, 2
    %v898 = vor.u32 %v894, %v897
    %v900 = vsel %vm196, %v898, 0
    %902 = vmatprep.subr.bf16.mxu0 %v63
    %903 = vmatpush1.bf16.msra.mxu0 %v62
    %904 = vmatprep.subr.bf16.mxu0 %v65
    %905 = vmatpush1.bf16.msra.mxu0 %v64
    %906 = vmatprep.subr.bf16.mxu0 %v67
    %907 = vmatpush1.bf16.msra.mxu0 %v66
    %908 = vmatprep.subr.bf16.mxu0 %v69
    %909 = vmatpush1.bf16.msra.mxu0 %v68
    %910 = vmatprep.subr.bf16.mxu0 0
    %911 = vmatpush1.bf16.msra.mxu0 0
    %912 = vmatprep.subr.bf16.mxu0 0
    %913 = vmatpush1.bf16.msra.mxu0 0
    %914 = vmatprep.subr.bf16.mxu0 0
    %915 = vmatpush1.bf16.msra.mxu0 0
    %916 = vmatprep.subr.bf16.mxu0 0
    %917 = vmatpush1.bf16.msra.mxu0 0
    %918 = vmatprep.subr.bf16.mxu0 0
    %919 = vmatpush1.bf16.msra.mxu0 0
    %920 = vmatprep.subr.bf16.mxu0 0
    %921 = vmatpush1.bf16.msra.mxu0 0
    %922 = vmatprep.subr.bf16.mxu0 0
    %923 = vmatpush1.bf16.msra.mxu0 0
    %924 = vmatprep.subr.bf16.mxu0 0
    %925 = vmatpush1.bf16.msra.mxu0 0
    %926 = vmatprep.subr.bf16.mxu0 0
    %927 = vmatpush1.bf16.msra.mxu0 0
    %928 = vmatprep.subr.bf16.mxu0 0
    %929 = vmatpush1.bf16.msra.mxu0 0
    %930 = vmatprep.subr.bf16.mxu0 0
    %931 = vmatpush1.bf16.msra.mxu0 0
    %932 = vmatprep.subr.bf16.mxu0 0
    %933 = vmatpush1.bf16.msra.mxu0 0
    %934 = vmatprep.mubr.bf16.mxu0 0
    %935 = vmatmul.mubr.bf16.gmra.mrb[0].mxu0 %v900
    %v936 = vpop.f32.mrb[0].mxu0
    %v937 = vadd.f32 0.0, %v936
    %v938 = vpop.f32.mrb[0].mxu0
    %v939 = vadd.f32 0.0, %v938
    %v940 = vpop.f32.mrb[0].mxu0
    %v941 = vpop.f32.mrb[0].mxu0
    %942 = vdwg.mxu0
    %v944 = vrot.slane %v937, 4
    %v945 = vrot.slane %v937, 5
    %v948 = vadd.f32 %v116, %v944
    %v949 = vadd.f32 %v119, %v945
    %v951 = vrot.slane %v939, 4
    %v952 = vrot.slane %v939, 5
    %v955 = vadd.f32 %v190, %v951
    %v956 = vadd.f32 %v193, %v952
    %v957 = vmul.f32 %v948, 0.5
    %v958 = vmul.f32 %v949, 0.5
    %v959 = vtanh.pop %v957
    %v960 = vtanh.pop %v958
    %v961 = vadd.f32 %v959, 1.0
    %v962 = vadd.f32 %v960, 1.0
    %v963 = vmul.f32 %v961, 0.5
    %v964 = vmul.f32 %v962, 0.5
    %v965 = vtanh.pop %v948
    %v966 = vtanh.pop %v949
    %v969 = vrot.slane %v810, 7
    %v970 = vrot.slane %v811, 7
    %v973 = vmul.f32 %v963, %v969
    %v974 = vmul.f32 %v964, %v970
    %977 = vrot.lane.b32.xlu0 %v965, 64
    %v978 = vpop.permute.xlu0 %977
    %979 = vrot.lane.b32.xlu0 %v966, 64
    %v980 = vpop.permute.xlu0 %979
    %v983 = vmul.f32 %v963, %v978
    %v984 = vmul.f32 %v964, %v980
    %987 = vrot.lane.b32.xlu0 %v983, 32
    %v988 = vpop.permute.xlu0 %987
    %989 = vrot.lane.b32.xlu0 %v984, 32
    %v990 = vpop.permute.xlu0 %989
    %v993 = vadd.f32 %v973, %v988
    %v994 = vadd.f32 %v974, %v990
    %v995 = vtanh.pop %v993
    %v996 = vtanh.pop %v994
    %999 = vrot.lane.b32.xlu0 %v995, 64
    %v1000 = vpop.permute.xlu0 %999
    %1001 = vrot.lane.b32.xlu0 %v996, 64
    %v1002 = vpop.permute.xlu0 %1001
    %v1005 = vmul.f32 %v963, %v1000
    %v1006 = vmul.f32 %v964, %v1002
    %v1007 = vmul.f32 %v955, 0.5
    %v1008 = vmul.f32 %v956, 0.5
    %v1009 = vtanh.pop %v1007
    %v1010 = vtanh.pop %v1008
    %v1011 = vadd.f32 %v1009, 1.0
    %v1012 = vadd.f32 %v1010, 1.0
    %v1013 = vmul.f32 %v1011, 0.5
    %v1014 = vmul.f32 %v1012, 0.5
    %v1015 = vtanh.pop %v955
    %v1016 = vtanh.pop %v956
    %v1019 = vrot.slane %v860, 7
    %v1020 = vrot.slane %v861, 7
    %v1023 = vmul.f32 %v1013, %v1019
    %v1024 = vmul.f32 %v1014, %v1020
    %1027 = vrot.lane.b32.xlu0 %v1015, 64
    %v1028 = vpop.permute.xlu0 %1027
    %1029 = vrot.lane.b32.xlu0 %v1016, 64
    %v1030 = vpop.permute.xlu0 %1029
    %v1033 = vmul.f32 %v1013, %v1028
    %v1034 = vmul.f32 %v1014, %v1030
    %1037 = vrot.lane.b32.xlu0 %v1033, 32
    %v1038 = vpop.permute.xlu0 %1037
    %1039 = vrot.lane.b32.xlu0 %v1034, 32
    %v1040 = vpop.permute.xlu0 %1039
    %v1043 = vadd.f32 %v1023, %v1038
    %v1044 = vadd.f32 %v1024, %v1040
    %v1045 = vtanh.pop %v1043
    %v1046 = vtanh.pop %v1044
    %1049 = vrot.lane.b32.xlu0 %v1045, 64
    %v1050 = vpop.permute.xlu0 %1049
    %1051 = vrot.lane.b32.xlu0 %v1046, 64
    %v1052 = vpop.permute.xlu0 %1051
    %v1055 = vmul.f32 %v1013, %v1050
    %v1056 = vmul.f32 %v1014, %v1052
    %v1059 = vrot.slane %v1006, 7
    %vm1060 = vcmask 1045509
    %v1061 = vsel %vm1060, %v1059, %v1005
    %1062 = vrot.lane.b32.xlu0 %v1061, 32
    %v1063 = vpop.permute.xlu0 %1062
    %v1067 = vrot.slane %v1056, 7
    %v1068 = vsel %vm1060, %v1067, %v1055
    %1069 = vrot.lane.b32.xlu0 %v1068, 64
    %v1070 = vpop.permute.xlu0 %1069
    %v1072 = vsel %vm356, %v1063, %v1070
    %v1073 = vpack.c.bf16 %v1072, %v1072
    %v1075 = vrot.slane %v1073, 2
    %v1077 = vsel %vm196, %v1075, 0
    %1079 = vmatprep.subr.bf16.mxu0 %v63
    %1080 = vmatpush1.bf16.msra.mxu0 %v62
    %1081 = vmatprep.subr.bf16.mxu0 %v65
    %1082 = vmatpush1.bf16.msra.mxu0 %v64
    %1083 = vmatprep.subr.bf16.mxu0 %v67
    %1084 = vmatpush1.bf16.msra.mxu0 %v66
    %1085 = vmatprep.subr.bf16.mxu0 %v69
    %1086 = vmatpush1.bf16.msra.mxu0 %v68
    %1087 = vmatprep.subr.bf16.mxu0 0
    %1088 = vmatpush1.bf16.msra.mxu0 0
    %1089 = vmatprep.subr.bf16.mxu0 0
    %1090 = vmatpush1.bf16.msra.mxu0 0
    %1091 = vmatprep.subr.bf16.mxu0 0
    %1092 = vmatpush1.bf16.msra.mxu0 0
    %1093 = vmatprep.subr.bf16.mxu0 0
    %1094 = vmatpush1.bf16.msra.mxu0 0
    %1095 = vmatprep.subr.bf16.mxu0 0
    %1096 = vmatpush1.bf16.msra.mxu0 0
    %1097 = vmatprep.subr.bf16.mxu0 0
    %1098 = vmatpush1.bf16.msra.mxu0 0
    %1099 = vmatprep.subr.bf16.mxu0 0
    %1100 = vmatpush1.bf16.msra.mxu0 0
    %1101 = vmatprep.subr.bf16.mxu0 0
    %1102 = vmatpush1.bf16.msra.mxu0 0
    %1103 = vmatprep.subr.bf16.mxu0 0
    %1104 = vmatpush1.bf16.msra.mxu0 0
    %1105 = vmatprep.subr.bf16.mxu0 0
    %1106 = vmatpush1.bf16.msra.mxu0 0
    %1107 = vmatprep.subr.bf16.mxu0 0
    %1108 = vmatpush1.bf16.msra.mxu0 0
    %1109 = vmatprep.subr.bf16.mxu0 0
    %1110 = vmatpush1.bf16.msra.mxu0 0
    %1111 = vmatprep.mubr.bf16.mxu0 0
    %1112 = vmatmul.mubr.bf16.gmra.mrb[0].mxu0 %v1077
    %v1113 = vpop.f32.mrb[0].mxu0
    %v1114 = vadd.f32 0.0, %v1113
    %v1115 = vpop.f32.mrb[0].mxu0
    %v1116 = vadd.f32 0.0, %v1115
    %v1117 = vpop.f32.mrb[0].mxu0
    %v1118 = vpop.f32.mrb[0].mxu0
    %1119 = vdwg.mxu0
    %v1121 = vrot.slane %v1114, 3
    %v1122 = vrot.slane %v1114, 4
    %v1125 = vadd.f32 %v116, %v1121
    %v1126 = vadd.f32 %v119, %v1122
    %v1128 = vrot.slane %v1116, 3
    %v1129 = vrot.slane %v1116, 4
    %v1132 = vadd.f32 %v190, %v1128
    %v1133 = vadd.f32 %v193, %v1129
    %v1134 = vmul.f32 %v1125, 0.5
    %v1135 = vmul.f32 %v1126, 0.5
    %v1136 = vtanh.pop %v1134
    %v1137 = vtanh.pop %v1135
    %v1138 = vadd.f32 %v1136, 1.0
    %v1139 = vadd.f32 %v1137, 1.0
    %v1140 = vmul.f32 %v1138, 0.5
    %v1141 = vmul.f32 %v1139, 0.5
    %v1142 = vtanh.pop %v1125
    %v1143 = vtanh.pop %v1126
    %v1146 = vrot.slane %v993, 7
    %v1147 = vrot.slane %v994, 7
    %v1150 = vmul.f32 %v1140, %v1146
    %v1151 = vmul.f32 %v1141, %v1147
    %1154 = vrot.lane.b32.xlu0 %v1142, 64
    %v1155 = vpop.permute.xlu0 %1154
    %1156 = vrot.lane.b32.xlu0 %v1143, 64
    %v1157 = vpop.permute.xlu0 %1156
    %v1160 = vmul.f32 %v1140, %v1155
    %v1161 = vmul.f32 %v1141, %v1157
    %1164 = vrot.lane.b32.xlu0 %v1160, 32
    %v1165 = vpop.permute.xlu0 %1164
    %1166 = vrot.lane.b32.xlu0 %v1161, 32
    %v1167 = vpop.permute.xlu0 %1166
    %v1170 = vadd.f32 %v1150, %v1165
    %v1171 = vadd.f32 %v1151, %v1167
    %v1172 = vtanh.pop %v1170
    %v1173 = vtanh.pop %v1171
    %1176 = vrot.lane.b32.xlu0 %v1172, 64
    %v1177 = vpop.permute.xlu0 %1176
    %1178 = vrot.lane.b32.xlu0 %v1173, 64
    %v1179 = vpop.permute.xlu0 %1178
    %v1182 = vmul.f32 %v1140, %v1177
    %v1183 = vmul.f32 %v1141, %v1179
    %v1184 = vmul.f32 %v1132, 0.5
    %v1185 = vmul.f32 %v1133, 0.5
    %v1186 = vtanh.pop %v1184
    %v1187 = vtanh.pop %v1185
    %v1188 = vadd.f32 %v1186, 1.0
    %v1189 = vadd.f32 %v1187, 1.0
    %v1190 = vmul.f32 %v1188, 0.5
    %v1191 = vmul.f32 %v1189, 0.5
    %v1192 = vtanh.pop %v1132
    %v1193 = vtanh.pop %v1133
    %v1196 = vrot.slane %v1043, 7
    %v1197 = vrot.slane %v1044, 7
    %v1200 = vmul.f32 %v1190, %v1196
    %v1201 = vmul.f32 %v1191, %v1197
    %1204 = vrot.lane.b32.xlu0 %v1192, 64
    %v1205 = vpop.permute.xlu0 %1204
    %1206 = vrot.lane.b32.xlu0 %v1193, 64
    %v1207 = vpop.permute.xlu0 %1206
    %v1210 = vmul.f32 %v1190, %v1205
    %v1211 = vmul.f32 %v1191, %v1207
    %1214 = vrot.lane.b32.xlu0 %v1210, 32
    %v1215 = vpop.permute.xlu0 %1214
    %1216 = vrot.lane.b32.xlu0 %v1211, 32
    %v1217 = vpop.permute.xlu0 %1216
    %v1220 = vadd.f32 %v1200, %v1215
    %v1221 = vadd.f32 %v1201, %v1217
    %v1222 = vtanh.pop %v1220
    %v1223 = vtanh.pop %v1221
    %1226 = vrot.lane.b32.xlu0 %v1222, 64
    %v1227 = vpop.permute.xlu0 %1226
    %1228 = vrot.lane.b32.xlu0 %v1223, 64
    %v1229 = vpop.permute.xlu0 %1228
    %v1232 = vmul.f32 %v1190, %v1227
    %v1233 = vmul.f32 %v1191, %v1229
    %v1236 = vrot.slane %v1183, 7
    %vm1237 = vcmask 1046534
    %v1238 = vsel %vm1237, %v1236, %v1182
    %1239 = vrot.lane.b32.xlu0 %v1238, 32
    %v1240 = vpop.permute.xlu0 %1239
    %v1244 = vrot.slane %v1233, 7
    %v1245 = vsel %vm1237, %v1244, %v1232
    %1246 = vrot.lane.b32.xlu0 %v1245, 64
    %v1247 = vpop.permute.xlu0 %1246
    %v1249 = vsel %vm356, %v1240, %v1247
    %v1250 = vpack.c.bf16 %v1249, %v1249
    %v1252 = vshrl.u32 %v1250, 16
    %v1254 = vrot.slane %v1252, 2
    %v1255 = vshll.u32 %v1250, 16
    %v1257 = vrot.slane %v1255, 3
    %v1258 = vor.u32 %v1254, %v1257
    %v1260 = vsel %vm196, %v1258, 0
    %1262 = vmatprep.subr.bf16.mxu0 %v63
    %1263 = vmatpush1.bf16.msra.mxu0 %v62
    %1264 = vmatprep.subr.bf16.mxu0 %v65
    %1265 = vmatpush1.bf16.msra.mxu0 %v64
    %1266 = vmatprep.subr.bf16.mxu0 %v67
    %1267 = vmatpush1.bf16.msra.mxu0 %v66
    %1268 = vmatprep.subr.bf16.mxu0 %v69
    %1269 = vmatpush1.bf16.msra.mxu0 %v68
    %1270 = vmatprep.subr.bf16.mxu0 0
    %1271 = vmatpush1.bf16.msra.mxu0 0
    %1272 = vmatprep.subr.bf16.mxu0 0
    %1273 = vmatpush1.bf16.msra.mxu0 0
    %1274 = vmatprep.subr.bf16.mxu0 0
    %1275 = vmatpush1.bf16.msra.mxu0 0
    %1276 = vmatprep.subr.bf16.mxu0 0
    %1277 = vmatpush1.bf16.msra.mxu0 0
    %1278 = vmatprep.subr.bf16.mxu0 0
    %1279 = vmatpush1.bf16.msra.mxu0 0
    %1280 = vmatprep.subr.bf16.mxu0 0
    %1281 = vmatpush1.bf16.msra.mxu0 0
    %1282 = vmatprep.subr.bf16.mxu0 0
    %1283 = vmatpush1.bf16.msra.mxu0 0
    %1284 = vmatprep.subr.bf16.mxu0 0
    %1285 = vmatpush1.bf16.msra.mxu0 0
    %1286 = vmatprep.subr.bf16.mxu0 0
    %1287 = vmatpush1.bf16.msra.mxu0 0
    %1288 = vmatprep.subr.bf16.mxu0 0
    %1289 = vmatpush1.bf16.msra.mxu0 0
    %1290 = vmatprep.subr.bf16.mxu0 0
    %1291 = vmatpush1.bf16.msra.mxu0 0
    %1292 = vmatprep.subr.bf16.mxu0 0
    %1293 = vmatpush1.bf16.msra.mxu0 0
    %1294 = vmatprep.mubr.bf16.mxu0 0
    %1295 = vmatmul.mubr.bf16.gmra.mrb[0].mxu0 %v1260
    %v1296 = vpop.f32.mrb[0].mxu0
    %v1297 = vadd.f32 0.0, %v1296
    %v1298 = vpop.f32.mrb[0].mxu0
    %v1299 = vadd.f32 0.0, %v1298
    %v1300 = vpop.f32.mrb[0].mxu0
    %v1301 = vpop.f32.mrb[0].mxu0
    %1302 = vdwg.mxu0
    %v1304 = vrot.slane %v1297, 2
    %v1305 = vrot.slane %v1297, 3
    %v1308 = vadd.f32 %v116, %v1304
    %v1309 = vadd.f32 %v119, %v1305
    %v1311 = vrot.slane %v1299, 2
    %v1312 = vrot.slane %v1299, 3
    %v1315 = vadd.f32 %v190, %v1311
    %v1316 = vadd.f32 %v193, %v1312
    %v1317 = vmul.f32 %v1308, 0.5
    %v1318 = vmul.f32 %v1309, 0.5
    %v1319 = vtanh.pop %v1317
    %v1320 = vtanh.pop %v1318
    %v1321 = vadd.f32 %v1319, 1.0
    %v1322 = vadd.f32 %v1320, 1.0
    %v1323 = vmul.f32 %v1321, 0.5
    %v1324 = vmul.f32 %v1322, 0.5
    %v1325 = vtanh.pop %v1308
    %v1326 = vtanh.pop %v1309
    %v1329 = vrot.slane %v1170, 7
    %v1330 = vrot.slane %v1171, 7
    %v1333 = vmul.f32 %v1323, %v1329
    %v1334 = vmul.f32 %v1324, %v1330
    %1337 = vrot.lane.b32.xlu0 %v1325, 64
    %v1338 = vpop.permute.xlu0 %1337
    %1339 = vrot.lane.b32.xlu0 %v1326, 64
    %v1340 = vpop.permute.xlu0 %1339
    %v1343 = vmul.f32 %v1323, %v1338
    %v1344 = vmul.f32 %v1324, %v1340
    %1347 = vrot.lane.b32.xlu0 %v1343, 32
    %v1348 = vpop.permute.xlu0 %1347
    %1349 = vrot.lane.b32.xlu0 %v1344, 32
    %v1350 = vpop.permute.xlu0 %1349
    %v1353 = vadd.f32 %v1333, %v1348
    %v1354 = vadd.f32 %v1334, %v1350
    %v1355 = vtanh.pop %v1353
    %v1356 = vtanh.pop %v1354
    %1359 = vrot.lane.b32.xlu0 %v1355, 64
    %v1360 = vpop.permute.xlu0 %1359
    %1361 = vrot.lane.b32.xlu0 %v1356, 64
    %v1362 = vpop.permute.xlu0 %1361
    %v1365 = vmul.f32 %v1323, %v1360
    %v1366 = vmul.f32 %v1324, %v1362
    %v1367 = vmul.f32 %v1315, 0.5
    %v1368 = vmul.f32 %v1316, 0.5
    %v1369 = vtanh.pop %v1367
    %v1370 = vtanh.pop %v1368
    %v1371 = vadd.f32 %v1369, 1.0
    %v1372 = vadd.f32 %v1370, 1.0
    %v1373 = vmul.f32 %v1371, 0.5
    %v1374 = vmul.f32 %v1372, 0.5
    %v1375 = vtanh.pop %v1315
    %v1376 = vtanh.pop %v1316
    %v1379 = vrot.slane %v1220, 7
    %v1380 = vrot.slane %v1221, 7
    %v1383 = vmul.f32 %v1373, %v1379
    %v1384 = vmul.f32 %v1374, %v1380
    %1387 = vrot.lane.b32.xlu0 %v1375, 64
    %v1388 = vpop.permute.xlu0 %1387
    %1389 = vrot.lane.b32.xlu0 %v1376, 64
    %v1390 = vpop.permute.xlu0 %1389
    %v1393 = vmul.f32 %v1373, %v1388
    %v1394 = vmul.f32 %v1374, %v1390
    %1397 = vrot.lane.b32.xlu0 %v1393, 32
    %v1398 = vpop.permute.xlu0 %1397
    %1399 = vrot.lane.b32.xlu0 %v1394, 32
    %v1400 = vpop.permute.xlu0 %1399
    %v1403 = vadd.f32 %v1383, %v1398
    %v1404 = vadd.f32 %v1384, %v1400
    %v1405 = vtanh.pop %v1403
    %v1406 = vtanh.pop %v1404
    %1409 = vrot.lane.b32.xlu0 %v1405, 64
    %v1410 = vpop.permute.xlu0 %1409
    %1411 = vrot.lane.b32.xlu0 %v1406, 64
    %v1412 = vpop.permute.xlu0 %1411
    %v1415 = vmul.f32 %v1373, %v1410
    %v1416 = vmul.f32 %v1374, %v1412
    %v1419 = vrot.slane %v1366, 7
    %vm1420 = vcmask 1047559
    %v1421 = vsel %vm1420, %v1419, %v1365
    %1422 = vrot.lane.b32.xlu0 %v1421, 32
    %v1423 = vpop.permute.xlu0 %1422
    %v1427 = vrot.slane %v1416, 7
    %v1428 = vsel %vm1420, %v1427, %v1415
    %1429 = vrot.lane.b32.xlu0 %v1428, 64
    %v1430 = vpop.permute.xlu0 %1429
    %v1432 = vsel %vm356, %v1423, %v1430
    %v1433 = vpack.c.bf16 %v1432, %v1432
    %v1435 = vrot.slane %v1433, 3
    %v1437 = vsel %vm196, %v1435, 0
    %1439 = vmatprep.subr.bf16.mxu0 %v63
    %1440 = vmatpush1.bf16.msra.mxu0 %v62
    %1441 = vmatprep.subr.bf16.mxu0 %v65
    %1442 = vmatpush1.bf16.msra.mxu0 %v64
    %1443 = vmatprep.subr.bf16.mxu0 %v67
    %1444 = vmatpush1.bf16.msra.mxu0 %v66
    %1445 = vmatprep.subr.bf16.mxu0 %v69
    %1446 = vmatpush1.bf16.msra.mxu0 %v68
    %1447 = vmatprep.subr.bf16.mxu0 0
    %1448 = vmatpush1.bf16.msra.mxu0 0
    %1449 = vmatprep.subr.bf16.mxu0 0
    %1450 = vmatpush1.bf16.msra.mxu0 0
    %1451 = vmatprep.subr.bf16.mxu0 0
    %1452 = vmatpush1.bf16.msra.mxu0 0
    %1453 = vmatprep.subr.bf16.mxu0 0
    %1454 = vmatpush1.bf16.msra.mxu0 0
    %1455 = vmatprep.subr.bf16.mxu0 0
    %1456 = vmatpush1.bf16.msra.mxu0 0
    %1457 = vmatprep.subr.bf16.mxu0 0
    %1458 = vmatpush1.bf16.msra.mxu0 0
    %1459 = vmatprep.subr.bf16.mxu0 0
    %1460 = vmatpush1.bf16.msra.mxu0 0
    %1461 = vmatprep.subr.bf16.mxu0 0
    %1462 = vmatpush1.bf16.msra.mxu0 0
    %1463 = vmatprep.subr.bf16.mxu0 0
    %1464 = vmatpush1.bf16.msra.mxu0 0
    %1465 = vmatprep.subr.bf16.mxu0 0
    %1466 = vmatpush1.bf16.msra.mxu0 0
    %1467 = vmatprep.subr.bf16.mxu0 0
    %1468 = vmatpush1.bf16.msra.mxu0 0
    %1469 = vmatprep.subr.bf16.mxu0 0
    %1470 = vmatpush1.bf16.msra.mxu0 0
    %1471 = vmatprep.mubr.bf16.mxu0 0
    %1472 = vmatmul.mubr.bf16.gmra.mrb[0].mxu0 %v1437
    %v1473 = vpop.f32.mrb[0].mxu0
    %v1474 = vadd.f32 0.0, %v1473
    %v1475 = vpop.f32.mrb[0].mxu0
    %v1476 = vadd.f32 0.0, %v1475
    %v1477 = vpop.f32.mrb[0].mxu0
    %v1478 = vpop.f32.mrb[0].mxu0
    %1479 = vdwg.mxu0
    %v1481 = vrot.slane %v1474, 1
    %v1482 = vrot.slane %v1474, 2
    %v1485 = vadd.f32 %v116, %v1481
    %v1486 = vadd.f32 %v119, %v1482
    %v1488 = vrot.slane %v1476, 1
    %v1489 = vrot.slane %v1476, 2
    %v1492 = vadd.f32 %v190, %v1488
    %v1493 = vadd.f32 %v193, %v1489
    %v1494 = vmul.f32 %v1485, 0.5
    %v1495 = vmul.f32 %v1486, 0.5
    %v1496 = vtanh.pop %v1494
    %v1497 = vtanh.pop %v1495
    %v1498 = vadd.f32 %v1496, 1.0
    %v1499 = vadd.f32 %v1497, 1.0
    %v1500 = vmul.f32 %v1498, 0.5
    %v1501 = vmul.f32 %v1499, 0.5
    %v1502 = vtanh.pop %v1485
    %v1503 = vtanh.pop %v1486
    %v1506 = vrot.slane %v1353, 7
    %v1507 = vrot.slane %v1354, 7
    %v1510 = vmul.f32 %v1500, %v1506
    %v1511 = vmul.f32 %v1501, %v1507
    %1514 = vrot.lane.b32.xlu0 %v1502, 64
    %v1515 = vpop.permute.xlu0 %1514
    %1516 = vrot.lane.b32.xlu0 %v1503, 64
    %v1517 = vpop.permute.xlu0 %1516
    %v1520 = vmul.f32 %v1500, %v1515
    %v1521 = vmul.f32 %v1501, %v1517
    %1524 = vrot.lane.b32.xlu0 %v1520, 32
    %v1525 = vpop.permute.xlu0 %1524
    %1526 = vrot.lane.b32.xlu0 %v1521, 32
    %v1527 = vpop.permute.xlu0 %1526
    %v1530 = vadd.f32 %v1510, %v1525
    %v1531 = vadd.f32 %v1511, %v1527
    %v1532 = vtanh.pop %v1530
    %v1533 = vtanh.pop %v1531
    %1536 = vrot.lane.b32.xlu0 %v1532, 64
    %v1537 = vpop.permute.xlu0 %1536
    %1538 = vrot.lane.b32.xlu0 %v1533, 64
    %v1539 = vpop.permute.xlu0 %1538
    %v1542 = vmul.f32 %v1500, %v1537
    %v1543 = vmul.f32 %v1501, %v1539
    %v1544 = vmul.f32 %v1492, 0.5
    %v1545 = vmul.f32 %v1493, 0.5
    %v1546 = vtanh.pop %v1544
    %v1547 = vtanh.pop %v1545
    %v1548 = vadd.f32 %v1546, 1.0
    %v1549 = vadd.f32 %v1547, 1.0
    %v1550 = vmul.f32 %v1548, 0.5
    %v1551 = vmul.f32 %v1549, 0.5
    %v1552 = vtanh.pop %v1492
    %v1553 = vtanh.pop %v1493
    %v1556 = vrot.slane %v1403, 7
    %v1557 = vrot.slane %v1404, 7
    %v1560 = vmul.f32 %v1550, %v1556
    %v1561 = vmul.f32 %v1551, %v1557
    %1564 = vrot.lane.b32.xlu0 %v1552, 64
    %v1565 = vpop.permute.xlu0 %1564
    %1566 = vrot.lane.b32.xlu0 %v1553, 64
    %v1567 = vpop.permute.xlu0 %1566
    %v1570 = vmul.f32 %v1550, %v1565
    %v1571 = vmul.f32 %v1551, %v1567
    %1574 = vrot.lane.b32.xlu0 %v1570, 32
    %v1575 = vpop.permute.xlu0 %1574
    %1576 = vrot.lane.b32.xlu0 %v1571, 32
    %v1577 = vpop.permute.xlu0 %1576
    %v1580 = vadd.f32 %v1560, %v1575
    %v1581 = vadd.f32 %v1561, %v1577
    %v1582 = vtanh.pop %v1580
    %v1583 = vtanh.pop %v1581
    %1586 = vrot.lane.b32.xlu0 %v1582, 64
    %v1587 = vpop.permute.xlu0 %1586
    %1588 = vrot.lane.b32.xlu0 %v1583, 64
    %v1589 = vpop.permute.xlu0 %1588
    %v1592 = vmul.f32 %v1550, %v1587
    %v1593 = vmul.f32 %v1551, %v1589
    %vm1594 = vcmask 1040384
    %v1595 = vsel %vm1594, %v295, %v463
    %v1596 = vsel %vm1594, %v296, %v464
    %vm1597 = vcmask 1041408
    %v1598 = vsel %vm1597, %v1595, %v645
    %v1599 = vsel %vm1597, %v1596, %v646
    %vm1600 = vcmask 1042432
    %v1601 = vsel %vm1600, %v1598, %v822
    %v1602 = vsel %vm1600, %v1599, %v823
    %vm1603 = vcmask 1043456
    %v1604 = vsel %vm1603, %v1601, %v1005
    %v1605 = vsel %vm1603, %v1602, %v1006
    %vm1606 = vcmask 1044480
    %v1607 = vsel %vm1606, %v1604, %v1182
    %v1608 = vsel %vm1606, %v1605, %v1183
    %vm1609 = vcmask 1045504
    %v1610 = vsel %vm1609, %v1607, %v1365
    %v1611 = vsel %vm1609, %v1608, %v1366
    %vm1612 = vcmask 1046528
    %v1613 = vsel %vm1612, %v1610, %v1542
    %v1614 = vsel %vm1612, %v1611, %v1543
    %v1615 = vsel %vm1594, %v339, %v513
    %v1616 = vsel %vm1594, %v340, %v514
    %v1617 = vsel %vm1597, %v1615, %v695
    %v1618 = vsel %vm1597, %v1616, %v696
    %v1619 = vsel %vm1600, %v1617, %v872
    %v1620 = vsel %vm1600, %v1618, %v873
    %v1621 = vsel %vm1603, %v1619, %v1055
    %v1622 = vsel %vm1603, %v1620, %v1056
    %v1623 = vsel %vm1606, %v1621, %v1232
    %v1624 = vsel %vm1606, %v1622, %v1233
    %v1625 = vsel %vm1609, %v1623, %v1415
    %v1626 = vsel %vm1609, %v1624, %v1416
    %v1627 = vsel %vm1612, %v1625, %v1592
    %v1628 = vsel %vm1612, %v1626, %v1593
    %v1629 = vpack.c.bf16 %v1614, %v1613
    %1631 = vrot.lane.b32.xlu0 %v1629, 32
    %v1632 = vpop.permute.xlu0 %1631
    %v1634 = vsel %vm356, %v1632, 0
    %1636 = vmatprep.subr.bf16.mxu0 0
    %1637 = vmatpush1.bf16.msra.mxu0 %v37
    %1638 = vmatprep.subr.bf16.mxu0 0
    %1639 = vmatpush1.bf16.msra.mxu0 %v38
    %1640 = vmatprep.subr.bf16.mxu0 0
    %1641 = vmatpush1.bf16.msra.mxu0 0
    %1642 = vmatprep.subr.bf16.mxu0 0
    %1643 = vmatpush1.bf16.msra.mxu0 0
    %1644 = vmatprep.subr.bf16.mxu0 0
    %1645 = vmatpush1.bf16.msra.mxu0 0
    %1646 = vmatprep.subr.bf16.mxu0 0
    %1647 = vmatpush1.bf16.msra.mxu0 0
    %1648 = vmatprep.subr.bf16.mxu0 0
    %1649 = vmatpush1.bf16.msra.mxu0 0
    %1650 = vmatprep.subr.bf16.mxu0 0
    %1651 = vmatpush1.bf16.msra.mxu0 0
    %1652 = vmatprep.subr.bf16.mxu0 0
    %1653 = vmatpush1.bf16.msra.mxu0 0
    %1654 = vmatprep.subr.bf16.mxu0 0
    %1655 = vmatpush1.bf16.msra.mxu0 0
    %1656 = vmatprep.subr.bf16.mxu0 0
    %1657 = vmatpush1.bf16.msra.mxu0 0
    %1658 = vmatprep.subr.bf16.mxu0 0
    %1659 = vmatpush1.bf16.msra.mxu0 0
    %1660 = vmatprep.subr.bf16.mxu0 0
    %1661 = vmatpush1.bf16.msra.mxu0 0
    %1662 = vmatprep.subr.bf16.mxu0 0
    %1663 = vmatpush1.bf16.msra.mxu0 0
    %1664 = vmatprep.subr.bf16.mxu0 0
    %1665 = vmatpush1.bf16.msra.mxu0 0
    %1666 = vmatprep.subr.bf16.mxu0 0
    %1667 = vmatpush1.bf16.msra.mxu0 0
    %1668 = vmatprep.mubr.bf16.mxu0 0
    %1669 = vmatmul.mubr.bf16.gmra.mrb[0].mxu0 %v1634
    %v1670 = vpop.f32.mrb[0].mxu0
    %v1671 = vadd.f32 0.0, %v1670
    %v1672 = vpop.f32.mrb[0].mxu0
    %v1673 = vpop.f32.mrb[0].mxu0
    %v1674 = vadd.f32 0.0, %v1673
    %v1675 = vpop.f32.mrb[0].mxu0
    %1676 = vdwg.mxu0
    %v1677 = vpack.c.bf16 %v1628, %v1627
    %1679 = vrot.lane.b32.xlu0 %v1677, 32
    %v1680 = vpop.permute.xlu0 %1679
    %v1682 = vsel %vm356, %v1680, 0
    %1684 = vmatprep.subr.bf16.mxu0 0
    %1685 = vmatpush1.bf16.msra.mxu0 %v43
    %1686 = vmatprep.subr.bf16.mxu0 0
    %1687 = vmatpush1.bf16.msra.mxu0 %v44
    %1688 = vmatprep.subr.bf16.mxu0 0
    %1689 = vmatpush1.bf16.msra.mxu0 0
    %1690 = vmatprep.subr.bf16.mxu0 0
    %1691 = vmatpush1.bf16.msra.mxu0 0
    %1692 = vmatprep.subr.bf16.mxu0 0
    %1693 = vmatpush1.bf16.msra.mxu0 0
    %1694 = vmatprep.subr.bf16.mxu0 0
    %1695 = vmatpush1.bf16.msra.mxu0 0
    %1696 = vmatprep.subr.bf16.mxu0 0
    %1697 = vmatpush1.bf16.msra.mxu0 0
    %1698 = vmatprep.subr.bf16.mxu0 0
    %1699 = vmatpush1.bf16.msra.mxu0 0
    %1700 = vmatprep.subr.bf16.mxu0 0
    %1701 = vmatpush1.bf16.msra.mxu0 0
    %1702 = vmatprep.subr.bf16.mxu0 0
    %1703 = vmatpush1.bf16.msra.mxu0 0
    %1704 = vmatprep.subr.bf16.mxu0 0
    %1705 = vmatpush1.bf16.msra.mxu0 0
    %1706 = vmatprep.subr.bf16.mxu0 0
    %1707 = vmatpush1.bf16.msra.mxu0 0
    %1708 = vmatprep.subr.bf16.mxu0 0
    %1709 = vmatpush1.bf16.msra.mxu0 0
    %1710 = vmatprep.subr.bf16.mxu0 0
    %1711 = vmatpush1.bf16.msra.mxu0 0
    %1712 = vmatprep.subr.bf16.mxu0 0
    %1713 = vmatpush1.bf16.msra.mxu0 0
    %1714 = vmatprep.subr.bf16.mxu0 0
    %1715 = vmatpush1.bf16.msra.mxu0 0
    %1716 = vmatprep.mubr.bf16.mxu0 0
    %1717 = vmatmul.mubr.bf16.gmra.mrb[0].mxu0 %v1682
    %v1718 = vpop.f32.mrb[0].mxu0
    %v1719 = vadd.f32 0.0, %v1718
    %v1720 = vpop.f32.mrb[0].mxu0
    %v1721 = vpop.f32.mrb[0].mxu0
    %v1722 = vadd.f32 0.0, %v1721
    %v1723 = vpop.f32.mrb[0].mxu0
    %1724 = vdwg.mxu0
    %v1726 = vcombine.high %v1671, %v1671
    %v1728 = vunpack.c.l.s4 1966171168
    %v1729 = vunpack.c.0.s8 %v1728
    %v1730 = vlaneseq
    %v1731 = vshrl.u32 %v1730, 7
    %v1732 = vsub.s32 %v1729, %v1731
    %v1733 = vrot.slane %v1671, %v1732
    %v1735 = vunpack.c.l.s4 1966171168
    %v1736 = vunpack.c.0.s8 %v1735
    %v1737 = vlaneseq
    %v1738 = vshrl.u32 %v1737, 7
    %v1739 = vsub.s32 %v1736, %v1738
    %v1740 = vrot.slane %v1726, %v1739
    %v1741 = vcombine.high %v1733, %v1733
    %v1742 = vcombine.high %v1740, %v1740
    %v1744 = vunpack.c.l.s4 1966171168
    %v1745 = vunpack.c.0.s8 %v1744
    %v1746 = vlaneseq
    %v1747 = vshrl.u32 %v1746, 7
    %v1748 = vsub.s32 %v1745, %v1747
    %v1749 = vrot.slane %v1733, %v1748
    %v1751 = vunpack.c.l.s4 1966171168
    %v1752 = vunpack.c.0.s8 %v1751
    %v1753 = vlaneseq
    %v1754 = vshrl.u32 %v1753, 7
    %v1755 = vsub.s32 %v1752, %v1754
    %v1756 = vrot.slane %v1740, %v1755
    %v1758 = vunpack.c.l.s4 1966171168
    %v1759 = vunpack.c.0.s8 %v1758
    %v1760 = vlaneseq
    %v1761 = vshrl.u32 %v1760, 7
    %v1762 = vsub.s32 %v1759, %v1761
    %v1763 = vrot.slane %v1741, %v1762
    %v1765 = vunpack.c.l.s4 1966171168
    %v1766 = vunpack.c.0.s8 %v1765
    %v1767 = vlaneseq
    %v1768 = vshrl.u32 %v1767, 7
    %v1769 = vsub.s32 %v1766, %v1768
    %v1770 = vrot.slane %v1742, %v1769
    %v1771 = vcombine.high %v1749, %v1749
    %v1772 = vcombine.high %v1756, %v1756
    %v1773 = vcombine.high %v1763, %v1763
    %v1774 = vcombine.high %v1770, %v1770
    %v1775 = vlaneseq
    %v1776 = vshrl.u32 %v1775, 7
    %v1777 = vsub.s32 0, %v1776
    %v1778 = vrot.slane %v1749, %v1777
    %v1779 = vlaneseq
    %v1780 = vshrl.u32 %v1779, 7
    %v1781 = vsub.s32 0, %v1780
    %v1782 = vrot.slane %v1763, %v1781
    %v1783 = vlaneseq
    %v1784 = vshrl.u32 %v1783, 7
    %v1785 = vsub.s32 0, %v1784
    %v1786 = vrot.slane %v1771, %v1785
    %v1787 = vlaneseq
    %v1788 = vshrl.u32 %v1787, 7
    %v1789 = vsub.s32 0, %v1788
    %v1790 = vrot.slane %v1773, %v1789
    %v1791 = vlaneseq
    %v1792 = vshrl.u32 %v1791, 7
    %v1793 = vsub.s32 0, %v1792
    %v1794 = vrot.slane %v1756, %v1793
    %v1795 = vlaneseq
    %v1796 = vshrl.u32 %v1795, 7
    %v1797 = vsub.s32 0, %v1796
    %v1798 = vrot.slane %v1770, %v1797
    %v1799 = vlaneseq
    %v1800 = vshrl.u32 %v1799, 7
    %v1801 = vsub.s32 0, %v1800
    %v1802 = vrot.slane %v1772, %v1801
    %v1803 = vlaneseq
    %v1804 = vshrl.u32 %v1803, 7
    %v1805 = vsub.s32 0, %v1804
    %v1806 = vrot.slane %v1774, %v1805
    %v1815 = vadd.f32 %v1778, %v1719
    %v1816 = vadd.f32 %v1782, %v1719
    %v1817 = vadd.f32 %v1786, %v1719
    %v1818 = vadd.f32 %v1790, %v1719
    %v1819 = vadd.f32 %v1794, %v1719
    %v1820 = vadd.f32 %v1798, %v1719
    %v1821 = vadd.f32 %v1802, %v1719
    %v1822 = vadd.f32 %v1806, %v1719
    %v1823 = vlaneseq
    %v1824 = vshrl.u32 %v1823, 7
    %v1825 = vsub.s32 0, %v1824
    %v1826 = vrot.slane %v45, %v1825
    %v1827 = vadd.f32 %v1815, %v1826
    %v1828 = vadd.f32 %v1816, %v1826
    %v1829 = vadd.f32 %v1817, %v1826
    %v1830 = vadd.f32 %v1818, %v1826
    %v1831 = vadd.f32 %v1819, %v1826
    %v1832 = vadd.f32 %v1820, %v1826
    %v1833 = vadd.f32 %v1821, %v1826
    %v1834 = vadd.f32 %v1822, %v1826
    %v1835 = vtanh.pop %v1827
    %v1836 = vtanh.pop %v1828
    %v1837 = vtanh.pop %v1829
    %v1838 = vtanh.pop %v1830
    %v1839 = vtanh.pop %v1831
    %v1840 = vtanh.pop %v1832
    %v1841 = vtanh.pop %v1833
    %v1842 = vtanh.pop %v1834
    %v1844 = vcombine.high %v1674, %v1674
    %v1846 = vunpack.c.l.s4 1966171168
    %v1847 = vunpack.c.0.s8 %v1846
    %v1848 = vlaneseq
    %v1849 = vshrl.u32 %v1848, 7
    %v1850 = vsub.s32 %v1847, %v1849
    %v1851 = vrot.slane %v1674, %v1850
    %v1853 = vunpack.c.l.s4 1966171168
    %v1854 = vunpack.c.0.s8 %v1853
    %v1855 = vlaneseq
    %v1856 = vshrl.u32 %v1855, 7
    %v1857 = vsub.s32 %v1854, %v1856
    %v1858 = vrot.slane %v1844, %v1857
    %v1859 = vcombine.high %v1851, %v1851
    %v1860 = vcombine.high %v1858, %v1858
    %v1862 = vunpack.c.l.s4 1966171168
    %v1863 = vunpack.c.0.s8 %v1862
    %v1864 = vlaneseq
    %v1865 = vshrl.u32 %v1864, 7
    %v1866 = vsub.s32 %v1863, %v1865
    %v1867 = vrot.slane %v1851, %v1866
    %v1869 = vunpack.c.l.s4 1966171168
    %v1870 = vunpack.c.0.s8 %v1869
    %v1871 = vlaneseq
    %v1872 = vshrl.u32 %v1871, 7
    %v1873 = vsub.s32 %v1870, %v1872
    %v1874 = vrot.slane %v1858, %v1873
    %v1876 = vunpack.c.l.s4 1966171168
    %v1877 = vunpack.c.0.s8 %v1876
    %v1878 = vlaneseq
    %v1879 = vshrl.u32 %v1878, 7
    %v1880 = vsub.s32 %v1877, %v1879
    %v1881 = vrot.slane %v1859, %v1880
    %v1883 = vunpack.c.l.s4 1966171168
    %v1884 = vunpack.c.0.s8 %v1883
    %v1885 = vlaneseq
    %v1886 = vshrl.u32 %v1885, 7
    %v1887 = vsub.s32 %v1884, %v1886
    %v1888 = vrot.slane %v1860, %v1887
    %v1889 = vcombine.high %v1867, %v1867
    %v1890 = vcombine.high %v1874, %v1874
    %v1891 = vcombine.high %v1881, %v1881
    %v1892 = vcombine.high %v1888, %v1888
    %v1893 = vlaneseq
    %v1894 = vshrl.u32 %v1893, 7
    %v1895 = vsub.s32 0, %v1894
    %v1896 = vrot.slane %v1867, %v1895
    %v1897 = vlaneseq
    %v1898 = vshrl.u32 %v1897, 7
    %v1899 = vsub.s32 0, %v1898
    %v1900 = vrot.slane %v1881, %v1899
    %v1901 = vlaneseq
    %v1902 = vshrl.u32 %v1901, 7
    %v1903 = vsub.s32 0, %v1902
    %v1904 = vrot.slane %v1889, %v1903
    %v1905 = vlaneseq
    %v1906 = vshrl.u32 %v1905, 7
    %v1907 = vsub.s32 0, %v1906
    %v1908 = vrot.slane %v1891, %v1907
    %v1909 = vlaneseq
    %v1910 = vshrl.u32 %v1909, 7
    %v1911 = vsub.s32 0, %v1910
    %v1912 = vrot.slane %v1874, %v1911
    %v1913 = vlaneseq
    %v1914 = vshrl.u32 %v1913, 7
    %v1915 = vsub.s32 0, %v1914
    %v1916 = vrot.slane %v1888, %v1915
    %v1917 = vlaneseq
    %v1918 = vshrl.u32 %v1917, 7
    %v1919 = vsub.s32 0, %v1918
    %v1920 = vrot.slane %v1890, %v1919
    %v1921 = vlaneseq
    %v1922 = vshrl.u32 %v1921, 7
    %v1923 = vsub.s32 0, %v1922
    %v1924 = vrot.slane %v1892, %v1923
    %v1933 = vadd.f32 %v1896, %v1722
    %v1934 = vadd.f32 %v1900, %v1722
    %v1935 = vadd.f32 %v1904, %v1722
    %v1936 = vadd.f32 %v1908, %v1722
    %v1937 = vadd.f32 %v1912, %v1722
    %v1938 = vadd.f32 %v1916, %v1722
    %v1939 = vadd.f32 %v1920, %v1722
    %v1940 = vadd.f32 %v1924, %v1722
    %v1941 = vadd.f32 %v1933, %v1826
    %v1942 = vadd.f32 %v1934, %v1826
    %v1943 = vadd.f32 %v1935, %v1826
    %v1944 = vadd.f32 %v1936, %v1826
    %v1945 = vadd.f32 %v1937, %v1826
    %v1946 = vadd.f32 %v1938, %v1826
    %v1947 = vadd.f32 %v1939, %v1826
    %v1948 = vadd.f32 %v1940, %v1826
    %v1949 = vtanh.pop %v1941
    %v1950 = vtanh.pop %v1942
    %v1951 = vtanh.pop %v1943
    %v1952 = vtanh.pop %v1944
    %v1953 = vtanh.pop %v1945
    %v1954 = vtanh.pop %v1946
    %v1955 = vtanh.pop %v1947
    %v1956 = vtanh.pop %v1948
    %v1957 = vpack.c.bf16 %v1836, %v1835
    %v1958 = vpack.c.bf16 %v1838, %v1837
    %v1959 = vpack.c.bf16 %v1840, %v1839
    %v1960 = vpack.c.bf16 %v1842, %v1841
    %v1961 = vpack.c.bf16 %v1950, %v1949
    %v1962 = vpack.c.bf16 %v1952, %v1951
    %v1963 = vpack.c.bf16 %v1954, %v1953
    %v1964 = vpack.c.bf16 %v1956, %v1955
    %v1965 = vlaneseq
    %v1966 = vshrl.u32 %v1965, 7
    %v1967 = vsub.s32 0, %v1966
    %v1968 = vrot.slane %v32, %v1967
    %v1970 = vsel %vm356, %v1957, 0
    %v1973 = vsel %vm356, %v1958, 0
    %v1976 = vsel %vm356, %v1959, 0
    %v1979 = vsel %vm356, %v1960, 0
    %v1982 = vsel %vm356, %v1961, 0
    %v1985 = vsel %vm356, %v1962, 0
    %v1988 = vsel %vm356, %v1963, 0
    %v1991 = vsel %vm356, %v1964, 0
    %1993 = vmatprep.subr.bf16.mxu0 0
    %1994 = vmatpush1.bf16.msra.mxu0 %v30
    %1995 = vmatprep.subr.bf16.mxu0 0
    %1996 = vmatpush1.bf16.msra.mxu0 %v31
    %1997 = vmatprep.subr.bf16.mxu0 0
    %1998 = vmatpush1.bf16.msra.mxu0 0
    %1999 = vmatprep.subr.bf16.mxu0 0
    %2000 = vmatpush1.bf16.msra.mxu0 0
    %2001 = vmatprep.subr.bf16.mxu0 0
    %2002 = vmatpush1.bf16.msra.mxu0 0
    %2003 = vmatprep.subr.bf16.mxu0 0
    %2004 = vmatpush1.bf16.msra.mxu0 0
    %2005 = vmatprep.subr.bf16.mxu0 0
    %2006 = vmatpush1.bf16.msra.mxu0 0
    %2007 = vmatprep.subr.bf16.mxu0 0
    %2008 = vmatpush1.bf16.msra.mxu0 0
    %2009 = vmatprep.subr.bf16.mxu0 0
    %2010 = vmatpush1.bf16.msra.mxu0 0
    %2011 = vmatprep.subr.bf16.mxu0 0
    %2012 = vmatpush1.bf16.msra.mxu0 0
    %2013 = vmatprep.subr.bf16.mxu0 0
    %2014 = vmatpush1.bf16.msra.mxu0 0
    %2015 = vmatprep.subr.bf16.mxu0 0
    %2016 = vmatpush1.bf16.msra.mxu0 0
    %2017 = vmatprep.subr.bf16.mxu0 0
    %2018 = vmatpush1.bf16.msra.mxu0 0
    %2019 = vmatprep.subr.bf16.mxu0 0
    %2020 = vmatpush1.bf16.msra.mxu0 0
    %2021 = vmatprep.subr.bf16.mxu0 0
    %2022 = vmatpush1.bf16.msra.mxu0 0
    %2023 = vmatprep.subr.bf16.mxu0 0
    %2024 = vmatpush1.bf16.msra.mxu0 0
    %2025 = vmatprep.mubr.bf16.mxu0 0
    %2026 = vmatmul.mubr.bf16.gmra.mrb[0].mxu0 %v1970
    %v2027 = vpop.f32.mrb[0].mxu0
    %v2028 = vadd.f32 %v1968, %v2027
    %v2029 = vpop.f32.mrb[0].mxu0
    %v2030 = vpop.f32.mrb[0].mxu0
    %v2031 = vadd.f32 %v1968, %v2030
    %v2032 = vpop.f32.mrb[0].mxu0
    %2033 = vmatprep.mubr.bf16.mxu0 0
    %2034 = vmatmul.mubr.bf16.gmra.mrb[0].mxu0 %v1973
    %v2035 = vpop.f32.mrb[0].mxu0
    %v2036 = vadd.f32 %v1968, %v2035
    %v2037 = vpop.f32.mrb[0].mxu0
    %v2038 = vpop.f32.mrb[0].mxu0
    %v2039 = vadd.f32 %v1968, %v2038
    %v2040 = vpop.f32.mrb[0].mxu0
    %2041 = vmatprep.mubr.bf16.mxu0 0
    %2042 = vmatmul.mubr.bf16.gmra.mrb[0].mxu0 %v1976
    %v2043 = vpop.f32.mrb[0].mxu0
    %v2044 = vadd.f32 %v1968, %v2043
    %v2045 = vpop.f32.mrb[0].mxu0
    %v2046 = vpop.f32.mrb[0].mxu0
    %v2047 = vadd.f32 %v1968, %v2046
    %v2048 = vpop.f32.mrb[0].mxu0
    %2049 = vmatprep.mubr.bf16.mxu0 0
    %2050 = vmatmul.mubr.bf16.gmra.mrb[0].mxu0 %v1979
    %v2051 = vpop.f32.mrb[0].mxu0
    %v2052 = vadd.f32 %v1968, %v2051
    %v2053 = vpop.f32.mrb[0].mxu0
    %v2054 = vpop.f32.mrb[0].mxu0
    %v2055 = vadd.f32 %v1968, %v2054
    %v2056 = vpop.f32.mrb[0].mxu0
    %2057 = vmatprep.mubr.bf16.mxu0 0
    %2058 = vmatmul.mubr.bf16.gmra.mrb[0].mxu0 %v1982
    %v2059 = vpop.f32.mrb[0].mxu0
    %v2060 = vadd.f32 %v1968, %v2059
    %v2061 = vpop.f32.mrb[0].mxu0
    %v2062 = vpop.f32.mrb[0].mxu0
    %v2063 = vadd.f32 %v1968, %v2062
    %v2064 = vpop.f32.mrb[0].mxu0
    %2065 = vmatprep.mubr.bf16.mxu0 0
    %2066 = vmatmul.mubr.bf16.gmra.mrb[0].mxu0 %v1985
    %v2067 = vpop.f32.mrb[0].mxu0
    %v2068 = vadd.f32 %v1968, %v2067
    %v2069 = vpop.f32.mrb[0].mxu0
    %v2070 = vpop.f32.mrb[0].mxu0
    %v2071 = vadd.f32 %v1968, %v2070
    %v2072 = vpop.f32.mrb[0].mxu0
    %2073 = vmatprep.mubr.bf16.mxu0 0
    %2074 = vmatmul.mubr.bf16.gmra.mrb[0].mxu0 %v1988
    %v2075 = vpop.f32.mrb[0].mxu0
    %v2076 = vadd.f32 %v1968, %v2075
    %v2077 = vpop.f32.mrb[0].mxu0
    %v2078 = vpop.f32.mrb[0].mxu0
    %v2079 = vadd.f32 %v1968, %v2078
    %v2080 = vpop.f32.mrb[0].mxu0
    %2081 = vmatprep.mubr.bf16.mxu0 0
    %2082 = vmatmul.mubr.bf16.gmra.mrb[0].mxu0 %v1991
    %v2083 = vpop.f32.mrb[0].mxu0
    %v2084 = vadd.f32 %v1968, %v2083
    %v2085 = vpop.f32.mrb[0].mxu0
    %v2086 = vpop.f32.mrb[0].mxu0
    %v2087 = vadd.f32 %v1968, %v2086
    %v2088 = vpop.f32.mrb[0].mxu0
    %2089 = vdwg.mxu0
    %2090 = vmax.xlane.f32.xlu0 %v2028
    %v2091 = vpop.xlane.xlu0 %2090
    %2092 = vmax.xlane.f32.xlu0 %v2031
    %v2093 = vpop.xlane.xlu0 %2092
    %2094 = vmax.xlane.f32.xlu0 %v2036
    %v2095 = vpop.xlane.xlu0 %2094
    %2096 = vmax.xlane.f32.xlu0 %v2039
    %v2097 = vpop.xlane.xlu0 %2096
    %2098 = vmax.xlane.f32.xlu0 %v2044
    %v2099 = vpop.xlane.xlu0 %2098
    %2100 = vmax.xlane.f32.xlu0 %v2047
    %v2101 = vpop.xlane.xlu0 %2100
    %2102 = vmax.xlane.f32.xlu0 %v2052
    %v2103 = vpop.xlane.xlu0 %2102
    %2104 = vmax.xlane.f32.xlu0 %v2055
    %v2105 = vpop.xlane.xlu0 %2104
    %2106 = vmax.xlane.f32.xlu0 %v2060
    %v2107 = vpop.xlane.xlu0 %2106
    %2108 = vmax.xlane.f32.xlu0 %v2063
    %v2109 = vpop.xlane.xlu0 %2108
    %2110 = vmax.xlane.f32.xlu0 %v2068
    %v2111 = vpop.xlane.xlu0 %2110
    %2112 = vmax.xlane.f32.xlu0 %v2071
    %v2113 = vpop.xlane.xlu0 %2112
    %2114 = vmax.xlane.f32.xlu0 %v2076
    %v2115 = vpop.xlane.xlu0 %2114
    %2116 = vmax.xlane.f32.xlu0 %v2079
    %v2117 = vpop.xlane.xlu0 %2116
    %2118 = vmax.xlane.f32.xlu0 %v2084
    %v2119 = vpop.xlane.xlu0 %2118
    %2120 = vmax.xlane.f32.xlu0 %v2087
    %v2121 = vpop.xlane.xlu0 %2120
    %v2122 = vsub.f32 %v2028, %v2091
    %v2123 = vsub.f32 %v2031, %v2093
    %v2124 = vsub.f32 %v2036, %v2095
    %v2125 = vsub.f32 %v2039, %v2097
    %v2126 = vsub.f32 %v2044, %v2099
    %v2127 = vsub.f32 %v2047, %v2101
    %v2128 = vsub.f32 %v2052, %v2103
    %v2129 = vsub.f32 %v2055, %v2105
    %v2130 = vsub.f32 %v2060, %v2107
    %v2131 = vsub.f32 %v2063, %v2109
    %v2132 = vsub.f32 %v2068, %v2111
    %v2133 = vsub.f32 %v2071, %v2113
    %v2134 = vsub.f32 %v2076, %v2115
    %v2135 = vsub.f32 %v2079, %v2117
    %v2136 = vsub.f32 %v2084, %v2119
    %v2137 = vsub.f32 %v2087, %v2121
    %v2138 = vmul.f32 %v2122, 1.442695
    %v2139 = vpow.pop %v2138
    %v2140 = vmul.f32 %v2123, 1.442695
    %v2141 = vpow.pop %v2140
    %v2142 = vmul.f32 %v2124, 1.442695
    %v2143 = vpow.pop %v2142
    %v2144 = vmul.f32 %v2125, 1.442695
    %v2145 = vpow.pop %v2144
    %v2146 = vmul.f32 %v2126, 1.442695
    %v2147 = vpow.pop %v2146
    %v2148 = vmul.f32 %v2127, 1.442695
    %v2149 = vpow.pop %v2148
    %v2150 = vmul.f32 %v2128, 1.442695
    %v2151 = vpow.pop %v2150
    %v2152 = vmul.f32 %v2129, 1.442695
    %v2153 = vpow.pop %v2152
    %v2154 = vmul.f32 %v2130, 1.442695
    %v2155 = vpow.pop %v2154
    %v2156 = vmul.f32 %v2131, 1.442695
    %v2157 = vpow.pop %v2156
    %v2158 = vmul.f32 %v2132, 1.442695
    %v2159 = vpow.pop %v2158
    %v2160 = vmul.f32 %v2133, 1.442695
    %v2161 = vpow.pop %v2160
    %v2162 = vmul.f32 %v2134, 1.442695
    %v2163 = vpow.pop %v2162
    %v2164 = vmul.f32 %v2135, 1.442695
    %v2165 = vpow.pop %v2164
    %v2166 = vmul.f32 %v2136, 1.442695
    %v2167 = vpow.pop %v2166
    %v2168 = vmul.f32 %v2137, 1.442695
    %v2169 = vpow.pop %v2168
    %2170 = vadd.xlane.f32.xlu0 %v2139
    %v2171 = vpop.xlane.xlu0 %2170
    %2172 = vadd.xlane.f32.xlu0 %v2141
    %v2173 = vpop.xlane.xlu0 %2172
    %2174 = vadd.xlane.f32.xlu0 %v2143
    %v2175 = vpop.xlane.xlu0 %2174
    %2176 = vadd.xlane.f32.xlu0 %v2145
    %v2177 = vpop.xlane.xlu0 %2176
    %2178 = vadd.xlane.f32.xlu0 %v2147
    %v2179 = vpop.xlane.xlu0 %2178
    %2180 = vadd.xlane.f32.xlu0 %v2149
    %v2181 = vpop.xlane.xlu0 %2180
    %2182 = vadd.xlane.f32.xlu0 %v2151
    %v2183 = vpop.xlane.xlu0 %2182
    %2184 = vadd.xlane.f32.xlu0 %v2153
    %v2185 = vpop.xlane.xlu0 %2184
    %2186 = vadd.xlane.f32.xlu0 %v2155
    %v2187 = vpop.xlane.xlu0 %2186
    %2188 = vadd.xlane.f32.xlu0 %v2157
    %v2189 = vpop.xlane.xlu0 %2188
    %2190 = vadd.xlane.f32.xlu0 %v2159
    %v2191 = vpop.xlane.xlu0 %2190
    %2192 = vadd.xlane.f32.xlu0 %v2161
    %v2193 = vpop.xlane.xlu0 %2192
    %2194 = vadd.xlane.f32.xlu0 %v2163
    %v2195 = vpop.xlane.xlu0 %2194
    %2196 = vadd.xlane.f32.xlu0 %v2165
    %v2197 = vpop.xlane.xlu0 %2196
    %2198 = vadd.xlane.f32.xlu0 %v2167
    %v2199 = vpop.xlane.xlu0 %2198
    %2200 = vadd.xlane.f32.xlu0 %v2169
    %v2201 = vpop.xlane.xlu0 %2200
    %v2202 = vlog2.pop %v2171
    %v2203 = vmul.f32 %v2202, 0.6931472
    %v2204 = vlog2.pop %v2173
    %v2205 = vmul.f32 %v2204, 0.6931472
    %v2206 = vlog2.pop %v2175
    %v2207 = vmul.f32 %v2206, 0.6931472
    %v2208 = vlog2.pop %v2177
    %v2209 = vmul.f32 %v2208, 0.6931472
    %v2210 = vlog2.pop %v2179
    %v2211 = vmul.f32 %v2210, 0.6931472
    %v2212 = vlog2.pop %v2181
    %v2213 = vmul.f32 %v2212, 0.6931472
    %v2214 = vlog2.pop %v2183
    %v2215 = vmul.f32 %v2214, 0.6931472
    %v2216 = vlog2.pop %v2185
    %v2217 = vmul.f32 %v2216, 0.6931472
    %v2218 = vlog2.pop %v2187
    %v2219 = vmul.f32 %v2218, 0.6931472
    %v2220 = vlog2.pop %v2189
    %v2221 = vmul.f32 %v2220, 0.6931472
    %v2222 = vlog2.pop %v2191
    %v2223 = vmul.f32 %v2222, 0.6931472
    %v2224 = vlog2.pop %v2193
    %v2225 = vmul.f32 %v2224, 0.6931472
    %v2226 = vlog2.pop %v2195
    %v2227 = vmul.f32 %v2226, 0.6931472
    %v2228 = vlog2.pop %v2197
    %v2229 = vmul.f32 %v2228, 0.6931472
    %v2230 = vlog2.pop %v2199
    %v2231 = vmul.f32 %v2230, 0.6931472
    %v2232 = vlog2.pop %v2201
    %v2233 = vmul.f32 %v2232, 0.6931472
    %v2234 = vadd.f32 %v2203, %v2091
    %v2235 = vadd.f32 %v2205, %v2093
    %v2236 = vadd.f32 %v2207, %v2095
    %v2237 = vadd.f32 %v2209, %v2097
    %v2238 = vadd.f32 %v2211, %v2099
    %v2239 = vadd.f32 %v2213, %v2101
    %v2240 = vadd.f32 %v2215, %v2103
    %v2241 = vadd.f32 %v2217, %v2105
    %v2242 = vadd.f32 %v2219, %v2107
    %v2243 = vadd.f32 %v2221, %v2109
    %v2244 = vadd.f32 %v2223, %v2111
    %v2245 = vadd.f32 %v2225, %v2113
    %v2246 = vadd.f32 %v2227, %v2115
    %v2247 = vadd.f32 %v2229, %v2117
    %v2248 = vadd.f32 %v2231, %v2119
    %v2249 = vadd.f32 %v2233, %v2121
    %v2250 = vsub.f32 %v2028, %v2234
    %v2251 = vsub.f32 %v2031, %v2235
    %v2252 = vsub.f32 %v2036, %v2236
    %v2253 = vsub.f32 %v2039, %v2237
    %v2254 = vsub.f32 %v2044, %v2238
    %v2255 = vsub.f32 %v2047, %v2239
    %v2256 = vsub.f32 %v2052, %v2240
    %v2257 = vsub.f32 %v2055, %v2241
    %v2258 = vsub.f32 %v2060, %v2242
    %v2259 = vsub.f32 %v2063, %v2243
    %v2260 = vsub.f32 %v2068, %v2244
    %v2261 = vsub.f32 %v2071, %v2245
    %v2262 = vsub.f32 %v2076, %v2246
    %v2263 = vsub.f32 %v2079, %v2247
    %v2264 = vsub.f32 %v2084, %v2248
    %v2265 = vsub.f32 %v2087, %v2249
    %2266 = vst [vmem:[#allocation2] sm:$0xff] %v2250
    %2267 = vst [vmem:[#allocation2 + $0x8] sm:$0xff] %v2251
    %2268 = vst [vmem:[#allocation2 + $0x10] sm:$0xff] %v2252
    %2269 = vst [vmem:[#allocation2 + $0x18] sm:$0xff] %v2253
    %2270 = vst [vmem:[#allocation2 + $0x20] sm:$0xff] %v2254
    %2271 = vst [vmem:[#allocation2 + $0x28] sm:$0xff] %v2255
    %2272 = vst [vmem:[#allocation2 + $0x30] sm:$0xff] %v2256
    %2273 = vst [vmem:[#allocation2 + $0x38] sm:$0xff] %v2257
    %2274 = vst [vmem:[#allocation2 + $0x40] sm:$0xff] %v2258
    %2275 = vst [vmem:[#allocation2 + $0x48] sm:$0xff] %v2259
    %2276 = vst [vmem:[#allocation2 + $0x50] sm:$0xff] %v2260
    %2277 = vst [vmem:[#allocation2 + $0x58] sm:$0xff] %v2261
    %2278 = vst [vmem:[#allocation2 + $0x60] sm:$0xff] %v2262
    %2279 = vst [vmem:[#allocation2 + $0x68] sm:$0xff] %v2263
    %2280 = vst [vmem:[#allocation2 + $0x70] sm:$0xff] %v2264
    %2281 = vst [vmem:[#allocation2 + $0x78] sm:$0xff] %v2265
    // Predicated region
    $region18: #{rnnt_forward.1} parent=1 // pred_check
      _
    $region19: #{rnnt_forward.1} parent=1 // pred_check_branch
      %2283 = sbr.rel (0) target = $region21
    $region20: #{rnnt_forward.1} parent=1 // pred_region
      %s2285 = ssub.s32 2048, 2048
      %2286 = vsyncadd [#allocation3], %s2285
      %s2287 = sshll.u32 [#allocation2], 4
      %s2288 = int_to_ptr.vmem [resolvable:$true] %s2287
      %2293 = dma.vmem_to_hbm [thread:$0]  %s2288, 2048, %s4, [#allocation3], 128, 128, 8
    $region21: #{rnnt_forward.1} parent=1 // pred_fallthru
      _
    // Predicated region
    $region22: #{rnnt_forward.1} parent=1 // pred_check
      _
    $region23: #{rnnt_forward.1} parent=1 // pred_check_branch
      %2295 = sbr.rel (0) target = $region25
    $region24: #{rnnt_forward.1} parent=1 // pred_region
      %2296 = dma.done [#allocation3], 2048
    $region25: #{rnnt_forward.1} parent=1 // pred_fallthru
      _
    %2297 = vsyncpa [#allocation3], 1

</llo_original>
